<compile_context>
chip_gen: v7x
topology: tpu7x:2x2x1
jax: 0.10.0
libtpu: 0.0.40
codegen_flags: <defaults>
</compile_context>

<pallas_src>
import numpy as np
import jax
import jax.numpy as jnp
from jax.experimental import pallas as pl
from jax.experimental.pallas import tpu as pltpu


def _choose_nb(n):
    # Samples folded into the lane dim per grid step. 16 keeps the per-step
    # VMEM footprint ~5 MiB (fits v7x's 64 MiB / default scoped limits easily)
    # while giving every dot an MXU N-dim of 16*256 = 4096 columns.
    return max(1, min(n, 16))


def build_fused_kernel(N_pad, NB, H, W, Cin_p, F, C1, Cout, L):
    """One pallas_call computing the full Ghost_HSCNN forward, NB samples/step."""
    HW = H * W
    LANES = NB * HW
    taps = [(dy, dx) for dy in (-1, 0, 1) for dx in (-1, 0, 1)]
    offs = [dy * W + dx for dy, dx in taps]

    def kernel(x_ref, mask_ref, ws_ref, bs_ref, wp_ref, wd_ref, wo_ref, bo_ref,
               o_ref, ic_s_ref, ic_ref, act_ref, xin_ref):

        def shifted(src, t):
            """src with each pixel replaced by its tap-t 3x3 neighbour (0 outside)."""
            off = offs[t]
            if off == 0:
                return src                       # centre tap: mask is all ones
            sh = pltpu.roll(src, shift=(-off) % LANES, axis=1)   # dest[p] = src[p+off]
            return sh * mask_ref[t:t + 1, :]     # zero across image / sample borders

        def assemble(src, C, dst_ref):
            """Full-width im2col: rows [t*C,(t+1)*C) = tap-t shifted copy of src."""
            for t in range(9):
                dst_ref[t * C:(t + 1) * C, :] = shifted(src, t).astype(dst_ref.dtype)

        # ---- start conv: 3x3, Cin -> F, bias (one im2col matmul, K = 9*Cin_p, f32)
        assemble(x_ref[...], Cin_p, ic_s_ref)
        xs = jnp.dot(ws_ref[...], ic_s_ref[...],
                     preferred_element_type=jnp.float32) + bs_ref[...]
        act_ref[...] = xs                         # (F, LANES) resident activation
        xin_ref[...] = xs                         # residual kept in VMEM scratch

        # ---- ghost layers (+ ReLU); activations never leave VMEM
        for l in range(L):
            a = act_ref[...]
            # primary 1x1 conv F -> C1 (MXU, bf16 operands, f32 accumulate)
            y1 = jnp.dot(wp_ref[l], a.astype(jnp.bfloat16),
                         preferred_element_type=jnp.float32)        # (C1, LANES)
            # cheap 3x3 depthwise conv C1 -> C1 (VPU; no im2col materialization)
            y2 = jnp.zeros_like(y1)
            for t in range(9):
                y2 = y2 + shifted(y1, t) * wd_ref[l, t]              # wd[l,t]: (C1,1)
            # concat([primary, cheap]) + ReLU
            act_ref[0:C1, :] = jnp.maximum(y1, 0.0)
            act_ref[C1:F, :] = jnp.maximum(y2, 0.0)

        # ---- output conv on (x + x_in): 3x3, F -> Cout, bias (K = 9*F, bf16 MXU)
        assemble(act_ref[...] + xin_ref[...], F, ic_ref)
        out = jnp.dot(wo_ref[...], ic_ref[...],
                      preferred_element_type=jnp.float32) + bo_ref[...]
        o_ref[...] = out                          # (Cout, LANES), lane-dense store

    flops = 2 * N_pad * HW * (9 * Cin_p * F + L * (F * C1 + 9 * C1) + 9 * F * Cout)
    bytes_accessed = (4 * N_pad * HW * (Cin_p + Cout) + 4 * 9 * LANES
                      + 4 * F * 9 * Cin_p + 2 * L * C1 * F + 4 * L * 9 * C1
                      + 2 * Cout * 9 * F + 4 * (F + Cout))

    return pl.pallas_call(
        kernel,
        out_shape=jax.ShapeDtypeStruct((Cout, N_pad * HW), jnp.float32),
        grid=(N_pad // NB,),
        in_specs=[
            pl.BlockSpec((Cin_p, LANES), lambda n: (0, n)),        # NB samples / step
            pl.BlockSpec((9, LANES), lambda n: (0, 0)),            # per-tap masks
            pl.BlockSpec((F, 9 * Cin_p), lambda n: (0, 0)),        # start conv w (f32)
            pl.BlockSpec((F, 1), lambda n: (0, 0)),                # start conv bias
            pl.BlockSpec((L, C1, F), lambda n: (0, 0, 0)),         # primary 1x1 (bf16)
            pl.BlockSpec((L, 9, C1, 1), lambda n: (0, 0, 0, 0)),   # depthwise w (f32)
            pl.BlockSpec((Cout, 9 * F), lambda n: (0, 0)),         # output conv (bf16)
            pl.BlockSpec((Cout, 1), lambda n: (0, 0)),             # output conv bias
        ],
        out_specs=pl.BlockSpec((Cout, LANES), lambda n: (0, n)),
        scratch_shapes=[
            pltpu.VMEM((9 * Cin_p, LANES), jnp.float32),   # start-conv im2col
            pltpu.VMEM((9 * F, LANES), jnp.bfloat16),      # output-conv im2col (bf16)
            pltpu.VMEM((F, LANES), jnp.float32),           # resident activation
            pltpu.VMEM((F, LANES), jnp.float32),           # residual x_in
        ],
        compiler_params=pltpu.CompilerParams(dimension_semantics=("parallel",)),
        cost_estimate=pl.CostEstimate(flops=flops, transcendentals=0,
                                      bytes_accessed=bytes_accessed),
    )


def ghost_hscnn_forward(x_nchw, params, *, layer_num, feature_num, ratio, nb=None):
    """Full forward pass. Input is NCHW (PyTorch convention); params in torch layouts."""
    w_start, b_start, wps, wds, w_out, b_out = params
    x_nchw = jnp.asarray(x_nchw, jnp.float32)
    N, Cin, H, W = x_nchw.shape
    F = feature_num
    C1 = F // ratio
    assert ratio == 2 and 2 * C1 == F, "ghost module assumed with ratio=2, even F"
    Cout = w_out.shape[0]
    HW = H * W
    Cin_p = ((Cin + 7) // 8) * 8          # pad input channels to a sublane multiple

    if nb is None:
        nb = _choose_nb(N)
    N_pad = ((N + nb - 1) // nb) * nb

    # input NCHW -> channels-major (Cin_p, N_pad*HW): lane dim packs NB samples/step
    x = jnp.transpose(x_nchw.reshape(N, Cin, HW), (1, 0, 2))
    x = jnp.pad(x, ((0, Cin_p - Cin), (0, N_pad - N), (0, 0))).reshape(Cin_p, N_pad * HW)

    # per-tap validity masks over the flattened NB*HW lane dim (host precomputed)
    hh = np.arange(H)[:, None]
    ww = np.arange(W)[None, :]
    mrows = []
    for dy in (-1, 0, 1):
        for dx in (-1, 0, 1):
            valid = ((hh + dy >= 0) & (hh + dy < H) &
                     (ww + dx >= 0) & (ww + dx < W)).astype(np.float32)
            mrows.append(np.tile(valid.reshape(HW), nb))
    mask = jnp.asarray(np.stack(mrows))                          # (9, nb*HW)

    # start conv weight (F, Cin, 3, 3) -> (F, 9*Cin_p), column = tap*Cin_p + c
    ws = jnp.transpose(jnp.asarray(w_start, jnp.float32), (0, 2, 3, 1)).reshape(F, 9, Cin)
    if Cin_p != Cin:
        ws = jnp.pad(ws, ((0, 0), (0, 0), (0, Cin_p - Cin)))
    ws = ws.reshape(F, 9 * Cin_p)
    bs = jnp.asarray(b_start, jnp.float32).reshape(F, 1)

    # ghost primary 1x1 weights (C1, F, 1, 1) -> (L, C1, F) bf16 (MXU operands)
    wp = jnp.stack([jnp.asarray(w, jnp.float32).reshape(C1, F) for w in wps]
                   ).astype(jnp.bfloat16)
    # ghost depthwise weights (C1, 1, 3, 3) -> (L, 9, C1, 1): per-tap (C1,1) columns
    wd = jnp.stack([jnp.transpose(jnp.asarray(w, jnp.float32).reshape(C1, 9))
                    for w in wds]).reshape(layer_num, 9, C1, 1)

    # output conv weight (Cout, F, 3, 3) -> (Cout, 9*F) bf16, column = tap*F + f
    wo = jnp.transpose(jnp.asarray(w_out, jnp.float32), (0, 2, 3, 1)
                       ).reshape(Cout, 9 * F).astype(jnp.bfloat16)
    bo = jnp.asarray(b_out, jnp.float32).reshape(Cout, 1)

    fused = build_fused_kernel(N_pad, nb, H, W, Cin_p, F, C1, Cout, layer_num)
    out = fused(x, mask, ws, bs, wp, wd, wo, bo)                 # (Cout, N_pad*HW)
    out = out.reshape(Cout, N_pad, HW)[:, :N, :]
    return jnp.transpose(out, (1, 0, 2)).reshape(N, Cout, H, W)  # NCHW


def ref_forward_numpy(x_nchw, params, *, layer_num, feature_num, ratio):
    """Pure numpy reference (exact conv semantics) for correctness checking."""
    w_s, b_s, wps, wds, w_o, b_o = params
    x = np.asarray(x_nchw, np.float32)
    w_s = np.asarray(w_s, np.float32); b_s = np.asarray(b_s, np.float32)
    w_o = np.asarray(w_o, np.float32); b_o = np.asarray(b_o, np.float32)
    wps = [np.asarray(w, np.float32) for w in wps]
    wds = [np.asarray(w, np.float32) for w in wds]
    N, Cin, H, W = x.shape
    F = feature_num
    C1 = F // ratio

    def conv3x3(inp, w, b):
        Co = w.shape[0]
        xp = np.pad(inp, ((0, 0), (0, 0), (1, 1), (1, 1)))
        out = np.zeros((inp.shape[0], Co, H, W), np.float32)
        for dy in range(3):
            for dx in range(3):
                out += np.einsum('nchw,oc->nohw',
                                 xp[:, :, dy:dy + H, dx:dx + W], w[:, :, dy, dx])
        return out + b.reshape(1, Co, 1, 1)

    x = conv3x3(x, w_s, b_s)
    x_in = x
    for l in range(layer_num):
        y1 = np.einsum('nchw,oc->nohw', x, wps[l].reshape(C1, F))
        y1p = np.pad(y1, ((0, 0), (0, 0), (1, 1), (1, 1)))
        y2 = np.zeros_like(y1)
        wdl = wds[l].reshape(C1, 3, 3)
        for dy in range(3):
            for dx in range(3):
                y2 += y1p[:, :, dy:dy + H, dx:dx + W] * wdl[:, dy, dx].reshape(1, C1, 1, 1)
        x = np.maximum(np.concatenate([y1, y2], axis=1), 0.0)
    return conv3x3(x + x_in, w_o, b_o)


if __name__ == "__main__":
    # Small shapes consistent with the module.
    N, input_ch, output_ch = 2, 4, 4
    H = W = 16
    feature_num, layer_num, ratio = 32, 3, 2
    C1 = feature_num // ratio

    key = jax.random.PRNGKey(0)
    keys = jax.random.split(key, 6 + 2 * layer_num)
    kit = iter(keys)

    def nrm(shape, scale=0.05):
        return scale * jax.random.normal(next(kit), shape, dtype=jnp.float32)

    # Synthetic parameters in torch layouts.
    w_start = nrm((feature_num, input_ch, 3, 3))
    b_start = nrm((feature_num,))
    wps = [nrm((C1, feature_num, 1, 1)) for _ in range(layer_num)]   # primary 1x1
    wds = [nrm((C1, 1, 3, 3)) for _ in range(layer_num)]             # depthwise 3x3
    w_out = nrm((output_ch, feature_num, 3, 3))
    b_out = nrm((output_ch,))
    params = (w_start, b_start, wps, wds, w_out, b_out)

    x = jax.random.normal(next(kit), (N, input_ch, H, W), dtype=jnp.float32)

    fwd = jax.jit(lambda xx, pp: ghost_hscnn_forward(
        xx, pp, layer_num=layer_num, feature_num=feature_num, ratio=ratio))
    out = jax.block_until_ready(fwd(x, params))

    ref = ref_forward_numpy(x, params, layer_num=layer_num,
                            feature_num=feature_num, ratio=ratio)
    np.testing.assert_allclose(np.asarray(out), ref, rtol=1e-2, atol=1e-2)

    print("KERNEL_OK")
</pallas_src>

<mosaic_0001>
module attributes {stable_mosaic.version = 11 : i64} {
  func.func @kernel(%arg0: i32, %arg1: memref<8x512xf32, #tpu.memory_space<vmem>>, %arg2: memref<9x512xf32, #tpu.memory_space<vmem>>, %arg3: memref<32x72xf32, #tpu.memory_space<vmem>>, %arg4: memref<32x1xf32, #tpu.memory_space<vmem>>, %arg5: memref<3x16x32xbf16, #tpu.memory_space<vmem>>, %arg6: memref<3x9x16x1xf32, #tpu.memory_space<vmem>>, %arg7: memref<4x288xbf16, #tpu.memory_space<vmem>>, %arg8: memref<4x1xf32, #tpu.memory_space<vmem>>, %arg9: memref<4x512xf32, #tpu.memory_space<vmem>>, %arg10: memref<72x512xf32, #tpu.memory_space<vmem>>, %arg11: memref<288x512xbf16, #tpu.memory_space<vmem>>, %arg12: memref<32x512xf32, #tpu.memory_space<vmem>>, %arg13: memref<32x512xf32, #tpu.memory_space<vmem>>) attributes {dimension_semantics = [#tpu.dimension_semantics<parallel>], iteration_bounds = array<i64: 1>, scalar_prefetch = 0 : i64, scratch_operands = 4 : i64, tpu.core_type = #tpu.core_type<tc>, window_params = [{transform_indices = @transform_0, window_bounds = array<i64: 8, 512>}, {pipeline_mode = #tpu.pipeline_mode<synchronous>, transform_indices = @transform_1, window_bounds = array<i64: 9, 512>}, {pipeline_mode = #tpu.pipeline_mode<synchronous>, transform_indices = @transform_2, window_bounds = array<i64: 32, 72>}, {pipeline_mode = #tpu.pipeline_mode<synchronous>, transform_indices = @transform_3, window_bounds = array<i64: 32, 1>}, {pipeline_mode = #tpu.pipeline_mode<synchronous>, transform_indices = @transform_4, window_bounds = array<i64: 3, 16, 32>}, {pipeline_mode = #tpu.pipeline_mode<synchronous>, transform_indices = @transform_5, window_bounds = array<i64: 3, 9, 16, 1>}, {pipeline_mode = #tpu.pipeline_mode<synchronous>, transform_indices = @transform_6, window_bounds = array<i64: 4, 288>}, {pipeline_mode = #tpu.pipeline_mode<synchronous>, transform_indices = @transform_7, window_bounds = array<i64: 4, 1>}, {transform_indices = @transform_8, window_bounds = array<i64: 4, 512>}]} {
    %c0 = arith.constant 0 : index
    %c0_0 = arith.constant 0 : index
    %0 = vector.load %arg1[%c0, %c0_0] : memref<8x512xf32, #tpu.memory_space<vmem>>, vector<8x512xf32>
    %c17_i32 = arith.constant 17 : i32
    %1 = tpu.dynamic_rotate %0 by %c17_i32 dim 1 : vector<8x512xf32>, i32 -> vector<8x512xf32>
    %c0_1 = arith.constant 0 : index
    %c0_2 = arith.constant 0 : index
    %2 = vector.load %arg2[%c0_1, %c0_2] : memref<9x512xf32, #tpu.memory_space<vmem>>, vector<1x512xf32>
    %3 = vector.broadcast %2 : vector<1x512xf32> to vector<8x512xf32>
    %4 = arith.mulf %1, %3 : vector<8x512xf32>
    %c0_3 = arith.constant 0 : index
    %c0_4 = arith.constant 0 : index
    %5 = vector.load %arg10[%c0_3, %c0_4] : memref<72x512xf32, #tpu.memory_space<vmem>>, vector<8x512xf32>
    tpu.vector_store %arg10[%c0_3, %c0_4], %4 {strides = array<i32>} : memref<72x512xf32, #tpu.memory_space<vmem>>, vector<8x512xf32>,
    %c16_i32 = arith.constant 16 : i32
    %6 = tpu.dynamic_rotate %0 by %c16_i32 dim 1 : vector<8x512xf32>, i32 -> vector<8x512xf32>
    %c1 = arith.constant 1 : index
    %c0_5 = arith.constant 0 : index
    %7 = vector.load %arg2[%c1, %c0_5] : memref<9x512xf32, #tpu.memory_space<vmem>>, vector<1x512xf32>
    %8 = vector.broadcast %7 : vector<1x512xf32> to vector<8x512xf32>
    %9 = arith.mulf %6, %8 : vector<8x512xf32>
    %c8 = arith.constant 8 : index
    %c0_6 = arith.constant 0 : index
    %10 = vector.load %arg10[%c8, %c0_6] : memref<72x512xf32, #tpu.memory_space<vmem>>, vector<8x512xf32>
    tpu.vector_store %arg10[%c8, %c0_6], %9 {strides = array<i32>} : memref<72x512xf32, #tpu.memory_space<vmem>>, vector<8x512xf32>,
    %c15_i32 = arith.constant 15 : i32
    %11 = tpu.dynamic_rotate %0 by %c15_i32 dim 1 : vector<8x512xf32>, i32 -> vector<8x512xf32>
    %c2 = arith.constant 2 : index
    %c0_7 = arith.constant 0 : index
    %12 = vector.load %arg2[%c2, %c0_7] : memref<9x512xf32, #tpu.memory_space<vmem>>, vector<1x512xf32>
    %13 = vector.broadcast %12 : vector<1x512xf32> to vector<8x512xf32>
    %14 = arith.mulf %11, %13 : vector<8x512xf32>
    %c16 = arith.constant 16 : index
    %c0_8 = arith.constant 0 : index
    %15 = vector.load %arg10[%c16, %c0_8] : memref<72x512xf32, #tpu.memory_space<vmem>>, vector<8x512xf32>
    tpu.vector_store %arg10[%c16, %c0_8], %14 {strides = array<i32>} : memref<72x512xf32, #tpu.memory_space<vmem>>, vector<8x512xf32>,
    %c1_i32 = arith.constant 1 : i32
    %16 = tpu.dynamic_rotate %0 by %c1_i32 dim 1 : vector<8x512xf32>, i32 -> vector<8x512xf32>
    %c3 = arith.constant 3 : index
    %c0_9 = arith.constant 0 : index
    %17 = vector.load %arg2[%c3, %c0_9] : memref<9x512xf32, #tpu.memory_space<vmem>>, vector<1x512xf32>
    %18 = vector.broadcast %17 : vector<1x512xf32> to vector<8x512xf32>
    %19 = arith.mulf %16, %18 : vector<8x512xf32>
    %c24 = arith.constant 24 : index
    %c0_10 = arith.constant 0 : index
    %20 = vector.load %arg10[%c24, %c0_10] : memref<72x512xf32, #tpu.memory_space<vmem>>, vector<8x512xf32>
    tpu.vector_store %arg10[%c24, %c0_10], %19 {strides = array<i32>} : memref<72x512xf32, #tpu.memory_space<vmem>>, vector<8x512xf32>,
    %c32 = arith.constant 32 : index
    %c0_11 = arith.constant 0 : index
    %21 = vector.load %arg10[%c32, %c0_11] : memref<72x512xf32, #tpu.memory_space<vmem>>, vector<8x512xf32>
    tpu.vector_store %arg10[%c32, %c0_11], %0 {strides = array<i32>} : memref<72x512xf32, #tpu.memory_space<vmem>>, vector<8x512xf32>,
    %c511_i32 = arith.constant 511 : i32
    %22 = tpu.dynamic_rotate %0 by %c511_i32 dim 1 : vector<8x512xf32>, i32 -> vector<8x512xf32>
    %c5 = arith.constant 5 : index
    %c0_12 = arith.constant 0 : index
    %23 = vector.load %arg2[%c5, %c0_12] : memref<9x512xf32, #tpu.memory_space<vmem>>, vector<1x512xf32>
    %24 = vector.broadcast %23 : vector<1x512xf32> to vector<8x512xf32>
    %25 = arith.mulf %22, %24 : vector<8x512xf32>
    %c40 = arith.constant 40 : index
    %c0_13 = arith.constant 0 : index
    %26 = vector.load %arg10[%c40, %c0_13] : memref<72x512xf32, #tpu.memory_space<vmem>>, vector<8x512xf32>
    tpu.vector_store %arg10[%c40, %c0_13], %25 {strides = array<i32>} : memref<72x512xf32, #tpu.memory_space<vmem>>, vector<8x512xf32>,
    %c497_i32 = arith.constant 497 : i32
    %27 = tpu.dynamic_rotate %0 by %c497_i32 dim 1 : vector<8x512xf32>, i32 -> vector<8x512xf32>
    %c6 = arith.constant 6 : index
    %c0_14 = arith.constant 0 : index
    %28 = vector.load %arg2[%c6, %c0_14] : memref<9x512xf32, #tpu.memory_space<vmem>>, vector<1x512xf32>
    %29 = vector.broadcast %28 : vector<1x512xf32> to vector<8x512xf32>
    %30 = arith.mulf %27, %29 : vector<8x512xf32>
    %c48 = arith.constant 48 : index
    %c0_15 = arith.constant 0 : index
    %31 = vector.load %arg10[%c48, %c0_15] : memref<72x512xf32, #tpu.memory_space<vmem>>, vector<8x512xf32>
    tpu.vector_store %arg10[%c48, %c0_15], %30 {strides = array<i32>} : memref<72x512xf32, #tpu.memory_space<vmem>>, vector<8x512xf32>,
    %c496_i32 = arith.constant 496 : i32
    %32 = tpu.dynamic_rotate %0 by %c496_i32 dim 1 : vector<8x512xf32>, i32 -> vector<8x512xf32>
    %c7 = arith.constant 7 : index
    %c0_16 = arith.constant 0 : index
    %33 = vector.load %arg2[%c7, %c0_16] : memref<9x512xf32, #tpu.memory_space<vmem>>, vector<1x512xf32>
    %34 = vector.broadcast %33 : vector<1x512xf32> to vector<8x512xf32>
    %35 = arith.mulf %32, %34 : vector<8x512xf32>
    %c56 = arith.constant 56 : index
    %c0_17 = arith.constant 0 : index
    %36 = vector.load %arg10[%c56, %c0_17] : memref<72x512xf32, #tpu.memory_space<vmem>>, vector<8x512xf32>
    tpu.vector_store %arg10[%c56, %c0_17], %35 {strides = array<i32>} : memref<72x512xf32, #tpu.memory_space<vmem>>, vector<8x512xf32>,
    %c495_i32 = arith.constant 495 : i32
    %37 = tpu.dynamic_rotate %0 by %c495_i32 dim 1 : vector<8x512xf32>, i32 -> vector<8x512xf32>
    %c8_18 = arith.constant 8 : index
    %c0_19 = arith.constant 0 : index
    %38 = vector.load %arg2[%c8_18, %c0_19] : memref<9x512xf32, #tpu.memory_space<vmem>>, vector<1x512xf32>
    %39 = vector.broadcast %38 : vector<1x512xf32> to vector<8x512xf32>
    %40 = arith.mulf %37, %39 : vector<8x512xf32>
    %c64 = arith.constant 64 : index
    %c0_20 = arith.constant 0 : index
    %41 = vector.load %arg10[%c64, %c0_20] : memref<72x512xf32, #tpu.memory_space<vmem>>, vector<8x512xf32>
    tpu.vector_store %arg10[%c64, %c0_20], %40 {strides = array<i32>} : memref<72x512xf32, #tpu.memory_space<vmem>>, vector<8x512xf32>,
    %c0_21 = arith.constant 0 : index
    %c0_22 = arith.constant 0 : index
    %42 = vector.load %arg3[%c0_21, %c0_22] : memref<32x72xf32, #tpu.memory_space<vmem>>, vector<32x72xf32>
    %c0_23 = arith.constant 0 : index
    %c0_24 = arith.constant 0 : index
    %43 = vector.load %arg10[%c0_23, %c0_24] : memref<72x512xf32, #tpu.memory_space<vmem>>, vector<72x512xf32>
    %cst = arith.constant dense<0.000000e+00> : vector<32x512xf32>
    %44 = tpu.matmul %42, %43, %cst {dimension_numbers = #tpu.dot_dimension_numbers<[1], [0], [0], [1], [0, 0, 1, 1], [], []>} : vector<32x72xf32>, vector<72x512xf32>, vector<32x512xf32> -> vector<32x512xf32>
    %c0_25 = arith.constant 0 : index
    %c0_26 = arith.constant 0 : index
    %45 = vector.load %arg4[%c0_25, %c0_26] : memref<32x1xf32, #tpu.memory_space<vmem>>, vector<32x1xf32>
    %46 = vector.broadcast %45 : vector<32x1xf32> to vector<32x512xf32>
    %47 = arith.addf %44, %46 : vector<32x512xf32>
    %c0_27 = arith.constant 0 : index
    %c0_28 = arith.constant 0 : index
    %48 = vector.load %arg12[%c0_27, %c0_28] : memref<32x512xf32, #tpu.memory_space<vmem>>, vector<32x512xf32>
    tpu.vector_store %arg12[%c0_27, %c0_28], %47 {strides = array<i32>} : memref<32x512xf32, #tpu.memory_space<vmem>>, vector<32x512xf32>,
    %c0_29 = arith.constant 0 : index
    %c0_30 = arith.constant 0 : index
    %49 = vector.load %arg13[%c0_29, %c0_30] : memref<32x512xf32, #tpu.memory_space<vmem>>, vector<32x512xf32>
    tpu.vector_store %arg13[%c0_29, %c0_30], %47 {strides = array<i32>} : memref<32x512xf32, #tpu.memory_space<vmem>>, vector<32x512xf32>,
    %c0_31 = arith.constant 0 : index
    %c0_32 = arith.constant 0 : index
    %50 = vector.load %arg12[%c0_31, %c0_32] : memref<32x512xf32, #tpu.memory_space<vmem>>, vector<32x512xf32>
    %c0_33 = arith.constant 0 : index
    %c0_34 = arith.constant 0 : index
    %c0_35 = arith.constant 0 : index
    %51 = vector.load %arg5[%c0_33, %c0_34, %c0_35] : memref<3x16x32xbf16, #tpu.memory_space<vmem>>, vector<1x16x32xbf16>
    %52 = vector.shape_cast %51 : vector<1x16x32xbf16> to vector<16x32xbf16>
    %53 = arith.truncf %50 : vector<32x512xf32> to vector<32x512xbf16>
    %cst_36 = arith.constant dense<0.000000e+00> : vector<16x512xf32>
    %54 = tpu.matmul %52, %53, %cst_36 {dimension_numbers = #tpu.dot_dimension_numbers<[1], [0], [0], [1], [0, 0, 1, 1], [], []>} : vector<16x32xbf16>, vector<32x512xbf16>, vector<16x512xf32> -> vector<16x512xf32>
    %cst_37 = arith.constant 0.000000e+00 : f32
    %55 = vector.broadcast %cst_37 : f32 to vector<16x512xf32>
    %c17_i32_38 = arith.constant 17 : i32
    %56 = tpu.dynamic_rotate %54 by %c17_i32_38 dim 1 : vector<16x512xf32>, i32 -> vector<16x512xf32>
    %c0_39 = arith.constant 0 : index
    %c0_40 = arith.constant 0 : index
    %57 = vector.load %arg2[%c0_39, %c0_40] : memref<9x512xf32, #tpu.memory_space<vmem>>, vector<1x512xf32>
    %58 = vector.broadcast %57 : vector<1x512xf32> to vector<16x512xf32>
    %59 = arith.mulf %56, %58 : vector<16x512xf32>
    %c0_41 = arith.constant 0 : index
    %c0_42 = arith.constant 0 : index
    %c0_43 = arith.constant 0 : index
    %c0_44 = arith.constant 0 : index
    %60 = vector.load %arg6[%c0_41, %c0_42, %c0_43, %c0_44] : memref<3x9x16x1xf32, #tpu.memory_space<vmem>>, vector<1x1x16x1xf32>
    %61 = vector.shape_cast %60 : vector<1x1x16x1xf32> to vector<16x1xf32>
    %62 = vector.broadcast %61 : vector<16x1xf32> to vector<16x512xf32>
    %63 = arith.mulf %59, %62 : vector<16x512xf32>
    %64 = arith.addf %55, %63 : vector<16x512xf32>
    %c16_i32_45 = arith.constant 16 : i32
    %65 = tpu.dynamic_rotate %54 by %c16_i32_45 dim 1 : vector<16x512xf32>, i32 -> vector<16x512xf32>
    %c1_46 = arith.constant 1 : index
    %c0_47 = arith.constant 0 : index
    %66 = vector.load %arg2[%c1_46, %c0_47] : memref<9x512xf32, #tpu.memory_space<vmem>>, vector<1x512xf32>
    %67 = vector.broadcast %66 : vector<1x512xf32> to vector<16x512xf32>
    %68 = arith.mulf %65, %67 : vector<16x512xf32>
    %c0_48 = arith.constant 0 : index
    %c1_49 = arith.constant 1 : index
    %c0_50 = arith.constant 0 : index
    %c0_51 = arith.constant 0 : index
    %69 = vector.load %arg6[%c0_48, %c1_49, %c0_50, %c0_51] : memref<3x9x16x1xf32, #tpu.memory_space<vmem>>, vector<1x1x16x1xf32>
    %70 = vector.shape_cast %69 : vector<1x1x16x1xf32> to vector<16x1xf32>
    %71 = vector.broadcast %70 : vector<16x1xf32> to vector<16x512xf32>
    %72 = arith.mulf %68, %71 : vector<16x512xf32>
    %73 = arith.addf %64, %72 : vector<16x512xf32>
    %c15_i32_52 = arith.constant 15 : i32
    %74 = tpu.dynamic_rotate %54 by %c15_i32_52 dim 1 : vector<16x512xf32>, i32 -> vector<16x512xf32>
    %c2_53 = arith.constant 2 : index
    %c0_54 = arith.constant 0 : index
    %75 = vector.load %arg2[%c2_53, %c0_54] : memref<9x512xf32, #tpu.memory_space<vmem>>, vector<1x512xf32>
    %76 = vector.broadcast %75 : vector<1x512xf32> to vector<16x512xf32>
    %77 = arith.mulf %74, %76 : vector<16x512xf32>
    %c0_55 = arith.constant 0 : index
    %c2_56 = arith.constant 2 : index
    %c0_57 = arith.constant 0 : index
    %c0_58 = arith.constant 0 : index
    %78 = vector.load %arg6[%c0_55, %c2_56, %c0_57, %c0_58] : memref<3x9x16x1xf32, #tpu.memory_space<vmem>>, vector<1x1x16x1xf32>
    %79 = vector.shape_cast %78 : vector<1x1x16x1xf32> to vector<16x1xf32>
    %80 = vector.broadcast %79 : vector<16x1xf32> to vector<16x512xf32>
    %81 = arith.mulf %77, %80 : vector<16x512xf32>
    %82 = arith.addf %73, %81 : vector<16x512xf32>
    %c1_i32_59 = arith.constant 1 : i32
    %83 = tpu.dynamic_rotate %54 by %c1_i32_59 dim 1 : vector<16x512xf32>, i32 -> vector<16x512xf32>
    %c3_60 = arith.constant 3 : index
    %c0_61 = arith.constant 0 : index
    %84 = vector.load %arg2[%c3_60, %c0_61] : memref<9x512xf32, #tpu.memory_space<vmem>>, vector<1x512xf32>
    %85 = vector.broadcast %84 : vector<1x512xf32> to vector<16x512xf32>
    %86 = arith.mulf %83, %85 : vector<16x512xf32>
    %c0_62 = arith.constant 0 : index
    %c3_63 = arith.constant 3 : index
    %c0_64 = arith.constant 0 : index
    %c0_65 = arith.constant 0 : index
    %87 = vector.load %arg6[%c0_62, %c3_63, %c0_64, %c0_65] : memref<3x9x16x1xf32, #tpu.memory_space<vmem>>, vector<1x1x16x1xf32>
    %88 = vector.shape_cast %87 : vector<1x1x16x1xf32> to vector<16x1xf32>
    %89 = vector.broadcast %88 : vector<16x1xf32> to vector<16x512xf32>
    %90 = arith.mulf %86, %89 : vector<16x512xf32>
    %91 = arith.addf %82, %90 : vector<16x512xf32>
    %c0_66 = arith.constant 0 : index
    %c4 = arith.constant 4 : index
    %c0_67 = arith.constant 0 : index
    %c0_68 = arith.constant 0 : index
    %92 = vector.load %arg6[%c0_66, %c4, %c0_67, %c0_68] : memref<3x9x16x1xf32, #tpu.memory_space<vmem>>, vector<1x1x16x1xf32>
    %93 = vector.shape_cast %92 : vector<1x1x16x1xf32> to vector<16x1xf32>
    %94 = vector.broadcast %93 : vector<16x1xf32> to vector<16x512xf32>
    %95 = arith.mulf %54, %94 : vector<16x512xf32>
    %96 = arith.addf %91, %95 : vector<16x512xf32>
    %c511_i32_69 = arith.constant 511 : i32
    %97 = tpu.dynamic_rotate %54 by %c511_i32_69 dim 1 : vector<16x512xf32>, i32 -> vector<16x512xf32>
    %c5_70 = arith.constant 5 : index
    %c0_71 = arith.constant 0 : index
    %98 = vector.load %arg2[%c5_70, %c0_71] : memref<9x512xf32, #tpu.memory_space<vmem>>, vector<1x512xf32>
    %99 = vector.broadcast %98 : vector<1x512xf32> to vector<16x512xf32>
    %100 = arith.mulf %97, %99 : vector<16x512xf32>
    %c0_72 = arith.constant 0 : index
    %c5_73 = arith.constant 5 : index
    %c0_74 = arith.constant 0 : index
    %c0_75 = arith.constant 0 : index
    %101 = vector.load %arg6[%c0_72, %c5_73, %c0_74, %c0_75] : memref<3x9x16x1xf32, #tpu.memory_space<vmem>>, vector<1x1x16x1xf32>
    %102 = vector.shape_cast %101 : vector<1x1x16x1xf32> to vector<16x1xf32>
    %103 = vector.broadcast %102 : vector<16x1xf32> to vector<16x512xf32>
    %104 = arith.mulf %100, %103 : vector<16x512xf32>
    %105 = arith.addf %96, %104 : vector<16x512xf32>
    %c497_i32_76 = arith.constant 497 : i32
    %106 = tpu.dynamic_rotate %54 by %c497_i32_76 dim 1 : vector<16x512xf32>, i32 -> vector<16x512xf32>
    %c6_77 = arith.constant 6 : index
    %c0_78 = arith.constant 0 : index
    %107 = vector.load %arg2[%c6_77, %c0_78] : memref<9x512xf32, #tpu.memory_space<vmem>>, vector<1x512xf32>
    %108 = vector.broadcast %107 : vector<1x512xf32> to vector<16x512xf32>
    %109 = arith.mulf %106, %108 : vector<16x512xf32>
    %c0_79 = arith.constant 0 : index
    %c6_80 = arith.constant 6 : index
    %c0_81 = arith.constant 0 : index
    %c0_82 = arith.constant 0 : index
    %110 = vector.load %arg6[%c0_79, %c6_80, %c0_81, %c0_82] : memref<3x9x16x1xf32, #tpu.memory_space<vmem>>, vector<1x1x16x1xf32>
    %111 = vector.shape_cast %110 : vector<1x1x16x1xf32> to vector<16x1xf32>
    %112 = vector.broadcast %111 : vector<16x1xf32> to vector<16x512xf32>
    %113 = arith.mulf %109, %112 : vector<16x512xf32>
    %114 = arith.addf %105, %113 : vector<16x512xf32>
    %c496_i32_83 = arith.constant 496 : i32
    %115 = tpu.dynamic_rotate %54 by %c496_i32_83 dim 1 : vector<16x512xf32>, i32 -> vector<16x512xf32>
    %c7_84 = arith.constant 7 : index
    %c0_85 = arith.constant 0 : index
    %116 = vector.load %arg2[%c7_84, %c0_85] : memref<9x512xf32, #tpu.memory_space<vmem>>, vector<1x512xf32>
    %117 = vector.broadcast %116 : vector<1x512xf32> to vector<16x512xf32>
    %118 = arith.mulf %115, %117 : vector<16x512xf32>
    %c0_86 = arith.constant 0 : index
    %c7_87 = arith.constant 7 : index
    %c0_88 = arith.constant 0 : index
    %c0_89 = arith.constant 0 : index
    %119 = vector.load %arg6[%c0_86, %c7_87, %c0_88, %c0_89] : memref<3x9x16x1xf32, #tpu.memory_space<vmem>>, vector<1x1x16x1xf32>
    %120 = vector.shape_cast %119 : vector<1x1x16x1xf32> to vector<16x1xf32>
    %121 = vector.broadcast %120 : vector<16x1xf32> to vector<16x512xf32>
    %122 = arith.mulf %118, %121 : vector<16x512xf32>
    %123 = arith.addf %114, %122 : vector<16x512xf32>
    %c495_i32_90 = arith.constant 495 : i32
    %124 = tpu.dynamic_rotate %54 by %c495_i32_90 dim 1 : vector<16x512xf32>, i32 -> vector<16x512xf32>
    %c8_91 = arith.constant 8 : index
    %c0_92 = arith.constant 0 : index
    %125 = vector.load %arg2[%c8_91, %c0_92] : memref<9x512xf32, #tpu.memory_space<vmem>>, vector<1x512xf32>
    %126 = vector.broadcast %125 : vector<1x512xf32> to vector<16x512xf32>
    %127 = arith.mulf %124, %126 : vector<16x512xf32>
    %c0_93 = arith.constant 0 : index
    %c8_94 = arith.constant 8 : index
    %c0_95 = arith.constant 0 : index
    %c0_96 = arith.constant 0 : index
    %128 = vector.load %arg6[%c0_93, %c8_94, %c0_95, %c0_96] : memref<3x9x16x1xf32, #tpu.memory_space<vmem>>, vector<1x1x16x1xf32>
    %129 = vector.shape_cast %128 : vector<1x1x16x1xf32> to vector<16x1xf32>
    %130 = vector.broadcast %129 : vector<16x1xf32> to vector<16x512xf32>
    %131 = arith.mulf %127, %130 : vector<16x512xf32>
    %132 = arith.addf %123, %131 : vector<16x512xf32>
    %cst_97 = arith.constant 0.000000e+00 : f32
    %133 = vector.broadcast %cst_97 : f32 to vector<16x512xf32>
    %134 = arith.maximumf %54, %133 : vector<16x512xf32>
    %c0_98 = arith.constant 0 : index
    %c0_99 = arith.constant 0 : index
    %135 = vector.load %arg12[%c0_98, %c0_99] : memref<32x512xf32, #tpu.memory_space<vmem>>, vector<16x512xf32>
    tpu.vector_store %arg12[%c0_98, %c0_99], %134 {strides = array<i32>} : memref<32x512xf32, #tpu.memory_space<vmem>>, vector<16x512xf32>,
    %cst_100 = arith.constant 0.000000e+00 : f32
    %136 = vector.broadcast %cst_100 : f32 to vector<16x512xf32>
    %137 = arith.maximumf %132, %136 : vector<16x512xf32>
    %c16_101 = arith.constant 16 : index
    %c0_102 = arith.constant 0 : index
    %138 = vector.load %arg12[%c16_101, %c0_102] : memref<32x512xf32, #tpu.memory_space<vmem>>, vector<16x512xf32>
    tpu.vector_store %arg12[%c16_101, %c0_102], %137 {strides = array<i32>} : memref<32x512xf32, #tpu.memory_space<vmem>>, vector<16x512xf32>,
    %c0_103 = arith.constant 0 : index
    %c0_104 = arith.constant 0 : index
    %139 = vector.load %arg12[%c0_103, %c0_104] : memref<32x512xf32, #tpu.memory_space<vmem>>, vector<32x512xf32>
    %c1_105 = arith.constant 1 : index
    %c0_106 = arith.constant 0 : index
    %c0_107 = arith.constant 0 : index
    %140 = vector.load %arg5[%c1_105, %c0_106, %c0_107] : memref<3x16x32xbf16, #tpu.memory_space<vmem>>, vector<1x16x32xbf16>
    %141 = vector.shape_cast %140 : vector<1x16x32xbf16> to vector<16x32xbf16>
    %142 = arith.truncf %139 : vector<32x512xf32> to vector<32x512xbf16>
    %cst_108 = arith.constant dense<0.000000e+00> : vector<16x512xf32>
    %143 = tpu.matmul %141, %142, %cst_108 {dimension_numbers = #tpu.dot_dimension_numbers<[1], [0], [0], [1], [0, 0, 1, 1], [], []>} : vector<16x32xbf16>, vector<32x512xbf16>, vector<16x512xf32> -> vector<16x512xf32>
    %cst_109 = arith.constant 0.000000e+00 : f32
    %144 = vector.broadcast %cst_109 : f32 to vector<16x512xf32>
    %c17_i32_110 = arith.constant 17 : i32
    %145 = tpu.dynamic_rotate %143 by %c17_i32_110 dim 1 : vector<16x512xf32>, i32 -> vector<16x512xf32>
    %c0_111 = arith.constant 0 : index
    %c0_112 = arith.constant 0 : index
    %146 = vector.load %arg2[%c0_111, %c0_112] : memref<9x512xf32, #tpu.memory_space<vmem>>, vector<1x512xf32>
    %147 = vector.broadcast %146 : vector<1x512xf32> to vector<16x512xf32>
    %148 = arith.mulf %145, %147 : vector<16x512xf32>
    %c1_113 = arith.constant 1 : index
    %c0_114 = arith.constant 0 : index
    %c0_115 = arith.constant 0 : index
    %c0_116 = arith.constant 0 : index
    %149 = vector.load %arg6[%c1_113, %c0_114, %c0_115, %c0_116] : memref<3x9x16x1xf32, #tpu.memory_space<vmem>>, vector<1x1x16x1xf32>
    %150 = vector.shape_cast %149 : vector<1x1x16x1xf32> to vector<16x1xf32>
    %151 = vector.broadcast %150 : vector<16x1xf32> to vector<16x512xf32>
    %152 = arith.mulf %148, %151 : vector<16x512xf32>
    %153 = arith.addf %144, %152 : vector<16x512xf32>
    %c16_i32_117 = arith.constant 16 : i32
    %154 = tpu.dynamic_rotate %143 by %c16_i32_117 dim 1 : vector<16x512xf32>, i32 -> vector<16x512xf32>
    %c1_118 = arith.constant 1 : index
    %c0_119 = arith.constant 0 : index
    %155 = vector.load %arg2[%c1_118, %c0_119] : memref<9x512xf32, #tpu.memory_space<vmem>>, vector<1x512xf32>
    %156 = vector.broadcast %155 : vector<1x512xf32> to vector<16x512xf32>
    %157 = arith.mulf %154, %156 : vector<16x512xf32>
    %c1_120 = arith.constant 1 : index
    %c1_121 = arith.constant 1 : index
    %c0_122 = arith.constant 0 : index
    %c0_123 = arith.constant 0 : index
    %158 = vector.load %arg6[%c1_120, %c1_121, %c0_122, %c0_123] : memref<3x9x16x1xf32, #tpu.memory_space<vmem>>, vector<1x1x16x1xf32>
    %159 = vector.shape_cast %158 : vector<1x1x16x1xf32> to vector<16x1xf32>
    %160 = vector.broadcast %159 : vector<16x1xf32> to vector<16x512xf32>
    %161 = arith.mulf %157, %160 : vector<16x512xf32>
    %162 = arith.addf %153, %161 : vector<16x512xf32>
    %c15_i32_124 = arith.constant 15 : i32
    %163 = tpu.dynamic_rotate %143 by %c15_i32_124 dim 1 : vector<16x512xf32>, i32 -> vector<16x512xf32>
    %c2_125 = arith.constant 2 : index
    %c0_126 = arith.constant 0 : index
    %164 = vector.load %arg2[%c2_125, %c0_126] : memref<9x512xf32, #tpu.memory_space<vmem>>, vector<1x512xf32>
    %165 = vector.broadcast %164 : vector<1x512xf32> to vector<16x512xf32>
    %166 = arith.mulf %163, %165 : vector<16x512xf32>
    %c1_127 = arith.constant 1 : index
    %c2_128 = arith.constant 2 : index
    %c0_129 = arith.constant 0 : index
    %c0_130 = arith.constant 0 : index
    %167 = vector.load %arg6[%c1_127, %c2_128, %c0_129, %c0_130] : memref<3x9x16x1xf32, #tpu.memory_space<vmem>>, vector<1x1x16x1xf32>
    %168 = vector.shape_cast %167 : vector<1x1x16x1xf32> to vector<16x1xf32>
    %169 = vector.broadcast %168 : vector<16x1xf32> to vector<16x512xf32>
    %170 = arith.mulf %166, %169 : vector<16x512xf32>
    %171 = arith.addf %162, %170 : vector<16x512xf32>
    %c1_i32_131 = arith.constant 1 : i32
    %172 = tpu.dynamic_rotate %143 by %c1_i32_131 dim 1 : vector<16x512xf32>, i32 -> vector<16x512xf32>
    %c3_132 = arith.constant 3 : index
    %c0_133 = arith.constant 0 : index
    %173 = vector.load %arg2[%c3_132, %c0_133] : memref<9x512xf32, #tpu.memory_space<vmem>>, vector<1x512xf32>
    %174 = vector.broadcast %173 : vector<1x512xf32> to vector<16x512xf32>
    %175 = arith.mulf %172, %174 : vector<16x512xf32>
    %c1_134 = arith.constant 1 : index
    %c3_135 = arith.constant 3 : index
    %c0_136 = arith.constant 0 : index
    %c0_137 = arith.constant 0 : index
    %176 = vector.load %arg6[%c1_134, %c3_135, %c0_136, %c0_137] : memref<3x9x16x1xf32, #tpu.memory_space<vmem>>, vector<1x1x16x1xf32>
    %177 = vector.shape_cast %176 : vector<1x1x16x1xf32> to vector<16x1xf32>
    %178 = vector.broadcast %177 : vector<16x1xf32> to vector<16x512xf32>
    %179 = arith.mulf %175, %178 : vector<16x512xf32>
    %180 = arith.addf %171, %179 : vector<16x512xf32>
    %c1_138 = arith.constant 1 : index
    %c4_139 = arith.constant 4 : index
    %c0_140 = arith.constant 0 : index
    %c0_141 = arith.constant 0 : index
    %181 = vector.load %arg6[%c1_138, %c4_139, %c0_140, %c0_141] : memref<3x9x16x1xf32, #tpu.memory_space<vmem>>, vector<1x1x16x1xf32>
    %182 = vector.shape_cast %181 : vector<1x1x16x1xf32> to vector<16x1xf32>
    %183 = vector.broadcast %182 : vector<16x1xf32> to vector<16x512xf32>
    %184 = arith.mulf %143, %183 : vector<16x512xf32>
    %185 = arith.addf %180, %184 : vector<16x512xf32>
    %c511_i32_142 = arith.constant 511 : i32
    %186 = tpu.dynamic_rotate %143 by %c511_i32_142 dim 1 : vector<16x512xf32>, i32 -> vector<16x512xf32>
    %c5_143 = arith.constant 5 : index
    %c0_144 = arith.constant 0 : index
    %187 = vector.load %arg2[%c5_143, %c0_144] : memref<9x512xf32, #tpu.memory_space<vmem>>, vector<1x512xf32>
    %188 = vector.broadcast %187 : vector<1x512xf32> to vector<16x512xf32>
    %189 = arith.mulf %186, %188 : vector<16x512xf32>
    %c1_145 = arith.constant 1 : index
    %c5_146 = arith.constant 5 : index
    %c0_147 = arith.constant 0 : index
    %c0_148 = arith.constant 0 : index
    %190 = vector.load %arg6[%c1_145, %c5_146, %c0_147, %c0_148] : memref<3x9x16x1xf32, #tpu.memory_space<vmem>>, vector<1x1x16x1xf32>
    %191 = vector.shape_cast %190 : vector<1x1x16x1xf32> to vector<16x1xf32>
    %192 = vector.broadcast %191 : vector<16x1xf32> to vector<16x512xf32>
    %193 = arith.mulf %189, %192 : vector<16x512xf32>
    %194 = arith.addf %185, %193 : vector<16x512xf32>
    %c497_i32_149 = arith.constant 497 : i32
    %195 = tpu.dynamic_rotate %143 by %c497_i32_149 dim 1 : vector<16x512xf32>, i32 -> vector<16x512xf32>
    %c6_150 = arith.constant 6 : index
    %c0_151 = arith.constant 0 : index
    %196 = vector.load %arg2[%c6_150, %c0_151] : memref<9x512xf32, #tpu.memory_space<vmem>>, vector<1x512xf32>
    %197 = vector.broadcast %196 : vector<1x512xf32> to vector<16x512xf32>
    %198 = arith.mulf %195, %197 : vector<16x512xf32>
    %c1_152 = arith.constant 1 : index
    %c6_153 = arith.constant 6 : index
    %c0_154 = arith.constant 0 : index
    %c0_155 = arith.constant 0 : index
    %199 = vector.load %arg6[%c1_152, %c6_153, %c0_154, %c0_155] : memref<3x9x16x1xf32, #tpu.memory_space<vmem>>, vector<1x1x16x1xf32>
    %200 = vector.shape_cast %199 : vector<1x1x16x1xf32> to vector<16x1xf32>
    %201 = vector.broadcast %200 : vector<16x1xf32> to vector<16x512xf32>
    %202 = arith.mulf %198, %201 : vector<16x512xf32>
    %203 = arith.addf %194, %202 : vector<16x512xf32>
    %c496_i32_156 = arith.constant 496 : i32
    %204 = tpu.dynamic_rotate %143 by %c496_i32_156 dim 1 : vector<16x512xf32>, i32 -> vector<16x512xf32>
    %c7_157 = arith.constant 7 : index
    %c0_158 = arith.constant 0 : index
    %205 = vector.load %arg2[%c7_157, %c0_158] : memref<9x512xf32, #tpu.memory_space<vmem>>, vector<1x512xf32>
    %206 = vector.broadcast %205 : vector<1x512xf32> to vector<16x512xf32>
    %207 = arith.mulf %204, %206 : vector<16x512xf32>
    %c1_159 = arith.constant 1 : index
    %c7_160 = arith.constant 7 : index
    %c0_161 = arith.constant 0 : index
    %c0_162 = arith.constant 0 : index
    %208 = vector.load %arg6[%c1_159, %c7_160, %c0_161, %c0_162] : memref<3x9x16x1xf32, #tpu.memory_space<vmem>>, vector<1x1x16x1xf32>
    %209 = vector.shape_cast %208 : vector<1x1x16x1xf32> to vector<16x1xf32>
    %210 = vector.broadcast %209 : vector<16x1xf32> to vector<16x512xf32>
    %211 = arith.mulf %207, %210 : vector<16x512xf32>
    %212 = arith.addf %203, %211 : vector<16x512xf32>
    %c495_i32_163 = arith.constant 495 : i32
    %213 = tpu.dynamic_rotate %143 by %c495_i32_163 dim 1 : vector<16x512xf32>, i32 -> vector<16x512xf32>
    %c8_164 = arith.constant 8 : index
    %c0_165 = arith.constant 0 : index
    %214 = vector.load %arg2[%c8_164, %c0_165] : memref<9x512xf32, #tpu.memory_space<vmem>>, vector<1x512xf32>
    %215 = vector.broadcast %214 : vector<1x512xf32> to vector<16x512xf32>
    %216 = arith.mulf %213, %215 : vector<16x512xf32>
    %c1_166 = arith.constant 1 : index
    %c8_167 = arith.constant 8 : index
    %c0_168 = arith.constant 0 : index
    %c0_169 = arith.constant 0 : index
    %217 = vector.load %arg6[%c1_166, %c8_167, %c0_168, %c0_169] : memref<3x9x16x1xf32, #tpu.memory_space<vmem>>, vector<1x1x16x1xf32>
    %218 = vector.shape_cast %217 : vector<1x1x16x1xf32> to vector<16x1xf32>
    %219 = vector.broadcast %218 : vector<16x1xf32> to vector<16x512xf32>
    %220 = arith.mulf %216, %219 : vector<16x512xf32>
    %221 = arith.addf %212, %220 : vector<16x512xf32>
    %cst_170 = arith.constant 0.000000e+00 : f32
    %222 = vector.broadcast %cst_170 : f32 to vector<16x512xf32>
    %223 = arith.maximumf %143, %222 : vector<16x512xf32>
    %c0_171 = arith.constant 0 : index
    %c0_172 = arith.constant 0 : index
    %224 = vector.load %arg12[%c0_171, %c0_172] : memref<32x512xf32, #tpu.memory_space<vmem>>, vector<16x512xf32>
    tpu.vector_store %arg12[%c0_171, %c0_172], %223 {strides = array<i32>} : memref<32x512xf32, #tpu.memory_space<vmem>>, vector<16x512xf32>,
    %cst_173 = arith.constant 0.000000e+00 : f32
    %225 = vector.broadcast %cst_173 : f32 to vector<16x512xf32>
    %226 = arith.maximumf %221, %225 : vector<16x512xf32>
    %c16_174 = arith.constant 16 : index
    %c0_175 = arith.constant 0 : index
    %227 = vector.load %arg12[%c16_174, %c0_175] : memref<32x512xf32, #tpu.memory_space<vmem>>, vector<16x512xf32>
    tpu.vector_store %arg12[%c16_174, %c0_175], %226 {strides = array<i32>} : memref<32x512xf32, #tpu.memory_space<vmem>>, vector<16x512xf32>,
    %c0_176 = arith.constant 0 : index
    %c0_177 = arith.constant 0 : index
    %228 = vector.load %arg12[%c0_176, %c0_177] : memref<32x512xf32, #tpu.memory_space<vmem>>, vector<32x512xf32>
    %c2_178 = arith.constant 2 : index
    %c0_179 = arith.constant 0 : index
    %c0_180 = arith.constant 0 : index
    %229 = vector.load %arg5[%c2_178, %c0_179, %c0_180] : memref<3x16x32xbf16, #tpu.memory_space<vmem>>, vector<1x16x32xbf16>
    %230 = vector.shape_cast %229 : vector<1x16x32xbf16> to vector<16x32xbf16>
    %231 = arith.truncf %228 : vector<32x512xf32> to vector<32x512xbf16>
    %cst_181 = arith.constant dense<0.000000e+00> : vector<16x512xf32>
    %232 = tpu.matmul %230, %231, %cst_181 {dimension_numbers = #tpu.dot_dimension_numbers<[1], [0], [0], [1], [0, 0, 1, 1], [], []>} : vector<16x32xbf16>, vector<32x512xbf16>, vector<16x512xf32> -> vector<16x512xf32>
    %cst_182 = arith.constant 0.000000e+00 : f32
    %233 = vector.broadcast %cst_182 : f32 to vector<16x512xf32>
    %c17_i32_183 = arith.constant 17 : i32
    %234 = tpu.dynamic_rotate %232 by %c17_i32_183 dim 1 : vector<16x512xf32>, i32 -> vector<16x512xf32>
    %c0_184 = arith.constant 0 : index
    %c0_185 = arith.constant 0 : index
    %235 = vector.load %arg2[%c0_184, %c0_185] : memref<9x512xf32, #tpu.memory_space<vmem>>, vector<1x512xf32>
    %236 = vector.broadcast %235 : vector<1x512xf32> to vector<16x512xf32>
    %237 = arith.mulf %234, %236 : vector<16x512xf32>
    %c2_186 = arith.constant 2 : index
    %c0_187 = arith.constant 0 : index
    %c0_188 = arith.constant 0 : index
    %c0_189 = arith.constant 0 : index
    %238 = vector.load %arg6[%c2_186, %c0_187, %c0_188, %c0_189] : memref<3x9x16x1xf32, #tpu.memory_space<vmem>>, vector<1x1x16x1xf32>
    %239 = vector.shape_cast %238 : vector<1x1x16x1xf32> to vector<16x1xf32>
    %240 = vector.broadcast %239 : vector<16x1xf32> to vector<16x512xf32>
    %241 = arith.mulf %237, %240 : vector<16x512xf32>
    %242 = arith.addf %233, %241 : vector<16x512xf32>
    %c16_i32_190 = arith.constant 16 : i32
    %243 = tpu.dynamic_rotate %232 by %c16_i32_190 dim 1 : vector<16x512xf32>, i32 -> vector<16x512xf32>
    %c1_191 = arith.constant 1 : index
    %c0_192 = arith.constant 0 : index
    %244 = vector.load %arg2[%c1_191, %c0_192] : memref<9x512xf32, #tpu.memory_space<vmem>>, vector<1x512xf32>
    %245 = vector.broadcast %244 : vector<1x512xf32> to vector<16x512xf32>
    %246 = arith.mulf %243, %245 : vector<16x512xf32>
    %c2_193 = arith.constant 2 : index
    %c1_194 = arith.constant 1 : index
    %c0_195 = arith.constant 0 : index
    %c0_196 = arith.constant 0 : index
    %247 = vector.load %arg6[%c2_193, %c1_194, %c0_195, %c0_196] : memref<3x9x16x1xf32, #tpu.memory_space<vmem>>, vector<1x1x16x1xf32>
    %248 = vector.shape_cast %247 : vector<1x1x16x1xf32> to vector<16x1xf32>
    %249 = vector.broadcast %248 : vector<16x1xf32> to vector<16x512xf32>
    %250 = arith.mulf %246, %249 : vector<16x512xf32>
    %251 = arith.addf %242, %250 : vector<16x512xf32>
    %c15_i32_197 = arith.constant 15 : i32
    %252 = tpu.dynamic_rotate %232 by %c15_i32_197 dim 1 : vector<16x512xf32>, i32 -> vector<16x512xf32>
    %c2_198 = arith.constant 2 : index
    %c0_199 = arith.constant 0 : index
    %253 = vector.load %arg2[%c2_198, %c0_199] : memref<9x512xf32, #tpu.memory_space<vmem>>, vector<1x512xf32>
    %254 = vector.broadcast %253 : vector<1x512xf32> to vector<16x512xf32>
    %255 = arith.mulf %252, %254 : vector<16x512xf32>
    %c2_200 = arith.constant 2 : index
    %c2_201 = arith.constant 2 : index
    %c0_202 = arith.constant 0 : index
    %c0_203 = arith.constant 0 : index
    %256 = vector.load %arg6[%c2_200, %c2_201, %c0_202, %c0_203] : memref<3x9x16x1xf32, #tpu.memory_space<vmem>>, vector<1x1x16x1xf32>
    %257 = vector.shape_cast %256 : vector<1x1x16x1xf32> to vector<16x1xf32>
    %258 = vector.broadcast %257 : vector<16x1xf32> to vector<16x512xf32>
    %259 = arith.mulf %255, %258 : vector<16x512xf32>
    %260 = arith.addf %251, %259 : vector<16x512xf32>
    %c1_i32_204 = arith.constant 1 : i32
    %261 = tpu.dynamic_rotate %232 by %c1_i32_204 dim 1 : vector<16x512xf32>, i32 -> vector<16x512xf32>
    %c3_205 = arith.constant 3 : index
    %c0_206 = arith.constant 0 : index
    %262 = vector.load %arg2[%c3_205, %c0_206] : memref<9x512xf32, #tpu.memory_space<vmem>>, vector<1x512xf32>
    %263 = vector.broadcast %262 : vector<1x512xf32> to vector<16x512xf32>
    %264 = arith.mulf %261, %263 : vector<16x512xf32>
    %c2_207 = arith.constant 2 : index
    %c3_208 = arith.constant 3 : index
    %c0_209 = arith.constant 0 : index
    %c0_210 = arith.constant 0 : index
    %265 = vector.load %arg6[%c2_207, %c3_208, %c0_209, %c0_210] : memref<3x9x16x1xf32, #tpu.memory_space<vmem>>, vector<1x1x16x1xf32>
    %266 = vector.shape_cast %265 : vector<1x1x16x1xf32> to vector<16x1xf32>
    %267 = vector.broadcast %266 : vector<16x1xf32> to vector<16x512xf32>
    %268 = arith.mulf %264, %267 : vector<16x512xf32>
    %269 = arith.addf %260, %268 : vector<16x512xf32>
    %c2_211 = arith.constant 2 : index
    %c4_212 = arith.constant 4 : index
    %c0_213 = arith.constant 0 : index
    %c0_214 = arith.constant 0 : index
    %270 = vector.load %arg6[%c2_211, %c4_212, %c0_213, %c0_214] : memref<3x9x16x1xf32, #tpu.memory_space<vmem>>, vector<1x1x16x1xf32>
    %271 = vector.shape_cast %270 : vector<1x1x16x1xf32> to vector<16x1xf32>
    %272 = vector.broadcast %271 : vector<16x1xf32> to vector<16x512xf32>
    %273 = arith.mulf %232, %272 : vector<16x512xf32>
    %274 = arith.addf %269, %273 : vector<16x512xf32>
    %c511_i32_215 = arith.constant 511 : i32
    %275 = tpu.dynamic_rotate %232 by %c511_i32_215 dim 1 : vector<16x512xf32>, i32 -> vector<16x512xf32>
    %c5_216 = arith.constant 5 : index
    %c0_217 = arith.constant 0 : index
    %276 = vector.load %arg2[%c5_216, %c0_217] : memref<9x512xf32, #tpu.memory_space<vmem>>, vector<1x512xf32>
    %277 = vector.broadcast %276 : vector<1x512xf32> to vector<16x512xf32>
    %278 = arith.mulf %275, %277 : vector<16x512xf32>
    %c2_218 = arith.constant 2 : index
    %c5_219 = arith.constant 5 : index
    %c0_220 = arith.constant 0 : index
    %c0_221 = arith.constant 0 : index
    %279 = vector.load %arg6[%c2_218, %c5_219, %c0_220, %c0_221] : memref<3x9x16x1xf32, #tpu.memory_space<vmem>>, vector<1x1x16x1xf32>
    %280 = vector.shape_cast %279 : vector<1x1x16x1xf32> to vector<16x1xf32>
    %281 = vector.broadcast %280 : vector<16x1xf32> to vector<16x512xf32>
    %282 = arith.mulf %278, %281 : vector<16x512xf32>
    %283 = arith.addf %274, %282 : vector<16x512xf32>
    %c497_i32_222 = arith.constant 497 : i32
    %284 = tpu.dynamic_rotate %232 by %c497_i32_222 dim 1 : vector<16x512xf32>, i32 -> vector<16x512xf32>
    %c6_223 = arith.constant 6 : index
    %c0_224 = arith.constant 0 : index
    %285 = vector.load %arg2[%c6_223, %c0_224] : memref<9x512xf32, #tpu.memory_space<vmem>>, vector<1x512xf32>
    %286 = vector.broadcast %285 : vector<1x512xf32> to vector<16x512xf32>
    %287 = arith.mulf %284, %286 : vector<16x512xf32>
    %c2_225 = arith.constant 2 : index
    %c6_226 = arith.constant 6 : index
    %c0_227 = arith.constant 0 : index
    %c0_228 = arith.constant 0 : index
    %288 = vector.load %arg6[%c2_225, %c6_226, %c0_227, %c0_228] : memref<3x9x16x1xf32, #tpu.memory_space<vmem>>, vector<1x1x16x1xf32>
    %289 = vector.shape_cast %288 : vector<1x1x16x1xf32> to vector<16x1xf32>
    %290 = vector.broadcast %289 : vector<16x1xf32> to vector<16x512xf32>
    %291 = arith.mulf %287, %290 : vector<16x512xf32>
    %292 = arith.addf %283, %291 : vector<16x512xf32>
    %c496_i32_229 = arith.constant 496 : i32
    %293 = tpu.dynamic_rotate %232 by %c496_i32_229 dim 1 : vector<16x512xf32>, i32 -> vector<16x512xf32>
    %c7_230 = arith.constant 7 : index
    %c0_231 = arith.constant 0 : index
    %294 = vector.load %arg2[%c7_230, %c0_231] : memref<9x512xf32, #tpu.memory_space<vmem>>, vector<1x512xf32>
    %295 = vector.broadcast %294 : vector<1x512xf32> to vector<16x512xf32>
    %296 = arith.mulf %293, %295 : vector<16x512xf32>
    %c2_232 = arith.constant 2 : index
    %c7_233 = arith.constant 7 : index
    %c0_234 = arith.constant 0 : index
    %c0_235 = arith.constant 0 : index
    %297 = vector.load %arg6[%c2_232, %c7_233, %c0_234, %c0_235] : memref<3x9x16x1xf32, #tpu.memory_space<vmem>>, vector<1x1x16x1xf32>
    %298 = vector.shape_cast %297 : vector<1x1x16x1xf32> to vector<16x1xf32>
    %299 = vector.broadcast %298 : vector<16x1xf32> to vector<16x512xf32>
    %300 = arith.mulf %296, %299 : vector<16x512xf32>
    %301 = arith.addf %292, %300 : vector<16x512xf32>
    %c495_i32_236 = arith.constant 495 : i32
    %302 = tpu.dynamic_rotate %232 by %c495_i32_236 dim 1 : vector<16x512xf32>, i32 -> vector<16x512xf32>
    %c8_237 = arith.constant 8 : index
    %c0_238 = arith.constant 0 : index
    %303 = vector.load %arg2[%c8_237, %c0_238] : memref<9x512xf32, #tpu.memory_space<vmem>>, vector<1x512xf32>
    %304 = vector.broadcast %303 : vector<1x512xf32> to vector<16x512xf32>
    %305 = arith.mulf %302, %304 : vector<16x512xf32>
    %c2_239 = arith.constant 2 : index
    %c8_240 = arith.constant 8 : index
    %c0_241 = arith.constant 0 : index
    %c0_242 = arith.constant 0 : index
    %306 = vector.load %arg6[%c2_239, %c8_240, %c0_241, %c0_242] : memref<3x9x16x1xf32, #tpu.memory_space<vmem>>, vector<1x1x16x1xf32>
    %307 = vector.shape_cast %306 : vector<1x1x16x1xf32> to vector<16x1xf32>
    %308 = vector.broadcast %307 : vector<16x1xf32> to vector<16x512xf32>
    %309 = arith.mulf %305, %308 : vector<16x512xf32>
    %310 = arith.addf %301, %309 : vector<16x512xf32>
    %cst_243 = arith.constant 0.000000e+00 : f32
    %311 = vector.broadcast %cst_243 : f32 to vector<16x512xf32>
    %312 = arith.maximumf %232, %311 : vector<16x512xf32>
    %c0_244 = arith.constant 0 : index
    %c0_245 = arith.constant 0 : index
    %313 = vector.load %arg12[%c0_244, %c0_245] : memref<32x512xf32, #tpu.memory_space<vmem>>, vector<16x512xf32>
    tpu.vector_store %arg12[%c0_244, %c0_245], %312 {strides = array<i32>} : memref<32x512xf32, #tpu.memory_space<vmem>>, vector<16x512xf32>,
    %cst_246 = arith.constant 0.000000e+00 : f32
    %314 = vector.broadcast %cst_246 : f32 to vector<16x512xf32>
    %315 = arith.maximumf %310, %314 : vector<16x512xf32>
    %c16_247 = arith.constant 16 : index
    %c0_248 = arith.constant 0 : index
    %316 = vector.load %arg12[%c16_247, %c0_248] : memref<32x512xf32, #tpu.memory_space<vmem>>, vector<16x512xf32>
    tpu.vector_store %arg12[%c16_247, %c0_248], %315 {strides = array<i32>} : memref<32x512xf32, #tpu.memory_space<vmem>>, vector<16x512xf32>,
    %c0_249 = arith.constant 0 : index
    %c0_250 = arith.constant 0 : index
    %317 = vector.load %arg12[%c0_249, %c0_250] : memref<32x512xf32, #tpu.memory_space<vmem>>, vector<32x512xf32>
    %c0_251 = arith.constant 0 : index
    %c0_252 = arith.constant 0 : index
    %318 = vector.load %arg13[%c0_251, %c0_252] : memref<32x512xf32, #tpu.memory_space<vmem>>, vector<32x512xf32>
    %319 = arith.addf %317, %318 : vector<32x512xf32>
    %c17_i32_253 = arith.constant 17 : i32
    %320 = tpu.dynamic_rotate %319 by %c17_i32_253 dim 1 : vector<32x512xf32>, i32 -> vector<32x512xf32>
    %c0_254 = arith.constant 0 : index
    %c0_255 = arith.constant 0 : index
    %321 = vector.load %arg2[%c0_254, %c0_255] : memref<9x512xf32, #tpu.memory_space<vmem>>, vector<1x512xf32>
    %322 = vector.broadcast %321 : vector<1x512xf32> to vector<32x512xf32>
    %323 = arith.mulf %320, %322 : vector<32x512xf32>
    %324 = arith.truncf %323 : vector<32x512xf32> to vector<32x512xbf16>
    %c0_256 = arith.constant 0 : index
    %c0_257 = arith.constant 0 : index
    %325 = vector.load %arg11[%c0_256, %c0_257] : memref<288x512xbf16, #tpu.memory_space<vmem>>, vector<32x512xbf16>
    tpu.vector_store %arg11[%c0_256, %c0_257], %324 {strides = array<i32>} : memref<288x512xbf16, #tpu.memory_space<vmem>>, vector<32x512xbf16>,
    %c16_i32_258 = arith.constant 16 : i32
    %326 = tpu.dynamic_rotate %319 by %c16_i32_258 dim 1 : vector<32x512xf32>, i32 -> vector<32x512xf32>
    %c1_259 = arith.constant 1 : index
    %c0_260 = arith.constant 0 : index
    %327 = vector.load %arg2[%c1_259, %c0_260] : memref<9x512xf32, #tpu.memory_space<vmem>>, vector<1x512xf32>
    %328 = vector.broadcast %327 : vector<1x512xf32> to vector<32x512xf32>
    %329 = arith.mulf %326, %328 : vector<32x512xf32>
    %330 = arith.truncf %329 : vector<32x512xf32> to vector<32x512xbf16>
    %c32_261 = arith.constant 32 : index
    %c0_262 = arith.constant 0 : index
    %331 = vector.load %arg11[%c32_261, %c0_262] : memref<288x512xbf16, #tpu.memory_space<vmem>>, vector<32x512xbf16>
    tpu.vector_store %arg11[%c32_261, %c0_262], %330 {strides = array<i32>} : memref<288x512xbf16, #tpu.memory_space<vmem>>, vector<32x512xbf16>,
    %c15_i32_263 = arith.constant 15 : i32
    %332 = tpu.dynamic_rotate %319 by %c15_i32_263 dim 1 : vector<32x512xf32>, i32 -> vector<32x512xf32>
    %c2_264 = arith.constant 2 : index
    %c0_265 = arith.constant 0 : index
    %333 = vector.load %arg2[%c2_264, %c0_265] : memref<9x512xf32, #tpu.memory_space<vmem>>, vector<1x512xf32>
    %334 = vector.broadcast %333 : vector<1x512xf32> to vector<32x512xf32>
    %335 = arith.mulf %332, %334 : vector<32x512xf32>
    %336 = arith.truncf %335 : vector<32x512xf32> to vector<32x512xbf16>
    %c64_266 = arith.constant 64 : index
    %c0_267 = arith.constant 0 : index
    %337 = vector.load %arg11[%c64_266, %c0_267] : memref<288x512xbf16, #tpu.memory_space<vmem>>, vector<32x512xbf16>
    tpu.vector_store %arg11[%c64_266, %c0_267], %336 {strides = array<i32>} : memref<288x512xbf16, #tpu.memory_space<vmem>>, vector<32x512xbf16>,
    %c1_i32_268 = arith.constant 1 : i32
    %338 = tpu.dynamic_rotate %319 by %c1_i32_268 dim 1 : vector<32x512xf32>, i32 -> vector<32x512xf32>
    %c3_269 = arith.constant 3 : index
    %c0_270 = arith.constant 0 : index
    %339 = vector.load %arg2[%c3_269, %c0_270] : memref<9x512xf32, #tpu.memory_space<vmem>>, vector<1x512xf32>
    %340 = vector.broadcast %339 : vector<1x512xf32> to vector<32x512xf32>
    %341 = arith.mulf %338, %340 : vector<32x512xf32>
    %342 = arith.truncf %341 : vector<32x512xf32> to vector<32x512xbf16>
    %c96 = arith.constant 96 : index
    %c0_271 = arith.constant 0 : index
    %343 = vector.load %arg11[%c96, %c0_271] : memref<288x512xbf16, #tpu.memory_space<vmem>>, vector<32x512xbf16>
    tpu.vector_store %arg11[%c96, %c0_271], %342 {strides = array<i32>} : memref<288x512xbf16, #tpu.memory_space<vmem>>, vector<32x512xbf16>,
    %344 = arith.truncf %319 : vector<32x512xf32> to vector<32x512xbf16>
    %c128 = arith.constant 128 : index
    %c0_272 = arith.constant 0 : index
    %345 = vector.load %arg11[%c128, %c0_272] : memref<288x512xbf16, #tpu.memory_space<vmem>>, vector<32x512xbf16>
    tpu.vector_store %arg11[%c128, %c0_272], %344 {strides = array<i32>} : memref<288x512xbf16, #tpu.memory_space<vmem>>, vector<32x512xbf16>,
    %c511_i32_273 = arith.constant 511 : i32
    %346 = tpu.dynamic_rotate %319 by %c511_i32_273 dim 1 : vector<32x512xf32>, i32 -> vector<32x512xf32>
    %c5_274 = arith.constant 5 : index
    %c0_275 = arith.constant 0 : index
    %347 = vector.load %arg2[%c5_274, %c0_275] : memref<9x512xf32, #tpu.memory_space<vmem>>, vector<1x512xf32>
    %348 = vector.broadcast %347 : vector<1x512xf32> to vector<32x512xf32>
    %349 = arith.mulf %346, %348 : vector<32x512xf32>
    %350 = arith.truncf %349 : vector<32x512xf32> to vector<32x512xbf16>
    %c160 = arith.constant 160 : index
    %c0_276 = arith.constant 0 : index
    %351 = vector.load %arg11[%c160, %c0_276] : memref<288x512xbf16, #tpu.memory_space<vmem>>, vector<32x512xbf16>
    tpu.vector_store %arg11[%c160, %c0_276], %350 {strides = array<i32>} : memref<288x512xbf16, #tpu.memory_space<vmem>>, vector<32x512xbf16>,
    %c497_i32_277 = arith.constant 497 : i32
    %352 = tpu.dynamic_rotate %319 by %c497_i32_277 dim 1 : vector<32x512xf32>, i32 -> vector<32x512xf32>
    %c6_278 = arith.constant 6 : index
    %c0_279 = arith.constant 0 : index
    %353 = vector.load %arg2[%c6_278, %c0_279] : memref<9x512xf32, #tpu.memory_space<vmem>>, vector<1x512xf32>
    %354 = vector.broadcast %353 : vector<1x512xf32> to vector<32x512xf32>
    %355 = arith.mulf %352, %354 : vector<32x512xf32>
    %356 = arith.truncf %355 : vector<32x512xf32> to vector<32x512xbf16>
    %c192 = arith.constant 192 : index
    %c0_280 = arith.constant 0 : index
    %357 = vector.load %arg11[%c192, %c0_280] : memref<288x512xbf16, #tpu.memory_space<vmem>>, vector<32x512xbf16>
    tpu.vector_store %arg11[%c192, %c0_280], %356 {strides = array<i32>} : memref<288x512xbf16, #tpu.memory_space<vmem>>, vector<32x512xbf16>,
    %c496_i32_281 = arith.constant 496 : i32
    %358 = tpu.dynamic_rotate %319 by %c496_i32_281 dim 1 : vector<32x512xf32>, i32 -> vector<32x512xf32>
    %c7_282 = arith.constant 7 : index
    %c0_283 = arith.constant 0 : index
    %359 = vector.load %arg2[%c7_282, %c0_283] : memref<9x512xf32, #tpu.memory_space<vmem>>, vector<1x512xf32>
    %360 = vector.broadcast %359 : vector<1x512xf32> to vector<32x512xf32>
    %361 = arith.mulf %358, %360 : vector<32x512xf32>
    %362 = arith.truncf %361 : vector<32x512xf32> to vector<32x512xbf16>
    %c224 = arith.constant 224 : index
    %c0_284 = arith.constant 0 : index
    %363 = vector.load %arg11[%c224, %c0_284] : memref<288x512xbf16, #tpu.memory_space<vmem>>, vector<32x512xbf16>
    tpu.vector_store %arg11[%c224, %c0_284], %362 {strides = array<i32>} : memref<288x512xbf16, #tpu.memory_space<vmem>>, vector<32x512xbf16>,
    %c495_i32_285 = arith.constant 495 : i32
    %364 = tpu.dynamic_rotate %319 by %c495_i32_285 dim 1 : vector<32x512xf32>, i32 -> vector<32x512xf32>
    %c8_286 = arith.constant 8 : index
    %c0_287 = arith.constant 0 : index
    %365 = vector.load %arg2[%c8_286, %c0_287] : memref<9x512xf32, #tpu.memory_space<vmem>>, vector<1x512xf32>
    %366 = vector.broadcast %365 : vector<1x512xf32> to vector<32x512xf32>
    %367 = arith.mulf %364, %366 : vector<32x512xf32>
    %368 = arith.truncf %367 : vector<32x512xf32> to vector<32x512xbf16>
    %c256 = arith.constant 256 : index
    %c0_288 = arith.constant 0 : index
    %369 = vector.load %arg11[%c256, %c0_288] : memref<288x512xbf16, #tpu.memory_space<vmem>>, vector<32x512xbf16>
    tpu.vector_store %arg11[%c256, %c0_288], %368 {strides = array<i32>} : memref<288x512xbf16, #tpu.memory_space<vmem>>, vector<32x512xbf16>,
    %c0_289 = arith.constant 0 : index
    %c0_290 = arith.constant 0 : index
    %370 = vector.load %arg7[%c0_289, %c0_290] : memref<4x288xbf16, #tpu.memory_space<vmem>>, vector<4x288xbf16>
    %c0_291 = arith.constant 0 : index
    %c0_292 = arith.constant 0 : index
    %371 = vector.load %arg11[%c0_291, %c0_292] : memref<288x512xbf16, #tpu.memory_space<vmem>>, vector<288x512xbf16>
    %cst_293 = arith.constant dense<0.000000e+00> : vector<4x512xf32>
    %372 = tpu.matmul %370, %371, %cst_293 {dimension_numbers = #tpu.dot_dimension_numbers<[1], [0], [0], [1], [0, 0, 1, 1], [], []>} : vector<4x288xbf16>, vector<288x512xbf16>, vector<4x512xf32> -> vector<4x512xf32>
    %c0_294 = arith.constant 0 : index
    %c0_295 = arith.constant 0 : index
    %373 = vector.load %arg8[%c0_294, %c0_295] : memref<4x1xf32, #tpu.memory_space<vmem>>, vector<4x1xf32>
    %374 = vector.broadcast %373 : vector<4x1xf32> to vector<4x512xf32>
    %375 = arith.addf %372, %374 : vector<4x512xf32>
    %c0_296 = arith.constant 0 : index
    %c0_297 = arith.constant 0 : index
    %376 = vector.load %arg9[%c0_296, %c0_297] : memref<4x512xf32, #tpu.memory_space<vmem>>, vector<4x512xf32>
    tpu.vector_store %arg9[%c0_296, %c0_297], %375 {strides = array<i32>} : memref<4x512xf32, #tpu.memory_space<vmem>>, vector<4x512xf32>,
    return
  }
  func.func @transform_0(%arg0: i32) -> (i32, i32) {
    %c0_i32 = arith.constant 0 : i32
    %c0_i32_0 = arith.constant 0 : i32
    return %c0_i32, %arg0 : i32, i32
  }
  func.func @transform_1(%arg0: i32) -> (i32, i32) {
    %c0_i32 = arith.constant 0 : i32
    %c0_i32_0 = arith.constant 0 : i32
    %c0_i32_1 = arith.constant 0 : i32
    return %c0_i32, %c0_i32_0 : i32, i32
  }
  func.func @transform_2(%arg0: i32) -> (i32, i32) {
    %c0_i32 = arith.constant 0 : i32
    %c0_i32_0 = arith.constant 0 : i32
    %c0_i32_1 = arith.constant 0 : i32
    return %c0_i32, %c0_i32_0 : i32, i32
  }
  func.func @transform_3(%arg0: i32) -> (i32, i32) {
    %c0_i32 = arith.constant 0 : i32
    %c0_i32_0 = arith.constant 0 : i32
    %c0_i32_1 = arith.constant 0 : i32
    return %c0_i32, %c0_i32_0 : i32, i32
  }
  func.func @transform_4(%arg0: i32) -> (i32, i32, i32) {
    %c0_i32 = arith.constant 0 : i32
    %c0_i32_0 = arith.constant 0 : i32
    %c0_i32_1 = arith.constant 0 : i32
    %c0_i32_2 = arith.constant 0 : i32
    return %c0_i32, %c0_i32_0, %c0_i32_1 : i32, i32, i32
  }
  func.func @transform_5(%arg0: i32) -> (i32, i32, i32, i32) {
    %c0_i32 = arith.constant 0 : i32
    %c0_i32_0 = arith.constant 0 : i32
    %c0_i32_1 = arith.constant 0 : i32
    %c0_i32_2 = arith.constant 0 : i32
    %c0_i32_3 = arith.constant 0 : i32
    return %c0_i32, %c0_i32_0, %c0_i32_1, %c0_i32_2 : i32, i32, i32, i32
  }
  func.func @transform_6(%arg0: i32) -> (i32, i32) {
    %c0_i32 = arith.constant 0 : i32
    %c0_i32_0 = arith.constant 0 : i32
    %c0_i32_1 = arith.constant 0 : i32
    return %c0_i32, %c0_i32_0 : i32, i32
  }
  func.func @transform_7(%arg0: i32) -> (i32, i32) {
    %c0_i32 = arith.constant 0 : i32
    %c0_i32_0 = arith.constant 0 : i32
    %c0_i32_1 = arith.constant 0 : i32
    return %c0_i32, %c0_i32_0 : i32, i32
  }
  func.func @transform_8(%arg0: i32) -> (i32, i32) {
    %c0_i32 = arith.constant 0 : i32
    %c0_i32_0 = arith.constant 0 : i32
    return %c0_i32, %arg0 : i32, i32
  }
}

</mosaic_0001>

<llo_original>
// kernel: _lambda_.1
$region0: #{_lambda_.1}
  #allocation0 [shape = 'u32[]', space=smem, size = 0x4, offset = 0x4, fixed_abs, tag = 'smem constant byte address 0x4 - core index']
  #allocation1 [shape = 'u32[144,128]{1,0:T(1,128)}', space=vmem, size = 0x12000, scoped, tag = 'internal scratch']
  #allocation2 [shape = 'f32[72,512]{1,0:T(8,128)}', space=vmem, size = 0x24000, scoped, tag = 'scratch operand']
  #allocation3 [shape = 'bf16[288,512]{1,0:T(16,128)(2,1)}', space=vmem, size = 0x48000, scoped, tag = 'scratch operand']
  #allocation4 [shape = 'f32[32,512]{1,0:T(8,128)}', space=vmem, size = 0x10000, scoped, tag = 'scratch operand']
  #allocation5 [shape = 'f32[32,512]{1,0:T(8,128)}', space=vmem, size = 0x10000, scoped, tag = 'scratch operand']
  %s0 = inlined_call_operand.vmem [shape: f32[8,512], index: 0, kind: input, shape index: {}]
  %s1 = inlined_call_operand.vmem [shape: f32[9,512], index: 1, kind: input, shape index: {}]
  %s2 = inlined_call_operand.vmem [shape: f32[32,72], index: 2, kind: input, shape index: {}]
  %s3 = inlined_call_operand.vmem [shape: f32[32,1], index: 3, kind: input, shape index: {}]
  %s4 = inlined_call_operand.vmem [shape: bf16[3,16,32], index: 4, kind: input, shape index: {}]
  %s5 = inlined_call_operand.vmem [shape: f32[3,9,16,1], index: 5, kind: input, shape index: {}]
  %s6 = inlined_call_operand.vmem [shape: bf16[4,288], index: 6, kind: input, shape index: {}]
  %s7 = inlined_call_operand.vmem [shape: f32[4,1], index: 7, kind: input, shape index: {}]
  %s8 = inlined_call_operand.vmem [shape: f32[4,512], index: 8, kind: output, shape index: {}]
  %s9 = sld [smem:[#allocation0]]
  $region42: #{_lambda_.1} parent=0
    _
  %s11 = ssub.s32 1, %s9
  %s12 = scalar_select 0, %s11, %s9
  // Predicated region
  $region2: #{_lambda_.1} parent=0 // pred_check
    _
  $region3: #{_lambda_.1} parent=0 // pred_check_branch
    %14 = sbr.rel (0) target = $region5
  $region4: #{_lambda_.1} parent=0 // pred_region
    _
  $region5: #{_lambda_.1} parent=0 // pred_fallthru
    _
  // Predicated region
  $region6: #{_lambda_.1} parent=0 // pred_check
    _
  $region7: #{_lambda_.1} parent=0 // pred_check_branch
    %16 = sbr.rel (0) target = $region9
  $region8: #{_lambda_.1} parent=0 // pred_region
    _
  $region9: #{_lambda_.1} parent=0 // pred_fallthru
    _
  // Predicated region
  $region10: #{_lambda_.1} parent=0 // pred_check
    _
  $region11: #{_lambda_.1} parent=0 // pred_check_branch
    %18 = sbr.rel (0) target = $region13
  $region12: #{_lambda_.1} parent=0 // pred_region
    _
  $region13: #{_lambda_.1} parent=0 // pred_fallthru
    _
  // Predicated region
  $region14: #{_lambda_.1} parent=0 // pred_check
    _
  $region15: #{_lambda_.1} parent=0 // pred_check_branch
    %20 = sbr.rel (0) target = $region17
  $region16: #{_lambda_.1} parent=0 // pred_region
    _
  $region17: #{_lambda_.1} parent=0 // pred_fallthru
    _
  // Predicated region
  $region18: #{_lambda_.1} parent=0 // pred_check
    _
  $region19: #{_lambda_.1} parent=0 // pred_check_branch
    %22 = sbr.rel (0) target = $region21
  $region20: #{_lambda_.1} parent=0 // pred_region
    _
  $region21: #{_lambda_.1} parent=0 // pred_fallthru
    _
  // Predicated region
  $region22: #{_lambda_.1} parent=0 // pred_check
    _
  $region23: #{_lambda_.1} parent=0 // pred_check_branch
    %24 = sbr.rel (0) target = $region25
  $region24: #{_lambda_.1} parent=0 // pred_region
    _
  $region25: #{_lambda_.1} parent=0 // pred_fallthru
    _
  // Predicated region
  $region26: #{_lambda_.1} parent=0 // pred_check
    _
  $region27: #{_lambda_.1} parent=0 // pred_check_branch
    %26 = sbr.rel (0) target = $region29
  $region28: #{_lambda_.1} parent=0 // pred_region
    _
  $region29: #{_lambda_.1} parent=0 // pred_fallthru
    _
  // Predicated region
  $region30: #{_lambda_.1} parent=0 // pred_check
    _
  $region31: #{_lambda_.1} parent=0 // pred_check_branch
    %28 = sbr.rel (0) target = $region33
  $region32: #{_lambda_.1} parent=0 // pred_region
    _
  $region33: #{_lambda_.1} parent=0 // pred_fallthru
    _
  %v30 = vld [vmem:[%s0] sm:$0xff]
  %v31 = vld [vmem:[%s0 + $0x8] sm:$0xff]
  %v32 = vld [vmem:[%s0 + $0x10] sm:$0xff]
  %v33 = vld [vmem:[%s0 + $0x18] sm:$0xff]
  %34 = vrot.lane.b32.xlu0 %v30, 17
  %v35 = vpop.permute.xlu0 %34
  %36 = vrot.lane.b32.xlu0 %v31, 17
  %v37 = vpop.permute.xlu0 %36
  %38 = vrot.lane.b32.xlu0 %v32, 17
  %v39 = vpop.permute.xlu0 %38
  %40 = vrot.lane.b32.xlu0 %v33, 17
  %v41 = vpop.permute.xlu0 %40
  %v42 = vlaneseq
  %v43 = vand.u32 %v42, 127
  %vm44 = vcmp.lt.s32.totalorder %v43, 17
  %v45 = vsel %vm44, %v39, %v41
  %v46 = vsel %vm44, %v37, %v39
  %v47 = vsel %vm44, %v35, %v37
  %v48 = vsel %vm44, %v41, %v35
  %v49 = vld [vmem:[%s1] ss:$8 sm:$0xf]
  %v51 = vlaneseq
  %v52 = vshrl.u32 %v51, 7
  %v53 = vsub.s32 0, %v52
  %v54 = vrot.slane %v49, %v53
  %v55 = vlaneseq
  %v56 = vshrl.u32 %v55, 7
  %v57 = vsub.s32 1, %v56
  %v58 = vrot.slane %v49, %v57
  %v59 = vlaneseq
  %v60 = vshrl.u32 %v59, 7
  %v61 = vsub.s32 2, %v60
  %v62 = vrot.slane %v49, %v61
  %v63 = vlaneseq
  %v64 = vshrl.u32 %v63, 7
  %v65 = vsub.s32 3, %v64
  %v66 = vrot.slane %v49, %v65
  %v71 = vmul.f32 %v48, %v54
  %v72 = vmul.f32 %v47, %v58
  %v73 = vmul.f32 %v46, %v62
  %v74 = vmul.f32 %v45, %v66
  %75 = vst [vmem:[#allocation2] sm:$0xff] %v71
  %76 = vst [vmem:[#allocation2 + $0x8] sm:$0xff] %v72
  %77 = vst [vmem:[#allocation2 + $0x10] sm:$0xff] %v73
  %78 = vst [vmem:[#allocation2 + $0x18] sm:$0xff] %v74
  %79 = vrot.lane.b32.xlu0 %v30, 16
  %v80 = vpop.permute.xlu0 %79
  %81 = vrot.lane.b32.xlu0 %v31, 16
  %v82 = vpop.permute.xlu0 %81
  %83 = vrot.lane.b32.xlu0 %v32, 16
  %v84 = vpop.permute.xlu0 %83
  %85 = vrot.lane.b32.xlu0 %v33, 16
  %v86 = vpop.permute.xlu0 %85
  %vm87 = vcmp.lt.s32.totalorder %v43, 16
  %v88 = vsel %vm87, %v84, %v86
  %v89 = vsel %vm87, %v82, %v84
  %v90 = vsel %vm87, %v80, %v82
  %v91 = vsel %vm87, %v86, %v80
  %s92 = scalar_lea.vmem %s1, 1
  %v93 = vld [vmem:[%s92] ss:$8 sm:$0xf]
  %v95 = vlaneseq
  %v96 = vshrl.u32 %v95, 7
  %v97 = vsub.s32 0, %v96
  %v98 = vrot.slane %v93, %v97
  %v99 = vlaneseq
  %v100 = vshrl.u32 %v99, 7
  %v101 = vsub.s32 1, %v100
  %v102 = vrot.slane %v93, %v101
  %v103 = vlaneseq
  %v104 = vshrl.u32 %v103, 7
  %v105 = vsub.s32 2, %v104
  %v106 = vrot.slane %v93, %v105
  %v107 = vlaneseq
  %v108 = vshrl.u32 %v107, 7
  %v109 = vsub.s32 3, %v108
  %v110 = vrot.slane %v93, %v109
  %v115 = vmul.f32 %v91, %v98
  %v116 = vmul.f32 %v90, %v102
  %v117 = vmul.f32 %v89, %v106
  %v118 = vmul.f32 %v88, %v110
  %119 = vst [vmem:[#allocation2 + $0x20] sm:$0xff] %v115
  %120 = vst [vmem:[#allocation2 + $0x28] sm:$0xff] %v116
  %121 = vst [vmem:[#allocation2 + $0x30] sm:$0xff] %v117
  %122 = vst [vmem:[#allocation2 + $0x38] sm:$0xff] %v118
  %123 = vrot.lane.b32.xlu0 %v30, 15
  %v124 = vpop.permute.xlu0 %123
  %125 = vrot.lane.b32.xlu0 %v31, 15
  %v126 = vpop.permute.xlu0 %125
  %127 = vrot.lane.b32.xlu0 %v32, 15
  %v128 = vpop.permute.xlu0 %127
  %129 = vrot.lane.b32.xlu0 %v33, 15
  %v130 = vpop.permute.xlu0 %129
  %vm131 = vcmp.lt.s32.totalorder %v43, 15
  %v132 = vsel %vm131, %v128, %v130
  %v133 = vsel %vm131, %v126, %v128
  %v134 = vsel %vm131, %v124, %v126
  %v135 = vsel %vm131, %v130, %v124
  %s136 = scalar_lea.vmem %s1, 2
  %v137 = vld [vmem:[%s136] ss:$8 sm:$0xf]
  %v139 = vlaneseq
  %v140 = vshrl.u32 %v139, 7
  %v141 = vsub.s32 0, %v140
  %v142 = vrot.slane %v137, %v141
  %v143 = vlaneseq
  %v144 = vshrl.u32 %v143, 7
  %v145 = vsub.s32 1, %v144
  %v146 = vrot.slane %v137, %v145
  %v147 = vlaneseq
  %v148 = vshrl.u32 %v147, 7
  %v149 = vsub.s32 2, %v148
  %v150 = vrot.slane %v137, %v149
  %v151 = vlaneseq
  %v152 = vshrl.u32 %v151, 7
  %v153 = vsub.s32 3, %v152
  %v154 = vrot.slane %v137, %v153
  %v159 = vmul.f32 %v135, %v142
  %v160 = vmul.f32 %v134, %v146
  %v161 = vmul.f32 %v133, %v150
  %v162 = vmul.f32 %v132, %v154
  %163 = vst [vmem:[#allocation2 + $0x40] sm:$0xff] %v159
  %164 = vst [vmem:[#allocation2 + $0x48] sm:$0xff] %v160
  %165 = vst [vmem:[#allocation2 + $0x50] sm:$0xff] %v161
  %166 = vst [vmem:[#allocation2 + $0x58] sm:$0xff] %v162
  %167 = vrot.lane.b32.xlu0 %v30, 1
  %v168 = vpop.permute.xlu0 %167
  %169 = vrot.lane.b32.xlu0 %v31, 1
  %v170 = vpop.permute.xlu0 %169
  %171 = vrot.lane.b32.xlu0 %v32, 1
  %v172 = vpop.permute.xlu0 %171
  %173 = vrot.lane.b32.xlu0 %v33, 1
  %v174 = vpop.permute.xlu0 %173
  %vm175 = vcmp.lt.s32.totalorder %v43, 1
  %v176 = vsel %vm175, %v172, %v174
  %v177 = vsel %vm175, %v170, %v172
  %v178 = vsel %vm175, %v168, %v170
  %v179 = vsel %vm175, %v174, %v168
  %s180 = scalar_lea.vmem %s1, 3
  %v181 = vld [vmem:[%s180] ss:$8 sm:$0xf]
  %v183 = vlaneseq
  %v184 = vshrl.u32 %v183, 7
  %v185 = vsub.s32 0, %v184
  %v186 = vrot.slane %v181, %v185
  %v187 = vlaneseq
  %v188 = vshrl.u32 %v187, 7
  %v189 = vsub.s32 1, %v188
  %v190 = vrot.slane %v181, %v189
  %v191 = vlaneseq
  %v192 = vshrl.u32 %v191, 7
  %v193 = vsub.s32 2, %v192
  %v194 = vrot.slane %v181, %v193
  %v195 = vlaneseq
  %v196 = vshrl.u32 %v195, 7
  %v197 = vsub.s32 3, %v196
  %v198 = vrot.slane %v181, %v197
  %v203 = vmul.f32 %v179, %v186
  %v204 = vmul.f32 %v178, %v190
  %v205 = vmul.f32 %v177, %v194
  %v206 = vmul.f32 %v176, %v198
  %207 = vst [vmem:[#allocation2 + $0x60] sm:$0xff] %v203
  %208 = vst [vmem:[#allocation2 + $0x68] sm:$0xff] %v204
  %209 = vst [vmem:[#allocation2 + $0x70] sm:$0xff] %v205
  %210 = vst [vmem:[#allocation2 + $0x78] sm:$0xff] %v206
  %211 = vst [vmem:[#allocation2 + $0x80] sm:$0xff] %v30
  %212 = vst [vmem:[#allocation2 + $0x88] sm:$0xff] %v31
  %213 = vst [vmem:[#allocation2 + $0x90] sm:$0xff] %v32
  %214 = vst [vmem:[#allocation2 + $0x98] sm:$0xff] %v33
  %215 = vrot.lane.b32.xlu0 %v30, 127
  %v216 = vpop.permute.xlu0 %215
  %217 = vrot.lane.b32.xlu0 %v31, 127
  %v218 = vpop.permute.xlu0 %217
  %219 = vrot.lane.b32.xlu0 %v32, 127
  %v220 = vpop.permute.xlu0 %219
  %221 = vrot.lane.b32.xlu0 %v33, 127
  %v222 = vpop.permute.xlu0 %221
  %vm223 = vcmp.lt.s32.totalorder %v43, 127
  %v224 = vsel %vm223, %v220, %v222
  %v225 = vsel %vm223, %v218, %v220
  %v226 = vsel %vm223, %v216, %v218
  %v227 = vsel %vm223, %v222, %v216
  %s228 = scalar_lea.vmem %s1, 5
  %v229 = vld [vmem:[%s228] ss:$8 sm:$0xf]
  %v231 = vlaneseq
  %v232 = vshrl.u32 %v231, 7
  %v233 = vsub.s32 0, %v232
  %v234 = vrot.slane %v229, %v233
  %v235 = vlaneseq
  %v236 = vshrl.u32 %v235, 7
  %v237 = vsub.s32 1, %v236
  %v238 = vrot.slane %v229, %v237
  %v239 = vlaneseq
  %v240 = vshrl.u32 %v239, 7
  %v241 = vsub.s32 2, %v240
  %v242 = vrot.slane %v229, %v241
  %v243 = vlaneseq
  %v244 = vshrl.u32 %v243, 7
  %v245 = vsub.s32 3, %v244
  %v246 = vrot.slane %v229, %v245
  %v251 = vmul.f32 %v226, %v234
  %v252 = vmul.f32 %v225, %v238
  %v253 = vmul.f32 %v224, %v242
  %v254 = vmul.f32 %v227, %v246
  %255 = vst [vmem:[#allocation2 + $0xa0] sm:$0xff] %v251
  %256 = vst [vmem:[#allocation2 + $0xa8] sm:$0xff] %v252
  %257 = vst [vmem:[#allocation2 + $0xb0] sm:$0xff] %v253
  %258 = vst [vmem:[#allocation2 + $0xb8] sm:$0xff] %v254
  %259 = vrot.lane.b32.xlu0 %v30, 113
  %v260 = vpop.permute.xlu0 %259
  %261 = vrot.lane.b32.xlu0 %v31, 113
  %v262 = vpop.permute.xlu0 %261
  %263 = vrot.lane.b32.xlu0 %v32, 113
  %v264 = vpop.permute.xlu0 %263
  %265 = vrot.lane.b32.xlu0 %v33, 113
  %v266 = vpop.permute.xlu0 %265
  %vm267 = vcmp.lt.s32.totalorder %v43, 113
  %v268 = vsel %vm267, %v264, %v266
  %v269 = vsel %vm267, %v262, %v264
  %v270 = vsel %vm267, %v260, %v262
  %v271 = vsel %vm267, %v266, %v260
  %s272 = scalar_lea.vmem %s1, 6
  %v273 = vld [vmem:[%s272] ss:$8 sm:$0xf]
  %v275 = vlaneseq
  %v276 = vshrl.u32 %v275, 7
  %v277 = vsub.s32 0, %v276
  %v278 = vrot.slane %v273, %v277
  %v279 = vlaneseq
  %v280 = vshrl.u32 %v279, 7
  %v281 = vsub.s32 1, %v280
  %v282 = vrot.slane %v273, %v281
  %v283 = vlaneseq
  %v284 = vshrl.u32 %v283, 7
  %v285 = vsub.s32 2, %v284
  %v286 = vrot.slane %v273, %v285
  %v287 = vlaneseq
  %v288 = vshrl.u32 %v287, 7
  %v289 = vsub.s32 3, %v288
  %v290 = vrot.slane %v273, %v289
  %v295 = vmul.f32 %v270, %v278
  %v296 = vmul.f32 %v269, %v282
  %v297 = vmul.f32 %v268, %v286
  %v298 = vmul.f32 %v271, %v290
  %299 = vst [vmem:[#allocation2 + $0xc0] sm:$0xff] %v295
  %300 = vst [vmem:[#allocation2 + $0xc8] sm:$0xff] %v296
  %301 = vst [vmem:[#allocation2 + $0xd0] sm:$0xff] %v297
  %302 = vst [vmem:[#allocation2 + $0xd8] sm:$0xff] %v298
  %303 = vrot.lane.b32.xlu0 %v30, 112
  %v304 = vpop.permute.xlu0 %303
  %305 = vrot.lane.b32.xlu0 %v31, 112
  %v306 = vpop.permute.xlu0 %305
  %307 = vrot.lane.b32.xlu0 %v32, 112
  %v308 = vpop.permute.xlu0 %307
  %309 = vrot.lane.b32.xlu0 %v33, 112
  %v310 = vpop.permute.xlu0 %309
  %vm311 = vcmp.lt.s32.totalorder %v43, 112
  %v312 = vsel %vm311, %v308, %v310
  %v313 = vsel %vm311, %v306, %v308
  %v314 = vsel %vm311, %v304, %v306
  %v315 = vsel %vm311, %v310, %v304
  %s316 = scalar_lea.vmem %s1, 7
  %v317 = vld [vmem:[%s316] ss:$8 sm:$0xf]
  %v319 = vlaneseq
  %v320 = vshrl.u32 %v319, 7
  %v321 = vsub.s32 0, %v320
  %v322 = vrot.slane %v317, %v321
  %v323 = vlaneseq
  %v324 = vshrl.u32 %v323, 7
  %v325 = vsub.s32 1, %v324
  %v326 = vrot.slane %v317, %v325
  %v327 = vlaneseq
  %v328 = vshrl.u32 %v327, 7
  %v329 = vsub.s32 2, %v328
  %v330 = vrot.slane %v317, %v329
  %v331 = vlaneseq
  %v332 = vshrl.u32 %v331, 7
  %v333 = vsub.s32 3, %v332
  %v334 = vrot.slane %v317, %v333
  %v339 = vmul.f32 %v314, %v322
  %v340 = vmul.f32 %v313, %v326
  %v341 = vmul.f32 %v312, %v330
  %v342 = vmul.f32 %v315, %v334
  %343 = vst [vmem:[#allocation2 + $0xe0] sm:$0xff] %v339
  %344 = vst [vmem:[#allocation2 + $0xe8] sm:$0xff] %v340
  %345 = vst [vmem:[#allocation2 + $0xf0] sm:$0xff] %v341
  %346 = vst [vmem:[#allocation2 + $0xf8] sm:$0xff] %v342
  %347 = vrot.lane.b32.xlu0 %v30, 111
  %v348 = vpop.permute.xlu0 %347
  %349 = vrot.lane.b32.xlu0 %v31, 111
  %v350 = vpop.permute.xlu0 %349
  %351 = vrot.lane.b32.xlu0 %v32, 111
  %v352 = vpop.permute.xlu0 %351
  %353 = vrot.lane.b32.xlu0 %v33, 111
  %v354 = vpop.permute.xlu0 %353
  %vm355 = vcmp.lt.s32.totalorder %v43, 111
  %v356 = vsel %vm355, %v352, %v354
  %v357 = vsel %vm355, %v350, %v352
  %v358 = vsel %vm355, %v348, %v350
  %v359 = vsel %vm355, %v354, %v348
  %s360 = scalar_lea.vmem %s1, 32
  %v361 = vld [vmem:[%s360] ss:$8 sm:$0xf]
  %v363 = vlaneseq
  %v364 = vshrl.u32 %v363, 7
  %v365 = vsub.s32 0, %v364
  %v366 = vrot.slane %v361, %v365
  %v367 = vlaneseq
  %v368 = vshrl.u32 %v367, 7
  %v369 = vsub.s32 1, %v368
  %v370 = vrot.slane %v361, %v369
  %v371 = vlaneseq
  %v372 = vshrl.u32 %v371, 7
  %v373 = vsub.s32 2, %v372
  %v374 = vrot.slane %v361, %v373
  %v375 = vlaneseq
  %v376 = vshrl.u32 %v375, 7
  %v377 = vsub.s32 3, %v376
  %v378 = vrot.slane %v361, %v377
  %v383 = vmul.f32 %v358, %v366
  %v384 = vmul.f32 %v357, %v370
  %v385 = vmul.f32 %v356, %v374
  %v386 = vmul.f32 %v359, %v378
  %387 = vst [vmem:[#allocation2 + $0x100] sm:$0xff] %v383
  %388 = vst [vmem:[#allocation2 + $0x108] sm:$0xff] %v384
  %389 = vst [vmem:[#allocation2 + $0x110] sm:$0xff] %v385
  %390 = vst [vmem:[#allocation2 + $0x118] sm:$0xff] %v386
  %v391 = vld [vmem:[%s2] sm:$0xff]
  %v392 = vld [vmem:[%s2 + $0x8] sm:$0xff]
  %v393 = vld [vmem:[%s2 + $0x10] sm:$0xff]
  %v394 = vld [vmem:[%s2 + $0x18] sm:$0xff]
  %v395 = vld [vmem:[#allocation2] sm:$0xff]
  %v396 = vld [vmem:[#allocation2 + $0x8] sm:$0xff]
  %v397 = vld [vmem:[#allocation2 + $0x10] sm:$0xff]
  %v398 = vld [vmem:[#allocation2 + $0x18] sm:$0xff]
  %v399 = vld [vmem:[#allocation2 + $0x20] sm:$0xff]
  %v400 = vld [vmem:[#allocation2 + $0x28] sm:$0xff]
  %v401 = vld [vmem:[#allocation2 + $0x30] sm:$0xff]
  %v402 = vld [vmem:[#allocation2 + $0x38] sm:$0xff]
  %v403 = vld [vmem:[#allocation2 + $0x40] sm:$0xff]
  %v404 = vld [vmem:[#allocation2 + $0x48] sm:$0xff]
  %v405 = vld [vmem:[#allocation2 + $0x50] sm:$0xff]
  %v406 = vld [vmem:[#allocation2 + $0x58] sm:$0xff]
  %v407 = vld [vmem:[#allocation2 + $0x60] sm:$0xff]
  %v408 = vld [vmem:[#allocation2 + $0x68] sm:$0xff]
  %v409 = vld [vmem:[#allocation2 + $0x70] sm:$0xff]
  %v410 = vld [vmem:[#allocation2 + $0x78] sm:$0xff]
  %v411 = vld [vmem:[#allocation2 + $0x80] sm:$0xff]
  %v412 = vld [vmem:[#allocation2 + $0x88] sm:$0xff]
  %v413 = vld [vmem:[#allocation2 + $0x90] sm:$0xff]
  %v414 = vld [vmem:[#allocation2 + $0x98] sm:$0xff]
  %v415 = vld [vmem:[#allocation2 + $0xa0] sm:$0xff]
  %v416 = vld [vmem:[#allocation2 + $0xa8] sm:$0xff]
  %v417 = vld [vmem:[#allocation2 + $0xb0] sm:$0xff]
  %v418 = vld [vmem:[#allocation2 + $0xb8] sm:$0xff]
  %v419 = vld [vmem:[#allocation2 + $0xc0] sm:$0xff]
  %v420 = vld [vmem:[#allocation2 + $0xc8] sm:$0xff]
  %v421 = vld [vmem:[#allocation2 + $0xd0] sm:$0xff]
  %v422 = vld [vmem:[#allocation2 + $0xd8] sm:$0xff]
  %v423 = vld [vmem:[#allocation2 + $0xe0] sm:$0xff]
  %v424 = vld [vmem:[#allocation2 + $0xe8] sm:$0xff]
  %v425 = vld [vmem:[#allocation2 + $0xf0] sm:$0xff]
  %v426 = vld [vmem:[#allocation2 + $0xf8] sm:$0xff]
  %v427 = vld [vmem:[#allocation2 + $0x100] sm:$0xff]
  %v428 = vld [vmem:[#allocation2 + $0x108] sm:$0xff]
  %v429 = vld [vmem:[#allocation2 + $0x110] sm:$0xff]
  %v430 = vld [vmem:[#allocation2 + $0x118] sm:$0xff]
  %v431 = vld [vmem:[%s3] sm:$0xff]
  %v432 = vld [vmem:[%s3 + $0x8] sm:$0xff]
  %v433 = vld [vmem:[%s3 + $0x10] sm:$0xff]
  %v434 = vld [vmem:[%s3 + $0x18] sm:$0xff]
  %436 = vset.pattern.permute.xlu0 0
  %437 = vperm.xlu0 %436, %v431
  %v438 = vpop.permute.xlu0 %437
  %441 = vset.pattern.permute.xlu0 0
  %442 = vperm.xlu0 %441, %v432
  %v443 = vpop.permute.xlu0 %442
  %446 = vset.pattern.permute.xlu0 0
  %447 = vperm.xlu0 %446, %v433
  %v448 = vpop.permute.xlu0 %447
  %451 = vset.pattern.permute.xlu0 0
  %452 = vperm.xlu0 %451, %v434
  %v453 = vpop.permute.xlu0 %452
  %vm455 = vcmask 588800
  %v457 = vsel %vm455, %v391, 0
  %v460 = vsel %vm455, %v392, 0
  %v463 = vsel %vm455, %v393, 0
  %v466 = vsel %vm455, %v394, 0
  %468 = vmatprep.subr.mxu0 %v396
  %469 = vmatpush1.msra.mxu0 %v395
  %470 = vmatprep.subr.mxu0 %v400
  %471 = vmatpush1.msra.mxu0 %v399
  %472 = vmatprep.subr.mxu0 %v404
  %473 = vmatpush1.msra.mxu0 %v403
  %474 = vmatprep.subr.mxu0 %v408
  %475 = vmatpush1.msra.mxu0 %v407
  %476 = vmatprep.subr.mxu0 %v412
  %477 = vmatpush1.msra.mxu0 %v411
  %478 = vmatprep.subr.mxu0 %v416
  %479 = vmatpush1.msra.mxu0 %v415
  %480 = vmatprep.subr.mxu0 %v420
  %481 = vmatpush1.msra.mxu0 %v419
  %482 = vmatprep.subr.mxu0 %v424
  %483 = vmatpush1.msra.mxu0 %v423
  %484 = vmatprep.subr.mxu0 %v428
  %485 = vmatpush1.msra.mxu0 %v427
  %486 = vmatprep.subr.mxu0 0.0
  %487 = vmatpush1.msra.mxu0 0.0
  %488 = vmatprep.subr.mxu0 0.0
  %489 = vmatpush1.msra.mxu0 0.0
  %490 = vmatprep.subr.mxu0 0.0
  %491 = vmatpush1.msra.mxu0 0.0
  %492 = vmatprep.subr.mxu0 0.0
  %493 = vmatpush1.msra.mxu0 0.0
  %494 = vmatprep.subr.mxu0 0.0
  %495 = vmatpush1.msra.mxu0 0.0
  %496 = vmatprep.subr.mxu0 0.0
  %497 = vmatpush1.msra.mxu0 0.0
  %498 = vmatprep.subr.mxu0 0.0
  %499 = vmatpush1.msra.mxu0 0.0
  %500 = vmatprep.subr.mxu0 0.0
  %501 = vmatpush1.msra.mxu0 0.0
  %502 = vmatprep.subr.mxu0 0.0
  %503 = vmatpush1.msra.mxu0 0.0
  %504 = vmatprep.subr.mxu0 0.0
  %505 = vmatpush1.msra.mxu0 0.0
  %506 = vmatprep.subr.mxu0 0.0
  %507 = vmatpush1.msra.mxu0 0.0
  %508 = vmatprep.subr.mxu0 0.0
  %509 = vmatpush1.msra.mxu0 0.0
  %510 = vmatprep.subr.mxu0 0.0
  %511 = vmatpush1.msra.mxu0 0.0
  %512 = vmatprep.subr.mxu0 0.0
  %513 = vmatpush1.msra.mxu0 0.0
  %514 = vmatprep.subr.mxu0 0.0
  %515 = vmatpush1.msra.mxu0 0.0
  %516 = vmatprep.subr.mxu0 0.0
  %517 = vmatpush1.msra.mxu0 0.0
  %518 = vmatprep.subr.mxu0 0.0
  %519 = vmatpush1.msra.mxu0 0.0
  %520 = vmatprep.subr.mxu0 0.0
  %521 = vmatpush1.msra.mxu0 0.0
  %522 = vmatprep.subr.mxu0 0.0
  %523 = vmatpush1.msra.mxu0 0.0
  %524 = vmatprep.subr.mxu0 0.0
  %525 = vmatpush1.msra.mxu0 0.0
  %526 = vmatprep.subr.mxu0 0.0
  %527 = vmatpush1.msra.mxu0 0.0
  %528 = vmatprep.subr.mxu0 0.0
  %529 = vmatpush1.msra.mxu0 0.0
  %530 = vmatprep.subr.mxu0 0.0
  %531 = vmatpush1.msra.mxu0 0.0
  %532 = vmatprep.mubr.f32.mxu0 0.0
  %533 = vmatmul.mubr.f32.gmra.mrb[0].mxu0 %v457
  %v534 = vpop.f32.mrb[0].mxu0
  %v535 = vadd.f32 %v438, %v534
  %v536 = vpop.f32.mrb[0].mxu0
  %v537 = vadd.f32 %v438, %v536
  %538 = vmatprep.mubr.f32.mxu0 0.0
  %539 = vmatmul.mubr.f32.gmra.mrb[0].mxu0 %v460
  %v540 = vpop.f32.mrb[0].mxu0
  %v541 = vadd.f32 %v443, %v540
  %v542 = vpop.f32.mrb[0].mxu0
  %v543 = vadd.f32 %v443, %v542
  %544 = vmatprep.mubr.f32.mxu0 0.0
  %545 = vmatmul.mubr.f32.gmra.mrb[0].mxu0 %v463
  %v546 = vpop.f32.mrb[0].mxu0
  %v547 = vadd.f32 %v448, %v546
  %v548 = vpop.f32.mrb[0].mxu0
  %v549 = vadd.f32 %v448, %v548
  %550 = vmatprep.mubr.f32.mxu0 0.0
  %551 = vmatmul.mubr.f32.gmra.mrb[0].mxu0 %v466
  %v552 = vpop.f32.mrb[0].mxu0
  %v553 = vadd.f32 %v453, %v552
  %v554 = vpop.f32.mrb[0].mxu0
  %v555 = vadd.f32 %v453, %v554
  %556 = vdwg.mxu0
  %557 = vmatprep.subr.mxu0 %v398
  %558 = vmatpush1.msra.mxu0 %v397
  %559 = vmatprep.subr.mxu0 %v402
  %560 = vmatpush1.msra.mxu0 %v401
  %561 = vmatprep.subr.mxu0 %v406
  %562 = vmatpush1.msra.mxu0 %v405
  %563 = vmatprep.subr.mxu0 %v410
  %564 = vmatpush1.msra.mxu0 %v409
  %565 = vmatprep.subr.mxu0 %v414
  %566 = vmatpush1.msra.mxu0 %v413
  %567 = vmatprep.subr.mxu0 %v418
  %568 = vmatpush1.msra.mxu0 %v417
  %569 = vmatprep.subr.mxu0 %v422
  %570 = vmatpush1.msra.mxu0 %v421
  %571 = vmatprep.subr.mxu0 %v426
  %572 = vmatpush1.msra.mxu0 %v425
  %573 = vmatprep.subr.mxu0 %v430
  %574 = vmatpush1.msra.mxu0 %v429
  %575 = vmatprep.subr.mxu0 0.0
  %576 = vmatpush1.msra.mxu0 0.0
  %577 = vmatprep.subr.mxu0 0.0
  %578 = vmatpush1.msra.mxu0 0.0
  %579 = vmatprep.subr.mxu0 0.0
  %580 = vmatpush1.msra.mxu0 0.0
  %581 = vmatprep.subr.mxu0 0.0
  %582 = vmatpush1.msra.mxu0 0.0
  %583 = vmatprep.subr.mxu0 0.0
  %584 = vmatpush1.msra.mxu0 0.0
  %585 = vmatprep.subr.mxu0 0.0
  %586 = vmatpush1.msra.mxu0 0.0
  %587 = vmatprep.subr.mxu0 0.0
  %588 = vmatpush1.msra.mxu0 0.0
  %589 = vmatprep.subr.mxu0 0.0
  %590 = vmatpush1.msra.mxu0 0.0
  %591 = vmatprep.subr.mxu0 0.0
  %592 = vmatpush1.msra.mxu0 0.0
  %593 = vmatprep.subr.mxu0 0.0
  %594 = vmatpush1.msra.mxu0 0.0
  %595 = vmatprep.subr.mxu0 0.0
  %596 = vmatpush1.msra.mxu0 0.0
  %597 = vmatprep.subr.mxu0 0.0
  %598 = vmatpush1.msra.mxu0 0.0
  %599 = vmatprep.subr.mxu0 0.0
  %600 = vmatpush1.msra.mxu0 0.0
  %601 = vmatprep.subr.mxu0 0.0
  %602 = vmatpush1.msra.mxu0 0.0
  %603 = vmatprep.subr.mxu0 0.0
  %604 = vmatpush1.msra.mxu0 0.0
  %605 = vmatprep.subr.mxu0 0.0
  %606 = vmatpush1.msra.mxu0 0.0
  %607 = vmatprep.subr.mxu0 0.0
  %608 = vmatpush1.msra.mxu0 0.0
  %609 = vmatprep.subr.mxu0 0.0
  %610 = vmatpush1.msra.mxu0 0.0
  %611 = vmatprep.subr.mxu0 0.0
  %612 = vmatpush1.msra.mxu0 0.0
  %613 = vmatprep.subr.mxu0 0.0
  %614 = vmatpush1.msra.mxu0 0.0
  %615 = vmatprep.subr.mxu0 0.0
  %616 = vmatpush1.msra.mxu0 0.0
  %617 = vmatprep.subr.mxu0 0.0
  %618 = vmatpush1.msra.mxu0 0.0
  %619 = vmatprep.subr.mxu0 0.0
  %620 = vmatpush1.msra.mxu0 0.0
  %621 = vmatprep.mubr.f32.mxu0 0.0
  %622 = vmatmul.mubr.f32.gmra.mrb[0].mxu0 %v457
  %v623 = vpop.f32.mrb[0].mxu0
  %v624 = vadd.f32 %v438, %v623
  %v625 = vpop.f32.mrb[0].mxu0
  %v626 = vadd.f32 %v438, %v625
  %627 = vmatprep.mubr.f32.mxu0 0.0
  %628 = vmatmul.mubr.f32.gmra.mrb[0].mxu0 %v460
  %v629 = vpop.f32.mrb[0].mxu0
  %v630 = vadd.f32 %v443, %v629
  %v631 = vpop.f32.mrb[0].mxu0
  %v632 = vadd.f32 %v443, %v631
  %633 = vmatprep.mubr.f32.mxu0 0.0
  %634 = vmatmul.mubr.f32.gmra.mrb[0].mxu0 %v463
  %v635 = vpop.f32.mrb[0].mxu0
  %v636 = vadd.f32 %v448, %v635
  %v637 = vpop.f32.mrb[0].mxu0
  %v638 = vadd.f32 %v448, %v637
  %639 = vmatprep.mubr.f32.mxu0 0.0
  %640 = vmatmul.mubr.f32.gmra.mrb[0].mxu0 %v466
  %v641 = vpop.f32.mrb[0].mxu0
  %v642 = vadd.f32 %v453, %v641
  %v643 = vpop.f32.mrb[0].mxu0
  %v644 = vadd.f32 %v453, %v643
  %645 = vdwg.mxu0
  %646 = vst [vmem:[#allocation4] sm:$0xff] %v535
  %647 = vst [vmem:[#allocation4 + $0x8] sm:$0xff] %v537
  %648 = vst [vmem:[#allocation4 + $0x10] sm:$0xff] %v624
  %649 = vst [vmem:[#allocation4 + $0x18] sm:$0xff] %v626
  %650 = vst [vmem:[#allocation4 + $0x20] sm:$0xff] %v541
  %651 = vst [vmem:[#allocation4 + $0x28] sm:$0xff] %v543
  %652 = vst [vmem:[#allocation4 + $0x30] sm:$0xff] %v630
  %653 = vst [vmem:[#allocation4 + $0x38] sm:$0xff] %v632
  %654 = vst [vmem:[#allocation4 + $0x40] sm:$0xff] %v547
  %655 = vst [vmem:[#allocation4 + $0x48] sm:$0xff] %v549
  %656 = vst [vmem:[#allocation4 + $0x50] sm:$0xff] %v636
  %657 = vst [vmem:[#allocation4 + $0x58] sm:$0xff] %v638
  %658 = vst [vmem:[#allocation4 + $0x60] sm:$0xff] %v553
  %659 = vst [vmem:[#allocation4 + $0x68] sm:$0xff] %v555
  %660 = vst [vmem:[#allocation4 + $0x70] sm:$0xff] %v642
  %661 = vst [vmem:[#allocation4 + $0x78] sm:$0xff] %v644
  %662 = vst [vmem:[#allocation5] sm:$0xff] %v535
  %663 = vst [vmem:[#allocation5 + $0x8] sm:$0xff] %v537
  %664 = vst [vmem:[#allocation5 + $0x10] sm:$0xff] %v624
  %665 = vst [vmem:[#allocation5 + $0x18] sm:$0xff] %v626
  %666 = vst [vmem:[#allocation5 + $0x20] sm:$0xff] %v541
  %667 = vst [vmem:[#allocation5 + $0x28] sm:$0xff] %v543
  %668 = vst [vmem:[#allocation5 + $0x30] sm:$0xff] %v630
  %669 = vst [vmem:[#allocation5 + $0x38] sm:$0xff] %v632
  %670 = vst [vmem:[#allocation5 + $0x40] sm:$0xff] %v547
  %671 = vst [vmem:[#allocation5 + $0x48] sm:$0xff] %v549
  %672 = vst [vmem:[#allocation5 + $0x50] sm:$0xff] %v636
  %673 = vst [vmem:[#allocation5 + $0x58] sm:$0xff] %v638
  %674 = vst [vmem:[#allocation5 + $0x60] sm:$0xff] %v553
  %675 = vst [vmem:[#allocation5 + $0x68] sm:$0xff] %v555
  %676 = vst [vmem:[#allocation5 + $0x70] sm:$0xff] %v642
  %677 = vst [vmem:[#allocation5 + $0x78] sm:$0xff] %v644
  %v678 = vld [vmem:[#allocation4] sm:$0xff]
  %v679 = vld [vmem:[#allocation4 + $0x8] sm:$0xff]
  %v680 = vld [vmem:[#allocation4 + $0x10] sm:$0xff]
  %v681 = vld [vmem:[#allocation4 + $0x18] sm:$0xff]
  %v682 = vld [vmem:[#allocation4 + $0x20] sm:$0xff]
  %v683 = vld [vmem:[#allocation4 + $0x28] sm:$0xff]
  %v684 = vld [vmem:[#allocation4 + $0x30] sm:$0xff]
  %v685 = vld [vmem:[#allocation4 + $0x38] sm:$0xff]
  %v686 = vld [vmem:[#allocation4 + $0x40] sm:$0xff]
  %v687 = vld [vmem:[#allocation4 + $0x48] sm:$0xff]
  %v688 = vld [vmem:[#allocation4 + $0x50] sm:$0xff]
  %v689 = vld [vmem:[#allocation4 + $0x58] sm:$0xff]
  %v690 = vld [vmem:[#allocation4 + $0x60] sm:$0xff]
  %v691 = vld [vmem:[#allocation4 + $0x68] sm:$0xff]
  %v692 = vld [vmem:[#allocation4 + $0x70] sm:$0xff]
  %v693 = vld [vmem:[#allocation4 + $0x78] sm:$0xff]
  %v694 = vld [vmem:[%s4] sm:$0xf]
  %v695 = vld [vmem:[%s4 + $0x4] sm:$0xf]
  %v696 = vpack.c.bf16 %v682, %v678
  %v697 = vpack.c.bf16 %v683, %v679
  %v698 = vpack.c.bf16 %v684, %v680
  %v699 = vpack.c.bf16 %v685, %v681
  %v700 = vpack.c.bf16 %v690, %v686
  %v701 = vpack.c.bf16 %v691, %v687
  %v702 = vpack.c.bf16 %v692, %v688
  %v703 = vpack.c.bf16 %v693, %v689
  %v706 = vunpack.c.l.b16 %v694
  %v707 = vunpack.c.l.b16 %v695
  %v708 = vpack.c.b16 %v707, %v706
  %vm709 = vcmask 261120
  %v711 = vsel %vm709, %v708, 0
  %713 = vmatprep.subr.bf16.mxu0 %v697
  %714 = vmatpush1.bf16.msra.mxu0 %v696
  %715 = vmatprep.subr.bf16.mxu0 %v701
  %716 = vmatpush1.bf16.msra.mxu0 %v700
  %717 = vmatprep.subr.bf16.mxu0 0
  %718 = vmatpush1.bf16.msra.mxu0 0
  %719 = vmatprep.subr.bf16.mxu0 0
  %720 = vmatpush1.bf16.msra.mxu0 0
  %721 = vmatprep.subr.bf16.mxu0 0
  %722 = vmatpush1.bf16.msra.mxu0 0
  %723 = vmatprep.subr.bf16.mxu0 0
  %724 = vmatpush1.bf16.msra.mxu0 0
  %725 = vmatprep.subr.bf16.mxu0 0
  %726 = vmatpush1.bf16.msra.mxu0 0
  %727 = vmatprep.subr.bf16.mxu0 0
  %728 = vmatpush1.bf16.msra.mxu0 0
  %729 = vmatprep.subr.bf16.mxu0 0
  %730 = vmatpush1.bf16.msra.mxu0 0
  %731 = vmatprep.subr.bf16.mxu0 0
  %732 = vmatpush1.bf16.msra.mxu0 0
  %733 = vmatprep.subr.bf16.mxu0 0
  %734 = vmatpush1.bf16.msra.mxu0 0
  %735 = vmatprep.subr.bf16.mxu0 0
  %736 = vmatpush1.bf16.msra.mxu0 0
  %737 = vmatprep.subr.bf16.mxu0 0
  %738 = vmatpush1.bf16.msra.mxu0 0
  %739 = vmatprep.subr.bf16.mxu0 0
  %740 = vmatpush1.bf16.msra.mxu0 0
  %741 = vmatprep.subr.bf16.mxu0 0
  %742 = vmatpush1.bf16.msra.mxu0 0
  %743 = vmatprep.subr.bf16.mxu0 0
  %744 = vmatpush1.bf16.msra.mxu0 0
  %745 = vmatprep.mubr.bf16.mxu0 0
  %746 = vmatmul.mubr.bf16.gmra.mrb[0].mxu0 %v711
  %v747 = vpop.f32.mrb[0].mxu0
  %v748 = vadd.f32 0.0, %v747
  %v749 = vpop.f32.mrb[0].mxu0
  %v750 = vadd.f32 0.0, %v749
  %v751 = vpop.f32.mrb[0].mxu0
  %v752 = vadd.f32 0.0, %v751
  %v753 = vpop.f32.mrb[0].mxu0
  %v754 = vadd.f32 0.0, %v753
  %755 = vdwg.mxu0
  %756 = vmatprep.subr.bf16.mxu0 %v699
  %757 = vmatpush1.bf16.msra.mxu0 %v698
  %758 = vmatprep.subr.bf16.mxu0 %v703
  %759 = vmatpush1.bf16.msra.mxu0 %v702
  %760 = vmatprep.subr.bf16.mxu0 0
  %761 = vmatpush1.bf16.msra.mxu0 0
  %762 = vmatprep.subr.bf16.mxu0 0
  %763 = vmatpush1.bf16.msra.mxu0 0
  %764 = vmatprep.subr.bf16.mxu0 0
  %765 = vmatpush1.bf16.msra.mxu0 0
  %766 = vmatprep.subr.bf16.mxu0 0
  %767 = vmatpush1.bf16.msra.mxu0 0
  %768 = vmatprep.subr.bf16.mxu0 0
  %769 = vmatpush1.bf16.msra.mxu0 0
  %770 = vmatprep.subr.bf16.mxu0 0
  %771 = vmatpush1.bf16.msra.mxu0 0
  %772 = vmatprep.subr.bf16.mxu0 0
  %773 = vmatpush1.bf16.msra.mxu0 0
  %774 = vmatprep.subr.bf16.mxu0 0
  %775 = vmatpush1.bf16.msra.mxu0 0
  %776 = vmatprep.subr.bf16.mxu0 0
  %777 = vmatpush1.bf16.msra.mxu0 0
  %778 = vmatprep.subr.bf16.mxu0 0
  %779 = vmatpush1.bf16.msra.mxu0 0
  %780 = vmatprep.subr.bf16.mxu0 0
  %781 = vmatpush1.bf16.msra.mxu0 0
  %782 = vmatprep.subr.bf16.mxu0 0
  %783 = vmatpush1.bf16.msra.mxu0 0
  %784 = vmatprep.subr.bf16.mxu0 0
  %785 = vmatpush1.bf16.msra.mxu0 0
  %786 = vmatprep.subr.bf16.mxu0 0
  %787 = vmatpush1.bf16.msra.mxu0 0
  %788 = vmatprep.mubr.bf16.mxu0 0
  %789 = vmatmul.mubr.bf16.gmra.mrb[0].mxu0 %v711
  %v790 = vpop.f32.mrb[0].mxu0
  %v791 = vadd.f32 0.0, %v790
  %v792 = vpop.f32.mrb[0].mxu0
  %v793 = vadd.f32 0.0, %v792
  %v794 = vpop.f32.mrb[0].mxu0
  %v795 = vadd.f32 0.0, %v794
  %v796 = vpop.f32.mrb[0].mxu0
  %v797 = vadd.f32 0.0, %v796
  %798 = vdwg.mxu0
  %799 = vrot.lane.b32.xlu0 %v748, 17
  %v800 = vpop.permute.xlu0 %799
  %801 = vrot.lane.b32.xlu0 %v752, 17
  %v802 = vpop.permute.xlu0 %801
  %803 = vrot.lane.b32.xlu0 %v750, 17
  %v804 = vpop.permute.xlu0 %803
  %805 = vrot.lane.b32.xlu0 %v754, 17
  %v806 = vpop.permute.xlu0 %805
  %807 = vrot.lane.b32.xlu0 %v791, 17
  %v808 = vpop.permute.xlu0 %807
  %809 = vrot.lane.b32.xlu0 %v795, 17
  %v810 = vpop.permute.xlu0 %809
  %811 = vrot.lane.b32.xlu0 %v793, 17
  %v812 = vpop.permute.xlu0 %811
  %813 = vrot.lane.b32.xlu0 %v797, 17
  %v814 = vpop.permute.xlu0 %813
  %v815 = vsel %vm44, %v808, %v812
  %v816 = vsel %vm44, %v810, %v814
  %v817 = vsel %vm44, %v804, %v808
  %v818 = vsel %vm44, %v806, %v810
  %v819 = vsel %vm44, %v800, %v804
  %v820 = vsel %vm44, %v802, %v806
  %v821 = vsel %vm44, %v812, %v800
  %v822 = vsel %vm44, %v814, %v802
  %v823 = vld [vmem:[%s1] ss:$8 sm:$0xf]
  %v825 = vlaneseq
  %v826 = vshrl.u32 %v825, 7
  %v827 = vsub.s32 0, %v826
  %v828 = vrot.slane %v823, %v827
  %v829 = vlaneseq
  %v830 = vshrl.u32 %v829, 7
  %v831 = vsub.s32 1, %v830
  %v832 = vrot.slane %v823, %v831
  %v833 = vlaneseq
  %v834 = vshrl.u32 %v833, 7
  %v835 = vsub.s32 2, %v834
  %v836 = vrot.slane %v823, %v835
  %v837 = vlaneseq
  %v838 = vshrl.u32 %v837, 7
  %v839 = vsub.s32 3, %v838
  %v840 = vrot.slane %v823, %v839
  %v845 = vmul.f32 %v821, %v828
  %v846 = vmul.f32 %v819, %v832
  %v847 = vmul.f32 %v817, %v836
  %v848 = vmul.f32 %v815, %v840
  %v849 = vmul.f32 %v822, %v828
  %v850 = vmul.f32 %v820, %v832
  %v851 = vmul.f32 %v818, %v836
  %v852 = vmul.f32 %v816, %v840
  %v853 = vld [vmem:[%s5] sm:$0xff]
  %v854 = vld [vmem:[%s5 + $0x8] sm:$0xff]
  %856 = vset.pattern.permute.xlu0 0
  %857 = vperm.xlu0 %856, %v853
  %v858 = vpop.permute.xlu0 %857
  %861 = vset.pattern.permute.xlu0 0
  %862 = vperm.xlu0 %861, %v854
  %v863 = vpop.permute.xlu0 %862
  %v865 = vmul.f32 %v845, %v858
  %v866 = vmul.f32 %v846, %v858
  %v867 = vmul.f32 %v847, %v858
  %v868 = vmul.f32 %v848, %v858
  %v869 = vmul.f32 %v849, %v863
  %v870 = vmul.f32 %v850, %v863
  %v871 = vmul.f32 %v851, %v863
  %v872 = vmul.f32 %v852, %v863
  %v873 = vadd.f32 %v865, 0.0
  %v874 = vadd.f32 %v866, 0.0
  %v875 = vadd.f32 %v867, 0.0
  %v876 = vadd.f32 %v868, 0.0
  %v877 = vadd.f32 %v869, 0.0
  %v878 = vadd.f32 %v870, 0.0
  %v879 = vadd.f32 %v871, 0.0
  %v880 = vadd.f32 %v872, 0.0
  %881 = vrot.lane.b32.xlu0 %v748, 16
  %v882 = vpop.permute.xlu0 %881
  %883 = vrot.lane.b32.xlu0 %v752, 16
  %v884 = vpop.permute.xlu0 %883
  %885 = vrot.lane.b32.xlu0 %v750, 16
  %v886 = vpop.permute.xlu0 %885
  %887 = vrot.lane.b32.xlu0 %v754, 16
  %v888 = vpop.permute.xlu0 %887
  %889 = vrot.lane.b32.xlu0 %v791, 16
  %v890 = vpop.permute.xlu0 %889
  %891 = vrot.lane.b32.xlu0 %v795, 16
  %v892 = vpop.permute.xlu0 %891
  %893 = vrot.lane.b32.xlu0 %v793, 16
  %v894 = vpop.permute.xlu0 %893
  %895 = vrot.lane.b32.xlu0 %v797, 16
  %v896 = vpop.permute.xlu0 %895
  %v897 = vsel %vm87, %v890, %v894
  %v898 = vsel %vm87, %v892, %v896
  %v899 = vsel %vm87, %v886, %v890
  %v900 = vsel %vm87, %v888, %v892
  %v901 = vsel %vm87, %v882, %v886
  %v902 = vsel %vm87, %v884, %v888
  %v903 = vsel %vm87, %v894, %v882
  %v904 = vsel %vm87, %v896, %v884
  %v905 = vld [vmem:[%s92] ss:$8 sm:$0xf]
  %v907 = vlaneseq
  %v908 = vshrl.u32 %v907, 7
  %v909 = vsub.s32 0, %v908
  %v910 = vrot.slane %v905, %v909
  %v911 = vlaneseq
  %v912 = vshrl.u32 %v911, 7
  %v913 = vsub.s32 1, %v912
  %v914 = vrot.slane %v905, %v913
  %v915 = vlaneseq
  %v916 = vshrl.u32 %v915, 7
  %v917 = vsub.s32 2, %v916
  %v918 = vrot.slane %v905, %v917
  %v919 = vlaneseq
  %v920 = vshrl.u32 %v919, 7
  %v921 = vsub.s32 3, %v920
  %v922 = vrot.slane %v905, %v921
  %v927 = vmul.f32 %v903, %v910
  %v928 = vmul.f32 %v901, %v914
  %v929 = vmul.f32 %v899, %v918
  %v930 = vmul.f32 %v897, %v922
  %v931 = vmul.f32 %v904, %v910
  %v932 = vmul.f32 %v902, %v914
  %v933 = vmul.f32 %v900, %v918
  %v934 = vmul.f32 %v898, %v922
  %s935 = scalar_lea.vmem %s5, 16
  %v936 = vld [vmem:[%s935] sm:$0xff]
  %v937 = vld [vmem:[%s935 + $0x8] sm:$0xff]
  %939 = vset.pattern.permute.xlu0 0
  %940 = vperm.xlu0 %939, %v936
  %v941 = vpop.permute.xlu0 %940
  %944 = vset.pattern.permute.xlu0 0
  %945 = vperm.xlu0 %944, %v937
  %v946 = vpop.permute.xlu0 %945
  %v948 = vmul.f32 %v927, %v941
  %v949 = vmul.f32 %v928, %v941
  %v950 = vmul.f32 %v929, %v941
  %v951 = vmul.f32 %v930, %v941
  %v952 = vmul.f32 %v931, %v946
  %v953 = vmul.f32 %v932, %v946
  %v954 = vmul.f32 %v933, %v946
  %v955 = vmul.f32 %v934, %v946
  %v956 = vadd.f32 %v873, %v948
  %v957 = vadd.f32 %v874, %v949
  %v958 = vadd.f32 %v875, %v950
  %v959 = vadd.f32 %v876, %v951
  %v960 = vadd.f32 %v877, %v952
  %v961 = vadd.f32 %v878, %v953
  %v962 = vadd.f32 %v879, %v954
  %v963 = vadd.f32 %v880, %v955
  %964 = vrot.lane.b32.xlu0 %v748, 15
  %v965 = vpop.permute.xlu0 %964
  %966 = vrot.lane.b32.xlu0 %v752, 15
  %v967 = vpop.permute.xlu0 %966
  %968 = vrot.lane.b32.xlu0 %v750, 15
  %v969 = vpop.permute.xlu0 %968
  %970 = vrot.lane.b32.xlu0 %v754, 15
  %v971 = vpop.permute.xlu0 %970
  %972 = vrot.lane.b32.xlu0 %v791, 15
  %v973 = vpop.permute.xlu0 %972
  %974 = vrot.lane.b32.xlu0 %v795, 15
  %v975 = vpop.permute.xlu0 %974
  %976 = vrot.lane.b32.xlu0 %v793, 15
  %v977 = vpop.permute.xlu0 %976
  %978 = vrot.lane.b32.xlu0 %v797, 15
  %v979 = vpop.permute.xlu0 %978
  %v980 = vsel %vm131, %v973, %v977
  %v981 = vsel %vm131, %v975, %v979
  %v982 = vsel %vm131, %v969, %v973
  %v983 = vsel %vm131, %v971, %v975
  %v984 = vsel %vm131, %v965, %v969
  %v985 = vsel %vm131, %v967, %v971
  %v986 = vsel %vm131, %v977, %v965
  %v987 = vsel %vm131, %v979, %v967
  %v988 = vld [vmem:[%s136] ss:$8 sm:$0xf]
  %v990 = vlaneseq
  %v991 = vshrl.u32 %v990, 7
  %v992 = vsub.s32 0, %v991
  %v993 = vrot.slane %v988, %v992
  %v994 = vlaneseq
  %v995 = vshrl.u32 %v994, 7
  %v996 = vsub.s32 1, %v995
  %v997 = vrot.slane %v988, %v996
  %v998 = vlaneseq
  %v999 = vshrl.u32 %v998, 7
  %v1000 = vsub.s32 2, %v999
  %v1001 = vrot.slane %v988, %v1000
  %v1002 = vlaneseq
  %v1003 = vshrl.u32 %v1002, 7
  %v1004 = vsub.s32 3, %v1003
  %v1005 = vrot.slane %v988, %v1004
  %v1010 = vmul.f32 %v986, %v993
  %v1011 = vmul.f32 %v984, %v997
  %v1012 = vmul.f32 %v982, %v1001
  %v1013 = vmul.f32 %v980, %v1005
  %v1014 = vmul.f32 %v987, %v993
  %v1015 = vmul.f32 %v985, %v997
  %v1016 = vmul.f32 %v983, %v1001
  %v1017 = vmul.f32 %v981, %v1005
  %s1018 = scalar_lea.vmem %s5, 32
  %v1019 = vld [vmem:[%s1018] sm:$0xff]
  %v1020 = vld [vmem:[%s1018 + $0x8] sm:$0xff]
  %1022 = vset.pattern.permute.xlu0 0
  %1023 = vperm.xlu0 %1022, %v1019
  %v1024 = vpop.permute.xlu0 %1023
  %1027 = vset.pattern.permute.xlu0 0
  %1028 = vperm.xlu0 %1027, %v1020
  %v1029 = vpop.permute.xlu0 %1028
  %v1031 = vmul.f32 %v1010, %v1024
  %v1032 = vmul.f32 %v1011, %v1024
  %v1033 = vmul.f32 %v1012, %v1024
  %v1034 = vmul.f32 %v1013, %v1024
  %v1035 = vmul.f32 %v1014, %v1029
  %v1036 = vmul.f32 %v1015, %v1029
  %v1037 = vmul.f32 %v1016, %v1029
  %v1038 = vmul.f32 %v1017, %v1029
  %v1039 = vadd.f32 %v956, %v1031
  %v1040 = vadd.f32 %v957, %v1032
  %v1041 = vadd.f32 %v958, %v1033
  %v1042 = vadd.f32 %v959, %v1034
  %v1043 = vadd.f32 %v960, %v1035
  %v1044 = vadd.f32 %v961, %v1036
  %v1045 = vadd.f32 %v962, %v1037
  %v1046 = vadd.f32 %v963, %v1038
  %1047 = vrot.lane.b32.xlu0 %v748, 1
  %v1048 = vpop.permute.xlu0 %1047
  %1049 = vrot.lane.b32.xlu0 %v752, 1
  %v1050 = vpop.permute.xlu0 %1049
  %1051 = vrot.lane.b32.xlu0 %v750, 1
  %v1052 = vpop.permute.xlu0 %1051
  %1053 = vrot.lane.b32.xlu0 %v754, 1
  %v1054 = vpop.permute.xlu0 %1053
  %1055 = vrot.lane.b32.xlu0 %v791, 1
  %v1056 = vpop.permute.xlu0 %1055
  %1057 = vrot.lane.b32.xlu0 %v795, 1
  %v1058 = vpop.permute.xlu0 %1057
  %1059 = vrot.lane.b32.xlu0 %v793, 1
  %v1060 = vpop.permute.xlu0 %1059
  %1061 = vrot.lane.b32.xlu0 %v797, 1
  %v1062 = vpop.permute.xlu0 %1061
  %v1063 = vsel %vm175, %v1056, %v1060
  %v1064 = vsel %vm175, %v1058, %v1062
  %v1065 = vsel %vm175, %v1052, %v1056
  %v1066 = vsel %vm175, %v1054, %v1058
  %v1067 = vsel %vm175, %v1048, %v1052
  %v1068 = vsel %vm175, %v1050, %v1054
  %v1069 = vsel %vm175, %v1060, %v1048
  %v1070 = vsel %vm175, %v1062, %v1050
  %v1071 = vld [vmem:[%s180] ss:$8 sm:$0xf]
  %v1073 = vlaneseq
  %v1074 = vshrl.u32 %v1073, 7
  %v1075 = vsub.s32 0, %v1074
  %v1076 = vrot.slane %v1071, %v1075
  %v1077 = vlaneseq
  %v1078 = vshrl.u32 %v1077, 7
  %v1079 = vsub.s32 1, %v1078
  %v1080 = vrot.slane %v1071, %v1079
  %v1081 = vlaneseq
  %v1082 = vshrl.u32 %v1081, 7
  %v1083 = vsub.s32 2, %v1082
  %v1084 = vrot.slane %v1071, %v1083
  %v1085 = vlaneseq
  %v1086 = vshrl.u32 %v1085, 7
  %v1087 = vsub.s32 3, %v1086
  %v1088 = vrot.slane %v1071, %v1087
  %v1093 = vmul.f32 %v1069, %v1076
  %v1094 = vmul.f32 %v1067, %v1080
  %v1095 = vmul.f32 %v1065, %v1084
  %v1096 = vmul.f32 %v1063, %v1088
  %v1097 = vmul.f32 %v1070, %v1076
  %v1098 = vmul.f32 %v1068, %v1080
  %v1099 = vmul.f32 %v1066, %v1084
  %v1100 = vmul.f32 %v1064, %v1088
  %s1101 = scalar_lea.vmem %s5, 48
  %v1102 = vld [vmem:[%s1101] sm:$0xff]
  %v1103 = vld [vmem:[%s1101 + $0x8] sm:$0xff]
  %1105 = vset.pattern.permute.xlu0 0
  %1106 = vperm.xlu0 %1105, %v1102
  %v1107 = vpop.permute.xlu0 %1106
  %1110 = vset.pattern.permute.xlu0 0
  %1111 = vperm.xlu0 %1110, %v1103
  %v1112 = vpop.permute.xlu0 %1111
  %v1114 = vmul.f32 %v1093, %v1107
  %v1115 = vmul.f32 %v1094, %v1107
  %v1116 = vmul.f32 %v1095, %v1107
  %v1117 = vmul.f32 %v1096, %v1107
  %v1118 = vmul.f32 %v1097, %v1112
  %v1119 = vmul.f32 %v1098, %v1112
  %v1120 = vmul.f32 %v1099, %v1112
  %v1121 = vmul.f32 %v1100, %v1112
  %v1122 = vadd.f32 %v1039, %v1114
  %v1123 = vadd.f32 %v1040, %v1115
  %v1124 = vadd.f32 %v1041, %v1116
  %v1125 = vadd.f32 %v1042, %v1117
  %v1126 = vadd.f32 %v1043, %v1118
  %v1127 = vadd.f32 %v1044, %v1119
  %v1128 = vadd.f32 %v1045, %v1120
  %v1129 = vadd.f32 %v1046, %v1121
  %s1130 = scalar_lea.vmem %s5, 64
  %v1131 = vld [vmem:[%s1130] sm:$0xff]
  %v1132 = vld [vmem:[%s1130 + $0x8] sm:$0xff]
  %1134 = vset.pattern.permute.xlu0 0
  %1135 = vperm.xlu0 %1134, %v1131
  %v1136 = vpop.permute.xlu0 %1135
  %1139 = vset.pattern.permute.xlu0 0
  %1140 = vperm.xlu0 %1139, %v1132
  %v1141 = vpop.permute.xlu0 %1140
  %v1143 = vmul.f32 %v748, %v1136
  %v1144 = vmul.f32 %v750, %v1136
  %v1145 = vmul.f32 %v791, %v1136
  %v1146 = vmul.f32 %v793, %v1136
  %v1147 = vmul.f32 %v752, %v1141
  %v1148 = vmul.f32 %v754, %v1141
  %v1149 = vmul.f32 %v795, %v1141
  %v1150 = vmul.f32 %v797, %v1141
  %v1151 = vadd.f32 %v1122, %v1143
  %v1152 = vadd.f32 %v1123, %v1144
  %v1153 = vadd.f32 %v1124, %v1145
  %v1154 = vadd.f32 %v1125, %v1146
  %v1155 = vadd.f32 %v1126, %v1147
  %v1156 = vadd.f32 %v1127, %v1148
  %v1157 = vadd.f32 %v1128, %v1149
  %v1158 = vadd.f32 %v1129, %v1150
  %1159 = vrot.lane.b32.xlu0 %v748, 127
  %v1160 = vpop.permute.xlu0 %1159
  %1161 = vrot.lane.b32.xlu0 %v752, 127
  %v1162 = vpop.permute.xlu0 %1161
  %1163 = vrot.lane.b32.xlu0 %v750, 127
  %v1164 = vpop.permute.xlu0 %1163
  %1165 = vrot.lane.b32.xlu0 %v754, 127
  %v1166 = vpop.permute.xlu0 %1165
  %1167 = vrot.lane.b32.xlu0 %v791, 127
  %v1168 = vpop.permute.xlu0 %1167
  %1169 = vrot.lane.b32.xlu0 %v795, 127
  %v1170 = vpop.permute.xlu0 %1169
  %1171 = vrot.lane.b32.xlu0 %v793, 127
  %v1172 = vpop.permute.xlu0 %1171
  %1173 = vrot.lane.b32.xlu0 %v797, 127
  %v1174 = vpop.permute.xlu0 %1173
  %v1175 = vsel %vm223, %v1168, %v1172
  %v1176 = vsel %vm223, %v1170, %v1174
  %v1177 = vsel %vm223, %v1164, %v1168
  %v1178 = vsel %vm223, %v1166, %v1170
  %v1179 = vsel %vm223, %v1160, %v1164
  %v1180 = vsel %vm223, %v1162, %v1166
  %v1181 = vsel %vm223, %v1172, %v1160
  %v1182 = vsel %vm223, %v1174, %v1162
  %v1183 = vld [vmem:[%s228] ss:$8 sm:$0xf]
  %v1185 = vlaneseq
  %v1186 = vshrl.u32 %v1185, 7
  %v1187 = vsub.s32 0, %v1186
  %v1188 = vrot.slane %v1183, %v1187
  %v1189 = vlaneseq
  %v1190 = vshrl.u32 %v1189, 7
  %v1191 = vsub.s32 1, %v1190
  %v1192 = vrot.slane %v1183, %v1191
  %v1193 = vlaneseq
  %v1194 = vshrl.u32 %v1193, 7
  %v1195 = vsub.s32 2, %v1194
  %v1196 = vrot.slane %v1183, %v1195
  %v1197 = vlaneseq
  %v1198 = vshrl.u32 %v1197, 7
  %v1199 = vsub.s32 3, %v1198
  %v1200 = vrot.slane %v1183, %v1199
  %v1205 = vmul.f32 %v1179, %v1188
  %v1206 = vmul.f32 %v1177, %v1192
  %v1207 = vmul.f32 %v1175, %v1196
  %v1208 = vmul.f32 %v1181, %v1200
  %v1209 = vmul.f32 %v1180, %v1188
  %v1210 = vmul.f32 %v1178, %v1192
  %v1211 = vmul.f32 %v1176, %v1196
  %v1212 = vmul.f32 %v1182, %v1200
  %s1213 = scalar_lea.vmem %s5, 80
  %v1214 = vld [vmem:[%s1213] sm:$0xff]
  %v1215 = vld [vmem:[%s1213 + $0x8] sm:$0xff]
  %1217 = vset.pattern.permute.xlu0 0
  %1218 = vperm.xlu0 %1217, %v1214
  %v1219 = vpop.permute.xlu0 %1218
  %1222 = vset.pattern.permute.xlu0 0
  %1223 = vperm.xlu0 %1222, %v1215
  %v1224 = vpop.permute.xlu0 %1223
  %v1226 = vmul.f32 %v1205, %v1219
  %v1227 = vmul.f32 %v1206, %v1219
  %v1228 = vmul.f32 %v1207, %v1219
  %v1229 = vmul.f32 %v1208, %v1219
  %v1230 = vmul.f32 %v1209, %v1224
  %v1231 = vmul.f32 %v1210, %v1224
  %v1232 = vmul.f32 %v1211, %v1224
  %v1233 = vmul.f32 %v1212, %v1224
  %v1234 = vadd.f32 %v1151, %v1226
  %v1235 = vadd.f32 %v1152, %v1227
  %v1236 = vadd.f32 %v1153, %v1228
  %v1237 = vadd.f32 %v1154, %v1229
  %v1238 = vadd.f32 %v1155, %v1230
  %v1239 = vadd.f32 %v1156, %v1231
  %v1240 = vadd.f32 %v1157, %v1232
  %v1241 = vadd.f32 %v1158, %v1233
  %1242 = vrot.lane.b32.xlu0 %v748, 113
  %v1243 = vpop.permute.xlu0 %1242
  %1244 = vrot.lane.b32.xlu0 %v752, 113
  %v1245 = vpop.permute.xlu0 %1244
  %1246 = vrot.lane.b32.xlu0 %v750, 113
  %v1247 = vpop.permute.xlu0 %1246
  %1248 = vrot.lane.b32.xlu0 %v754, 113
  %v1249 = vpop.permute.xlu0 %1248
  %1250 = vrot.lane.b32.xlu0 %v791, 113
  %v1251 = vpop.permute.xlu0 %1250
  %1252 = vrot.lane.b32.xlu0 %v795, 113
  %v1253 = vpop.permute.xlu0 %1252
  %1254 = vrot.lane.b32.xlu0 %v793, 113
  %v1255 = vpop.permute.xlu0 %1254
  %1256 = vrot.lane.b32.xlu0 %v797, 113
  %v1257 = vpop.permute.xlu0 %1256
  %v1258 = vsel %vm267, %v1251, %v1255
  %v1259 = vsel %vm267, %v1253, %v1257
  %v1260 = vsel %vm267, %v1247, %v1251
  %v1261 = vsel %vm267, %v1249, %v1253
  %v1262 = vsel %vm267, %v1243, %v1247
  %v1263 = vsel %vm267, %v1245, %v1249
  %v1264 = vsel %vm267, %v1255, %v1243
  %v1265 = vsel %vm267, %v1257, %v1245
  %v1266 = vld [vmem:[%s272] ss:$8 sm:$0xf]
  %v1268 = vlaneseq
  %v1269 = vshrl.u32 %v1268, 7
  %v1270 = vsub.s32 0, %v1269
  %v1271 = vrot.slane %v1266, %v1270
  %v1272 = vlaneseq
  %v1273 = vshrl.u32 %v1272, 7
  %v1274 = vsub.s32 1, %v1273
  %v1275 = vrot.slane %v1266, %v1274
  %v1276 = vlaneseq
  %v1277 = vshrl.u32 %v1276, 7
  %v1278 = vsub.s32 2, %v1277
  %v1279 = vrot.slane %v1266, %v1278
  %v1280 = vlaneseq
  %v1281 = vshrl.u32 %v1280, 7
  %v1282 = vsub.s32 3, %v1281
  %v1283 = vrot.slane %v1266, %v1282
  %v1288 = vmul.f32 %v1262, %v1271
  %v1289 = vmul.f32 %v1260, %v1275
  %v1290 = vmul.f32 %v1258, %v1279
  %v1291 = vmul.f32 %v1264, %v1283
  %v1292 = vmul.f32 %v1263, %v1271
  %v1293 = vmul.f32 %v1261, %v1275
  %v1294 = vmul.f32 %v1259, %v1279
  %v1295 = vmul.f32 %v1265, %v1283
  %s1296 = scalar_lea.vmem %s5, 96
  %v1297 = vld [vmem:[%s1296] sm:$0xff]
  %v1298 = vld [vmem:[%s1296 + $0x8] sm:$0xff]
  %1300 = vset.pattern.permute.xlu0 0
  %1301 = vperm.xlu0 %1300, %v1297
  %v1302 = vpop.permute.xlu0 %1301
  %1305 = vset.pattern.permute.xlu0 0
  %1306 = vperm.xlu0 %1305, %v1298
  %v1307 = vpop.permute.xlu0 %1306
  %v1309 = vmul.f32 %v1288, %v1302
  %v1310 = vmul.f32 %v1289, %v1302
  %v1311 = vmul.f32 %v1290, %v1302
  %v1312 = vmul.f32 %v1291, %v1302
  %v1313 = vmul.f32 %v1292, %v1307
  %v1314 = vmul.f32 %v1293, %v1307
  %v1315 = vmul.f32 %v1294, %v1307
  %v1316 = vmul.f32 %v1295, %v1307
  %v1317 = vadd.f32 %v1234, %v1309
  %v1318 = vadd.f32 %v1235, %v1310
  %v1319 = vadd.f32 %v1236, %v1311
  %v1320 = vadd.f32 %v1237, %v1312
  %v1321 = vadd.f32 %v1238, %v1313
  %v1322 = vadd.f32 %v1239, %v1314
  %v1323 = vadd.f32 %v1240, %v1315
  %v1324 = vadd.f32 %v1241, %v1316
  %1325 = vrot.lane.b32.xlu0 %v748, 112
  %v1326 = vpop.permute.xlu0 %1325
  %1327 = vrot.lane.b32.xlu0 %v752, 112
  %v1328 = vpop.permute.xlu0 %1327
  %1329 = vrot.lane.b32.xlu0 %v750, 112
  %v1330 = vpop.permute.xlu0 %1329
  %1331 = vrot.lane.b32.xlu0 %v754, 112
  %v1332 = vpop.permute.xlu0 %1331
  %1333 = vrot.lane.b32.xlu0 %v791, 112
  %v1334 = vpop.permute.xlu0 %1333
  %1335 = vrot.lane.b32.xlu0 %v795, 112
  %v1336 = vpop.permute.xlu0 %1335
  %1337 = vrot.lane.b32.xlu0 %v793, 112
  %v1338 = vpop.permute.xlu0 %1337
  %1339 = vrot.lane.b32.xlu0 %v797, 112
  %v1340 = vpop.permute.xlu0 %1339
  %v1341 = vsel %vm311, %v1334, %v1338
  %v1342 = vsel %vm311, %v1336, %v1340
  %v1343 = vsel %vm311, %v1330, %v1334
  %v1344 = vsel %vm311, %v1332, %v1336
  %v1345 = vsel %vm311, %v1326, %v1330
  %v1346 = vsel %vm311, %v1328, %v1332
  %v1347 = vsel %vm311, %v1338, %v1326
  %v1348 = vsel %vm311, %v1340, %v1328
  %v1349 = vld [vmem:[%s316] ss:$8 sm:$0xf]
  %v1351 = vlaneseq
  %v1352 = vshrl.u32 %v1351, 7
  %v1353 = vsub.s32 0, %v1352
  %v1354 = vrot.slane %v1349, %v1353
  %v1355 = vlaneseq
  %v1356 = vshrl.u32 %v1355, 7
  %v1357 = vsub.s32 1, %v1356
  %v1358 = vrot.slane %v1349, %v1357
  %v1359 = vlaneseq
  %v1360 = vshrl.u32 %v1359, 7
  %v1361 = vsub.s32 2, %v1360
  %v1362 = vrot.slane %v1349, %v1361
  %v1363 = vlaneseq
  %v1364 = vshrl.u32 %v1363, 7
  %v1365 = vsub.s32 3, %v1364
  %v1366 = vrot.slane %v1349, %v1365
  %v1371 = vmul.f32 %v1345, %v1354
  %v1372 = vmul.f32 %v1343, %v1358
  %v1373 = vmul.f32 %v1341, %v1362
  %v1374 = vmul.f32 %v1347, %v1366
  %v1375 = vmul.f32 %v1346, %v1354
  %v1376 = vmul.f32 %v1344, %v1358
  %v1377 = vmul.f32 %v1342, %v1362
  %v1378 = vmul.f32 %v1348, %v1366
  %s1379 = scalar_lea.vmem %s5, 112
  %v1380 = vld [vmem:[%s1379] sm:$0xff]
  %v1381 = vld [vmem:[%s1379 + $0x8] sm:$0xff]
  %1383 = vset.pattern.permute.xlu0 0
  %1384 = vperm.xlu0 %1383, %v1380
  %v1385 = vpop.permute.xlu0 %1384
  %1388 = vset.pattern.permute.xlu0 0
  %1389 = vperm.xlu0 %1388, %v1381
  %v1390 = vpop.permute.xlu0 %1389
  %v1392 = vmul.f32 %v1371, %v1385
  %v1393 = vmul.f32 %v1372, %v1385
  %v1394 = vmul.f32 %v1373, %v1385
  %v1395 = vmul.f32 %v1374, %v1385
  %v1396 = vmul.f32 %v1375, %v1390
  %v1397 = vmul.f32 %v1376, %v1390
  %v1398 = vmul.f32 %v1377, %v1390
  %v1399 = vmul.f32 %v1378, %v1390
  %v1400 = vadd.f32 %v1317, %v1392
  %v1401 = vadd.f32 %v1318, %v1393
  %v1402 = vadd.f32 %v1319, %v1394
  %v1403 = vadd.f32 %v1320, %v1395
  %v1404 = vadd.f32 %v1321, %v1396
  %v1405 = vadd.f32 %v1322, %v1397
  %v1406 = vadd.f32 %v1323, %v1398
  %v1407 = vadd.f32 %v1324, %v1399
  %1408 = vrot.lane.b32.xlu0 %v748, 111
  %v1409 = vpop.permute.xlu0 %1408
  %1410 = vrot.lane.b32.xlu0 %v752, 111
  %v1411 = vpop.permute.xlu0 %1410
  %1412 = vrot.lane.b32.xlu0 %v750, 111
  %v1413 = vpop.permute.xlu0 %1412
  %1414 = vrot.lane.b32.xlu0 %v754, 111
  %v1415 = vpop.permute.xlu0 %1414
  %1416 = vrot.lane.b32.xlu0 %v791, 111
  %v1417 = vpop.permute.xlu0 %1416
  %1418 = vrot.lane.b32.xlu0 %v795, 111
  %v1419 = vpop.permute.xlu0 %1418
  %1420 = vrot.lane.b32.xlu0 %v793, 111
  %v1421 = vpop.permute.xlu0 %1420
  %1422 = vrot.lane.b32.xlu0 %v797, 111
  %v1423 = vpop.permute.xlu0 %1422
  %v1424 = vsel %vm355, %v1417, %v1421
  %v1425 = vsel %vm355, %v1419, %v1423
  %v1426 = vsel %vm355, %v1413, %v1417
  %v1427 = vsel %vm355, %v1415, %v1419
  %v1428 = vsel %vm355, %v1409, %v1413
  %v1429 = vsel %vm355, %v1411, %v1415
  %v1430 = vsel %vm355, %v1421, %v1409
  %v1431 = vsel %vm355, %v1423, %v1411
  %v1432 = vld [vmem:[%s360] ss:$8 sm:$0xf]
  %v1434 = vlaneseq
  %v1435 = vshrl.u32 %v1434, 7
  %v1436 = vsub.s32 0, %v1435
  %v1437 = vrot.slane %v1432, %v1436
  %v1438 = vlaneseq
  %v1439 = vshrl.u32 %v1438, 7
  %v1440 = vsub.s32 1, %v1439
  %v1441 = vrot.slane %v1432, %v1440
  %v1442 = vlaneseq
  %v1443 = vshrl.u32 %v1442, 7
  %v1444 = vsub.s32 2, %v1443
  %v1445 = vrot.slane %v1432, %v1444
  %v1446 = vlaneseq
  %v1447 = vshrl.u32 %v1446, 7
  %v1448 = vsub.s32 3, %v1447
  %v1449 = vrot.slane %v1432, %v1448
  %v1454 = vmul.f32 %v1428, %v1437
  %v1455 = vmul.f32 %v1426, %v1441
  %v1456 = vmul.f32 %v1424, %v1445
  %v1457 = vmul.f32 %v1430, %v1449
  %v1458 = vmul.f32 %v1429, %v1437
  %v1459 = vmul.f32 %v1427, %v1441
  %v1460 = vmul.f32 %v1425, %v1445
  %v1461 = vmul.f32 %v1431, %v1449
  %s1462 = scalar_lea.vmem %s5, 128
  %v1463 = vld [vmem:[%s1462] sm:$0xff]
  %v1464 = vld [vmem:[%s1462 + $0x8] sm:$0xff]
  %1466 = vset.pattern.permute.xlu0 0
  %1467 = vperm.xlu0 %1466, %v1463
  %v1468 = vpop.permute.xlu0 %1467
  %1471 = vset.pattern.permute.xlu0 0
  %1472 = vperm.xlu0 %1471, %v1464
  %v1473 = vpop.permute.xlu0 %1472
  %v1475 = vmul.f32 %v1454, %v1468
  %v1476 = vmul.f32 %v1455, %v1468
  %v1477 = vmul.f32 %v1456, %v1468
  %v1478 = vmul.f32 %v1457, %v1468
  %v1479 = vmul.f32 %v1458, %v1473
  %v1480 = vmul.f32 %v1459, %v1473
  %v1481 = vmul.f32 %v1460, %v1473
  %v1482 = vmul.f32 %v1461, %v1473
  %v1483 = vadd.f32 %v1400, %v1475
  %v1484 = vadd.f32 %v1401, %v1476
  %v1485 = vadd.f32 %v1402, %v1477
  %v1486 = vadd.f32 %v1403, %v1478
  %v1487 = vadd.f32 %v1404, %v1479
  %v1488 = vadd.f32 %v1405, %v1480
  %v1489 = vadd.f32 %v1406, %v1481
  %v1490 = vadd.f32 %v1407, %v1482
  %v1491 = vmax.f32 %v748, 0.0
  %v1492 = vmax.f32 %v750, 0.0
  %v1493 = vmax.f32 %v791, 0.0
  %v1494 = vmax.f32 %v793, 0.0
  %v1495 = vmax.f32 %v752, 0.0
  %v1496 = vmax.f32 %v754, 0.0
  %v1497 = vmax.f32 %v795, 0.0
  %v1498 = vmax.f32 %v797, 0.0
  %1499 = vst [vmem:[#allocation4] sm:$0xff] %v1491
  %1500 = vst [vmem:[#allocation4 + $0x8] sm:$0xff] %v1492
  %1501 = vst [vmem:[#allocation4 + $0x10] sm:$0xff] %v1493
  %1502 = vst [vmem:[#allocation4 + $0x18] sm:$0xff] %v1494
  %1503 = vst [vmem:[#allocation4 + $0x20] sm:$0xff] %v1495
  %1504 = vst [vmem:[#allocation4 + $0x28] sm:$0xff] %v1496
  %1505 = vst [vmem:[#allocation4 + $0x30] sm:$0xff] %v1497
  %1506 = vst [vmem:[#allocation4 + $0x38] sm:$0xff] %v1498
  %v1507 = vmax.f32 %v1483, 0.0
  %v1508 = vmax.f32 %v1484, 0.0
  %v1509 = vmax.f32 %v1485, 0.0
  %v1510 = vmax.f32 %v1486, 0.0
  %v1511 = vmax.f32 %v1487, 0.0
  %v1512 = vmax.f32 %v1488, 0.0
  %v1513 = vmax.f32 %v1489, 0.0
  %v1514 = vmax.f32 %v1490, 0.0
  %1515 = vst [vmem:[#allocation4 + $0x40] sm:$0xff] %v1507
  %1516 = vst [vmem:[#allocation4 + $0x48] sm:$0xff] %v1508
  %1517 = vst [vmem:[#allocation4 + $0x50] sm:$0xff] %v1509
  %1518 = vst [vmem:[#allocation4 + $0x58] sm:$0xff] %v1510
  %1519 = vst [vmem:[#allocation4 + $0x60] sm:$0xff] %v1511
  %1520 = vst [vmem:[#allocation4 + $0x68] sm:$0xff] %v1512
  %1521 = vst [vmem:[#allocation4 + $0x70] sm:$0xff] %v1513
  %1522 = vst [vmem:[#allocation4 + $0x78] sm:$0xff] %v1514
  %v1523 = vld [vmem:[#allocation4] sm:$0xff]
  %v1524 = vld [vmem:[#allocation4 + $0x8] sm:$0xff]
  %v1525 = vld [vmem:[#allocation4 + $0x10] sm:$0xff]
  %v1526 = vld [vmem:[#allocation4 + $0x18] sm:$0xff]
  %v1527 = vld [vmem:[#allocation4 + $0x20] sm:$0xff]
  %v1528 = vld [vmem:[#allocation4 + $0x28] sm:$0xff]
  %v1529 = vld [vmem:[#allocation4 + $0x30] sm:$0xff]
  %v1530 = vld [vmem:[#allocation4 + $0x38] sm:$0xff]
  %v1531 = vld [vmem:[#allocation4 + $0x40] sm:$0xff]
  %v1532 = vld [vmem:[#allocation4 + $0x48] sm:$0xff]
  %v1533 = vld [vmem:[#allocation4 + $0x50] sm:$0xff]
  %v1534 = vld [vmem:[#allocation4 + $0x58] sm:$0xff]
  %v1535 = vld [vmem:[#allocation4 + $0x60] sm:$0xff]
  %v1536 = vld [vmem:[#allocation4 + $0x68] sm:$0xff]
  %v1537 = vld [vmem:[#allocation4 + $0x70] sm:$0xff]
  %v1538 = vld [vmem:[#allocation4 + $0x78] sm:$0xff]
  %s1539 = scalar_lea.vmem %s4, 8
  %v1540 = vld [vmem:[%s1539] sm:$0xf]
  %v1541 = vld [vmem:[%s1539 + $0x4] sm:$0xf]
  %v1542 = vpack.c.bf16 %v1527, %v1523
  %v1543 = vpack.c.bf16 %v1528, %v1524
  %v1544 = vpack.c.bf16 %v1529, %v1525
  %v1545 = vpack.c.bf16 %v1530, %v1526
  %v1546 = vpack.c.bf16 %v1535, %v1531
  %v1547 = vpack.c.bf16 %v1536, %v1532
  %v1548 = vpack.c.bf16 %v1537, %v1533
  %v1549 = vpack.c.bf16 %v1538, %v1534
  %v1552 = vunpack.c.l.b16 %v1540
  %v1553 = vunpack.c.l.b16 %v1541
  %v1554 = vpack.c.b16 %v1553, %v1552
  %v1556 = vsel %vm709, %v1554, 0
  %1558 = vmatprep.subr.bf16.mxu0 %v1543
  %1559 = vmatpush1.bf16.msra.mxu0 %v1542
  %1560 = vmatprep.subr.bf16.mxu0 %v1547
  %1561 = vmatpush1.bf16.msra.mxu0 %v1546
  %1562 = vmatprep.subr.bf16.mxu0 0
  %1563 = vmatpush1.bf16.msra.mxu0 0
  %1564 = vmatprep.subr.bf16.mxu0 0
  %1565 = vmatpush1.bf16.msra.mxu0 0
  %1566 = vmatprep.subr.bf16.mxu0 0
  %1567 = vmatpush1.bf16.msra.mxu0 0
  %1568 = vmatprep.subr.bf16.mxu0 0
  %1569 = vmatpush1.bf16.msra.mxu0 0
  %1570 = vmatprep.subr.bf16.mxu0 0
  %1571 = vmatpush1.bf16.msra.mxu0 0
  %1572 = vmatprep.subr.bf16.mxu0 0
  %1573 = vmatpush1.bf16.msra.mxu0 0
  %1574 = vmatprep.subr.bf16.mxu0 0
  %1575 = vmatpush1.bf16.msra.mxu0 0
  %1576 = vmatprep.subr.bf16.mxu0 0
  %1577 = vmatpush1.bf16.msra.mxu0 0
  %1578 = vmatprep.subr.bf16.mxu0 0
  %1579 = vmatpush1.bf16.msra.mxu0 0
  %1580 = vmatprep.subr.bf16.mxu0 0
  %1581 = vmatpush1.bf16.msra.mxu0 0
  %1582 = vmatprep.subr.bf16.mxu0 0
  %1583 = vmatpush1.bf16.msra.mxu0 0
  %1584 = vmatprep.subr.bf16.mxu0 0
  %1585 = vmatpush1.bf16.msra.mxu0 0
  %1586 = vmatprep.subr.bf16.mxu0 0
  %1587 = vmatpush1.bf16.msra.mxu0 0
  %1588 = vmatprep.subr.bf16.mxu0 0
  %1589 = vmatpush1.bf16.msra.mxu0 0
  %1590 = vmatprep.mubr.bf16.mxu0 0
  %1591 = vmatmul.mubr.bf16.gmra.mrb[0].mxu0 %v1556
  %v1592 = vpop.f32.mrb[0].mxu0
  %v1593 = vadd.f32 0.0, %v1592
  %v1594 = vpop.f32.mrb[0].mxu0
  %v1595 = vadd.f32 0.0, %v1594
  %v1596 = vpop.f32.mrb[0].mxu0
  %v1597 = vadd.f32 0.0, %v1596
  %v1598 = vpop.f32.mrb[0].mxu0
  %v1599 = vadd.f32 0.0, %v1598
  %1600 = vdwg.mxu0
  %1601 = vmatprep.subr.bf16.mxu0 %v1545
  %1602 = vmatpush1.bf16.msra.mxu0 %v1544
  %1603 = vmatprep.subr.bf16.mxu0 %v1549
  %1604 = vmatpush1.bf16.msra.mxu0 %v1548
  %1605 = vmatprep.subr.bf16.mxu0 0
  %1606 = vmatpush1.bf16.msra.mxu0 0
  %1607 = vmatprep.subr.bf16.mxu0 0
  %1608 = vmatpush1.bf16.msra.mxu0 0
  %1609 = vmatprep.subr.bf16.mxu0 0
  %1610 = vmatpush1.bf16.msra.mxu0 0
  %1611 = vmatprep.subr.bf16.mxu0 0
  %1612 = vmatpush1.bf16.msra.mxu0 0
  %1613 = vmatprep.subr.bf16.mxu0 0
  %1614 = vmatpush1.bf16.msra.mxu0 0
  %1615 = vmatprep.subr.bf16.mxu0 0
  %1616 = vmatpush1.bf16.msra.mxu0 0
  %1617 = vmatprep.subr.bf16.mxu0 0
  %1618 = vmatpush1.bf16.msra.mxu0 0
  %1619 = vmatprep.subr.bf16.mxu0 0
  %1620 = vmatpush1.bf16.msra.mxu0 0
  %1621 = vmatprep.subr.bf16.mxu0 0
  %1622 = vmatpush1.bf16.msra.mxu0 0
  %1623 = vmatprep.subr.bf16.mxu0 0
  %1624 = vmatpush1.bf16.msra.mxu0 0
  %1625 = vmatprep.subr.bf16.mxu0 0
  %1626 = vmatpush1.bf16.msra.mxu0 0
  %1627 = vmatprep.subr.bf16.mxu0 0
  %1628 = vmatpush1.bf16.msra.mxu0 0
  %1629 = vmatprep.subr.bf16.mxu0 0
  %1630 = vmatpush1.bf16.msra.mxu0 0
  %1631 = vmatprep.subr.bf16.mxu0 0
  %1632 = vmatpush1.bf16.msra.mxu0 0
  %1633 = vmatprep.mubr.bf16.mxu0 0
  %1634 = vmatmul.mubr.bf16.gmra.mrb[0].mxu0 %v1556
  %v1635 = vpop.f32.mrb[0].mxu0
  %v1636 = vadd.f32 0.0, %v1635
  %v1637 = vpop.f32.mrb[0].mxu0
  %v1638 = vadd.f32 0.0, %v1637
  %v1639 = vpop.f32.mrb[0].mxu0
  %v1640 = vadd.f32 0.0, %v1639
  %v1641 = vpop.f32.mrb[0].mxu0
  %v1642 = vadd.f32 0.0, %v1641
  %1643 = vdwg.mxu0
  %1644 = vrot.lane.b32.xlu0 %v1593, 17
  %v1645 = vpop.permute.xlu0 %1644
  %1646 = vrot.lane.b32.xlu0 %v1597, 17
  %v1647 = vpop.permute.xlu0 %1646
  %1648 = vrot.lane.b32.xlu0 %v1595, 17
  %v1649 = vpop.permute.xlu0 %1648
  %1650 = vrot.lane.b32.xlu0 %v1599, 17
  %v1651 = vpop.permute.xlu0 %1650
  %1652 = vrot.lane.b32.xlu0 %v1636, 17
  %v1653 = vpop.permute.xlu0 %1652
  %1654 = vrot.lane.b32.xlu0 %v1640, 17
  %v1655 = vpop.permute.xlu0 %1654
  %1656 = vrot.lane.b32.xlu0 %v1638, 17
  %v1657 = vpop.permute.xlu0 %1656
  %1658 = vrot.lane.b32.xlu0 %v1642, 17
  %v1659 = vpop.permute.xlu0 %1658
  %v1660 = vsel %vm44, %v1653, %v1657
  %v1661 = vsel %vm44, %v1655, %v1659
  %v1662 = vsel %vm44, %v1649, %v1653
  %v1663 = vsel %vm44, %v1651, %v1655
  %v1664 = vsel %vm44, %v1645, %v1649
  %v1665 = vsel %vm44, %v1647, %v1651
  %v1666 = vsel %vm44, %v1657, %v1645
  %v1667 = vsel %vm44, %v1659, %v1647
  %v1668 = vld [vmem:[%s1] ss:$8 sm:$0xf]
  %v1670 = vlaneseq
  %v1671 = vshrl.u32 %v1670, 7
  %v1672 = vsub.s32 0, %v1671
  %v1673 = vrot.slane %v1668, %v1672
  %v1674 = vlaneseq
  %v1675 = vshrl.u32 %v1674, 7
  %v1676 = vsub.s32 1, %v1675
  %v1677 = vrot.slane %v1668, %v1676
  %v1678 = vlaneseq
  %v1679 = vshrl.u32 %v1678, 7
  %v1680 = vsub.s32 2, %v1679
  %v1681 = vrot.slane %v1668, %v1680
  %v1682 = vlaneseq
  %v1683 = vshrl.u32 %v1682, 7
  %v1684 = vsub.s32 3, %v1683
  %v1685 = vrot.slane %v1668, %v1684
  %v1690 = vmul.f32 %v1666, %v1673
  %v1691 = vmul.f32 %v1664, %v1677
  %v1692 = vmul.f32 %v1662, %v1681
  %v1693 = vmul.f32 %v1660, %v1685
  %v1694 = vmul.f32 %v1667, %v1673
  %v1695 = vmul.f32 %v1665, %v1677
  %v1696 = vmul.f32 %v1663, %v1681
  %v1697 = vmul.f32 %v1661, %v1685
  %s1698 = scalar_lea.vmem %s5, 144
  %v1699 = vld [vmem:[%s1698] sm:$0xff]
  %v1700 = vld [vmem:[%s1698 + $0x8] sm:$0xff]
  %1702 = vset.pattern.permute.xlu0 0
  %1703 = vperm.xlu0 %1702, %v1699
  %v1704 = vpop.permute.xlu0 %1703
  %1707 = vset.pattern.permute.xlu0 0
  %1708 = vperm.xlu0 %1707, %v1700
  %v1709 = vpop.permute.xlu0 %1708
  %v1711 = vmul.f32 %v1690, %v1704
  %v1712 = vmul.f32 %v1691, %v1704
  %v1713 = vmul.f32 %v1692, %v1704
  %v1714 = vmul.f32 %v1693, %v1704
  %v1715 = vmul.f32 %v1694, %v1709
  %v1716 = vmul.f32 %v1695, %v1709
  %v1717 = vmul.f32 %v1696, %v1709
  %v1718 = vmul.f32 %v1697, %v1709
  %v1719 = vadd.f32 %v1711, 0.0
  %v1720 = vadd.f32 %v1712, 0.0
  %v1721 = vadd.f32 %v1713, 0.0
  %v1722 = vadd.f32 %v1714, 0.0
  %v1723 = vadd.f32 %v1715, 0.0
  %v1724 = vadd.f32 %v1716, 0.0
  %v1725 = vadd.f32 %v1717, 0.0
  %v1726 = vadd.f32 %v1718, 0.0
  %1727 = vrot.lane.b32.xlu0 %v1593, 16
  %v1728 = vpop.permute.xlu0 %1727
  %1729 = vrot.lane.b32.xlu0 %v1597, 16
  %v1730 = vpop.permute.xlu0 %1729
  %1731 = vrot.lane.b32.xlu0 %v1595, 16
  %v1732 = vpop.permute.xlu0 %1731
  %1733 = vrot.lane.b32.xlu0 %v1599, 16
  %v1734 = vpop.permute.xlu0 %1733
  %1735 = vrot.lane.b32.xlu0 %v1636, 16
  %v1736 = vpop.permute.xlu0 %1735
  %1737 = vrot.lane.b32.xlu0 %v1640, 16
  %v1738 = vpop.permute.xlu0 %1737
  %1739 = vrot.lane.b32.xlu0 %v1638, 16
  %v1740 = vpop.permute.xlu0 %1739
  %1741 = vrot.lane.b32.xlu0 %v1642, 16
  %v1742 = vpop.permute.xlu0 %1741
  %v1743 = vsel %vm87, %v1736, %v1740
  %v1744 = vsel %vm87, %v1738, %v1742
  %v1745 = vsel %vm87, %v1732, %v1736
  %v1746 = vsel %vm87, %v1734, %v1738
  %v1747 = vsel %vm87, %v1728, %v1732
  %v1748 = vsel %vm87, %v1730, %v1734
  %v1749 = vsel %vm87, %v1740, %v1728
  %v1750 = vsel %vm87, %v1742, %v1730
  %v1751 = vld [vmem:[%s92] ss:$8 sm:$0xf]
  %v1753 = vlaneseq
  %v1754 = vshrl.u32 %v1753, 7
  %v1755 = vsub.s32 0, %v1754
  %v1756 = vrot.slane %v1751, %v1755
  %v1757 = vlaneseq
  %v1758 = vshrl.u32 %v1757, 7
  %v1759 = vsub.s32 1, %v1758
  %v1760 = vrot.slane %v1751, %v1759
  %v1761 = vlaneseq
  %v1762 = vshrl.u32 %v1761, 7
  %v1763 = vsub.s32 2, %v1762
  %v1764 = vrot.slane %v1751, %v1763
  %v1765 = vlaneseq
  %v1766 = vshrl.u32 %v1765, 7
  %v1767 = vsub.s32 3, %v1766
  %v1768 = vrot.slane %v1751, %v1767
  %v1773 = vmul.f32 %v1749, %v1756
  %v1774 = vmul.f32 %v1747, %v1760
  %v1775 = vmul.f32 %v1745, %v1764
  %v1776 = vmul.f32 %v1743, %v1768
  %v1777 = vmul.f32 %v1750, %v1756
  %v1778 = vmul.f32 %v1748, %v1760
  %v1779 = vmul.f32 %v1746, %v1764
  %v1780 = vmul.f32 %v1744, %v1768
  %s1781 = scalar_lea.vmem %s5, 160
  %v1782 = vld [vmem:[%s1781] sm:$0xff]
  %v1783 = vld [vmem:[%s1781 + $0x8] sm:$0xff]
  %1785 = vset.pattern.permute.xlu0 0
  %1786 = vperm.xlu0 %1785, %v1782
  %v1787 = vpop.permute.xlu0 %1786
  %1790 = vset.pattern.permute.xlu0 0
  %1791 = vperm.xlu0 %1790, %v1783
  %v1792 = vpop.permute.xlu0 %1791
  %v1794 = vmul.f32 %v1773, %v1787
  %v1795 = vmul.f32 %v1774, %v1787
  %v1796 = vmul.f32 %v1775, %v1787
  %v1797 = vmul.f32 %v1776, %v1787
  %v1798 = vmul.f32 %v1777, %v1792
  %v1799 = vmul.f32 %v1778, %v1792
  %v1800 = vmul.f32 %v1779, %v1792
  %v1801 = vmul.f32 %v1780, %v1792
  %v1802 = vadd.f32 %v1719, %v1794
  %v1803 = vadd.f32 %v1720, %v1795
  %v1804 = vadd.f32 %v1721, %v1796
  %v1805 = vadd.f32 %v1722, %v1797
  %v1806 = vadd.f32 %v1723, %v1798
  %v1807 = vadd.f32 %v1724, %v1799
  %v1808 = vadd.f32 %v1725, %v1800
  %v1809 = vadd.f32 %v1726, %v1801
  %1810 = vrot.lane.b32.xlu0 %v1593, 15
  %v1811 = vpop.permute.xlu0 %1810
  %1812 = vrot.lane.b32.xlu0 %v1597, 15
  %v1813 = vpop.permute.xlu0 %1812
  %1814 = vrot.lane.b32.xlu0 %v1595, 15
  %v1815 = vpop.permute.xlu0 %1814
  %1816 = vrot.lane.b32.xlu0 %v1599, 15
  %v1817 = vpop.permute.xlu0 %1816
  %1818 = vrot.lane.b32.xlu0 %v1636, 15
  %v1819 = vpop.permute.xlu0 %1818
  %1820 = vrot.lane.b32.xlu0 %v1640, 15
  %v1821 = vpop.permute.xlu0 %1820
  %1822 = vrot.lane.b32.xlu0 %v1638, 15
  %v1823 = vpop.permute.xlu0 %1822
  %1824 = vrot.lane.b32.xlu0 %v1642, 15
  %v1825 = vpop.permute.xlu0 %1824
  %v1826 = vsel %vm131, %v1819, %v1823
  %v1827 = vsel %vm131, %v1821, %v1825
  %v1828 = vsel %vm131, %v1815, %v1819
  %v1829 = vsel %vm131, %v1817, %v1821
  %v1830 = vsel %vm131, %v1811, %v1815
  %v1831 = vsel %vm131, %v1813, %v1817
  %v1832 = vsel %vm131, %v1823, %v1811
  %v1833 = vsel %vm131, %v1825, %v1813
  %v1834 = vld [vmem:[%s136] ss:$8 sm:$0xf]
  %v1836 = vlaneseq
  %v1837 = vshrl.u32 %v1836, 7
  %v1838 = vsub.s32 0, %v1837
  %v1839 = vrot.slane %v1834, %v1838
  %v1840 = vlaneseq
  %v1841 = vshrl.u32 %v1840, 7
  %v1842 = vsub.s32 1, %v1841
  %v1843 = vrot.slane %v1834, %v1842
  %v1844 = vlaneseq
  %v1845 = vshrl.u32 %v1844, 7
  %v1846 = vsub.s32 2, %v1845
  %v1847 = vrot.slane %v1834, %v1846
  %v1848 = vlaneseq
  %v1849 = vshrl.u32 %v1848, 7
  %v1850 = vsub.s32 3, %v1849
  %v1851 = vrot.slane %v1834, %v1850
  %v1856 = vmul.f32 %v1832, %v1839
  %v1857 = vmul.f32 %v1830, %v1843
  %v1858 = vmul.f32 %v1828, %v1847
  %v1859 = vmul.f32 %v1826, %v1851
  %v1860 = vmul.f32 %v1833, %v1839
  %v1861 = vmul.f32 %v1831, %v1843
  %v1862 = vmul.f32 %v1829, %v1847
  %v1863 = vmul.f32 %v1827, %v1851
  %s1864 = scalar_lea.vmem %s5, 176
  %v1865 = vld [vmem:[%s1864] sm:$0xff]
  %v1866 = vld [vmem:[%s1864 + $0x8] sm:$0xff]
  %1868 = vset.pattern.permute.xlu0 0
  %1869 = vperm.xlu0 %1868, %v1865
  %v1870 = vpop.permute.xlu0 %1869
  %1873 = vset.pattern.permute.xlu0 0
  %1874 = vperm.xlu0 %1873, %v1866
  %v1875 = vpop.permute.xlu0 %1874
  %v1877 = vmul.f32 %v1856, %v1870
  %v1878 = vmul.f32 %v1857, %v1870
  %v1879 = vmul.f32 %v1858, %v1870
  %v1880 = vmul.f32 %v1859, %v1870
  %v1881 = vmul.f32 %v1860, %v1875
  %v1882 = vmul.f32 %v1861, %v1875
  %v1883 = vmul.f32 %v1862, %v1875
  %v1884 = vmul.f32 %v1863, %v1875
  %v1885 = vadd.f32 %v1802, %v1877
  %v1886 = vadd.f32 %v1803, %v1878
  %v1887 = vadd.f32 %v1804, %v1879
  %v1888 = vadd.f32 %v1805, %v1880
  %v1889 = vadd.f32 %v1806, %v1881
  %v1890 = vadd.f32 %v1807, %v1882
  %v1891 = vadd.f32 %v1808, %v1883
  %v1892 = vadd.f32 %v1809, %v1884
  %1893 = vrot.lane.b32.xlu0 %v1593, 1
  %v1894 = vpop.permute.xlu0 %1893
  %1895 = vrot.lane.b32.xlu0 %v1597, 1
  %v1896 = vpop.permute.xlu0 %1895
  %1897 = vrot.lane.b32.xlu0 %v1595, 1
  %v1898 = vpop.permute.xlu0 %1897
  %1899 = vrot.lane.b32.xlu0 %v1599, 1
  %v1900 = vpop.permute.xlu0 %1899
  %1901 = vrot.lane.b32.xlu0 %v1636, 1
  %v1902 = vpop.permute.xlu0 %1901
  %1903 = vrot.lane.b32.xlu0 %v1640, 1
  %v1904 = vpop.permute.xlu0 %1903
  %1905 = vrot.lane.b32.xlu0 %v1638, 1
  %v1906 = vpop.permute.xlu0 %1905
  %1907 = vrot.lane.b32.xlu0 %v1642, 1
  %v1908 = vpop.permute.xlu0 %1907
  %v1909 = vsel %vm175, %v1902, %v1906
  %v1910 = vsel %vm175, %v1904, %v1908
  %v1911 = vsel %vm175, %v1898, %v1902
  %v1912 = vsel %vm175, %v1900, %v1904
  %v1913 = vsel %vm175, %v1894, %v1898
  %v1914 = vsel %vm175, %v1896, %v1900
  %v1915 = vsel %vm175, %v1906, %v1894
  %v1916 = vsel %vm175, %v1908, %v1896
  %v1917 = vld [vmem:[%s180] ss:$8 sm:$0xf]
  %v1919 = vlaneseq
  %v1920 = vshrl.u32 %v1919, 7
  %v1921 = vsub.s32 0, %v1920
  %v1922 = vrot.slane %v1917, %v1921
  %v1923 = vlaneseq
  %v1924 = vshrl.u32 %v1923, 7
  %v1925 = vsub.s32 1, %v1924
  %v1926 = vrot.slane %v1917, %v1925
  %v1927 = vlaneseq
  %v1928 = vshrl.u32 %v1927, 7
  %v1929 = vsub.s32 2, %v1928
  %v1930 = vrot.slane %v1917, %v1929
  %v1931 = vlaneseq
  %v1932 = vshrl.u32 %v1931, 7
  %v1933 = vsub.s32 3, %v1932
  %v1934 = vrot.slane %v1917, %v1933
  %v1939 = vmul.f32 %v1915, %v1922
  %v1940 = vmul.f32 %v1913, %v1926
  %v1941 = vmul.f32 %v1911, %v1930
  %v1942 = vmul.f32 %v1909, %v1934
  %v1943 = vmul.f32 %v1916, %v1922
  %v1944 = vmul.f32 %v1914, %v1926
  %v1945 = vmul.f32 %v1912, %v1930
  %v1946 = vmul.f32 %v1910, %v1934
  %s1947 = scalar_lea.vmem %s5, 192
  %v1948 = vld [vmem:[%s1947] sm:$0xff]
  %v1949 = vld [vmem:[%s1947 + $0x8] sm:$0xff]
  %1951 = vset.pattern.permute.xlu0 0
  %1952 = vperm.xlu0 %1951, %v1948
  %v1953 = vpop.permute.xlu0 %1952
  %1956 = vset.pattern.permute.xlu0 0
  %1957 = vperm.xlu0 %1956, %v1949
  %v1958 = vpop.permute.xlu0 %1957
  %v1960 = vmul.f32 %v1939, %v1953
  %v1961 = vmul.f32 %v1940, %v1953
  %v1962 = vmul.f32 %v1941, %v1953
  %v1963 = vmul.f32 %v1942, %v1953
  %v1964 = vmul.f32 %v1943, %v1958
  %v1965 = vmul.f32 %v1944, %v1958
  %v1966 = vmul.f32 %v1945, %v1958
  %v1967 = vmul.f32 %v1946, %v1958
  %v1968 = vadd.f32 %v1885, %v1960
  %v1969 = vadd.f32 %v1886, %v1961
  %v1970 = vadd.f32 %v1887, %v1962
  %v1971 = vadd.f32 %v1888, %v1963
  %v1972 = vadd.f32 %v1889, %v1964
  %v1973 = vadd.f32 %v1890, %v1965
  %v1974 = vadd.f32 %v1891, %v1966
  %v1975 = vadd.f32 %v1892, %v1967
  %s1976 = scalar_lea.vmem %s5, 208
  %v1977 = vld [vmem:[%s1976] sm:$0xff]
  %v1978 = vld [vmem:[%s1976 + $0x8] sm:$0xff]
  %1980 = vset.pattern.permute.xlu0 0
  %1981 = vperm.xlu0 %1980, %v1977
  %v1982 = vpop.permute.xlu0 %1981
  %1985 = vset.pattern.permute.xlu0 0
  %1986 = vperm.xlu0 %1985, %v1978
  %v1987 = vpop.permute.xlu0 %1986
  %v1989 = vmul.f32 %v1593, %v1982
  %v1990 = vmul.f32 %v1595, %v1982
  %v1991 = vmul.f32 %v1636, %v1982
  %v1992 = vmul.f32 %v1638, %v1982
  %v1993 = vmul.f32 %v1597, %v1987
  %v1994 = vmul.f32 %v1599, %v1987
  %v1995 = vmul.f32 %v1640, %v1987
  %v1996 = vmul.f32 %v1642, %v1987
  %v1997 = vadd.f32 %v1968, %v1989
  %v1998 = vadd.f32 %v1969, %v1990
  %v1999 = vadd.f32 %v1970, %v1991
  %v2000 = vadd.f32 %v1971, %v1992
  %v2001 = vadd.f32 %v1972, %v1993
  %v2002 = vadd.f32 %v1973, %v1994
  %v2003 = vadd.f32 %v1974, %v1995
  %v2004 = vadd.f32 %v1975, %v1996
  %2005 = vrot.lane.b32.xlu0 %v1593, 127
  %v2006 = vpop.permute.xlu0 %2005
  %2007 = vrot.lane.b32.xlu0 %v1597, 127
  %v2008 = vpop.permute.xlu0 %2007
  %2009 = vrot.lane.b32.xlu0 %v1595, 127
  %v2010 = vpop.permute.xlu0 %2009
  %2011 = vrot.lane.b32.xlu0 %v1599, 127
  %v2012 = vpop.permute.xlu0 %2011
  %2013 = vrot.lane.b32.xlu0 %v1636, 127
  %v2014 = vpop.permute.xlu0 %2013
  %2015 = vrot.lane.b32.xlu0 %v1640, 127
  %v2016 = vpop.permute.xlu0 %2015
  %2017 = vrot.lane.b32.xlu0 %v1638, 127
  %v2018 = vpop.permute.xlu0 %2017
  %2019 = vrot.lane.b32.xlu0 %v1642, 127
  %v2020 = vpop.permute.xlu0 %2019
  %v2021 = vsel %vm223, %v2014, %v2018
  %v2022 = vsel %vm223, %v2016, %v2020
  %v2023 = vsel %vm223, %v2010, %v2014
  %v2024 = vsel %vm223, %v2012, %v2016
  %v2025 = vsel %vm223, %v2006, %v2010
  %v2026 = vsel %vm223, %v2008, %v2012
  %v2027 = vsel %vm223, %v2018, %v2006
  %v2028 = vsel %vm223, %v2020, %v2008
  %v2029 = vld [vmem:[%s228] ss:$8 sm:$0xf]
  %v2031 = vlaneseq
  %v2032 = vshrl.u32 %v2031, 7
  %v2033 = vsub.s32 0, %v2032
  %v2034 = vrot.slane %v2029, %v2033
  %v2035 = vlaneseq
  %v2036 = vshrl.u32 %v2035, 7
  %v2037 = vsub.s32 1, %v2036
  %v2038 = vrot.slane %v2029, %v2037
  %v2039 = vlaneseq
  %v2040 = vshrl.u32 %v2039, 7
  %v2041 = vsub.s32 2, %v2040
  %v2042 = vrot.slane %v2029, %v2041
  %v2043 = vlaneseq
  %v2044 = vshrl.u32 %v2043, 7
  %v2045 = vsub.s32 3, %v2044
  %v2046 = vrot.slane %v2029, %v2045
  %v2051 = vmul.f32 %v2025, %v2034
  %v2052 = vmul.f32 %v2023, %v2038
  %v2053 = vmul.f32 %v2021, %v2042
  %v2054 = vmul.f32 %v2027, %v2046
  %v2055 = vmul.f32 %v2026, %v2034
  %v2056 = vmul.f32 %v2024, %v2038
  %v2057 = vmul.f32 %v2022, %v2042
  %v2058 = vmul.f32 %v2028, %v2046
  %s2059 = scalar_lea.vmem %s5, 224
  %v2060 = vld [vmem:[%s2059] sm:$0xff]
  %v2061 = vld [vmem:[%s2059 + $0x8] sm:$0xff]
  %2063 = vset.pattern.permute.xlu0 0
  %2064 = vperm.xlu0 %2063, %v2060
  %v2065 = vpop.permute.xlu0 %2064
  %2068 = vset.pattern.permute.xlu0 0
  %2069 = vperm.xlu0 %2068, %v2061
  %v2070 = vpop.permute.xlu0 %2069
  %v2072 = vmul.f32 %v2051, %v2065
  %v2073 = vmul.f32 %v2052, %v2065
  %v2074 = vmul.f32 %v2053, %v2065
  %v2075 = vmul.f32 %v2054, %v2065
  %v2076 = vmul.f32 %v2055, %v2070
  %v2077 = vmul.f32 %v2056, %v2070
  %v2078 = vmul.f32 %v2057, %v2070
  %v2079 = vmul.f32 %v2058, %v2070
  %v2080 = vadd.f32 %v1997, %v2072
  %v2081 = vadd.f32 %v1998, %v2073
  %v2082 = vadd.f32 %v1999, %v2074
  %v2083 = vadd.f32 %v2000, %v2075
  %v2084 = vadd.f32 %v2001, %v2076
  %v2085 = vadd.f32 %v2002, %v2077
  %v2086 = vadd.f32 %v2003, %v2078
  %v2087 = vadd.f32 %v2004, %v2079
  %2088 = vrot.lane.b32.xlu0 %v1593, 113
  %v2089 = vpop.permute.xlu0 %2088
  %2090 = vrot.lane.b32.xlu0 %v1597, 113
  %v2091 = vpop.permute.xlu0 %2090
  %2092 = vrot.lane.b32.xlu0 %v1595, 113
  %v2093 = vpop.permute.xlu0 %2092
  %2094 = vrot.lane.b32.xlu0 %v1599, 113
  %v2095 = vpop.permute.xlu0 %2094
  %2096 = vrot.lane.b32.xlu0 %v1636, 113
  %v2097 = vpop.permute.xlu0 %2096
  %2098 = vrot.lane.b32.xlu0 %v1640, 113
  %v2099 = vpop.permute.xlu0 %2098
  %2100 = vrot.lane.b32.xlu0 %v1638, 113
  %v2101 = vpop.permute.xlu0 %2100
  %2102 = vrot.lane.b32.xlu0 %v1642, 113
  %v2103 = vpop.permute.xlu0 %2102
  %v2104 = vsel %vm267, %v2097, %v2101
  %v2105 = vsel %vm267, %v2099, %v2103
  %v2106 = vsel %vm267, %v2093, %v2097
  %v2107 = vsel %vm267, %v2095, %v2099
  %v2108 = vsel %vm267, %v2089, %v2093
  %v2109 = vsel %vm267, %v2091, %v2095
  %v2110 = vsel %vm267, %v2101, %v2089
  %v2111 = vsel %vm267, %v2103, %v2091
  %v2112 = vld [vmem:[%s272] ss:$8 sm:$0xf]
  %v2114 = vlaneseq
  %v2115 = vshrl.u32 %v2114, 7
  %v2116 = vsub.s32 0, %v2115
  %v2117 = vrot.slane %v2112, %v2116
  %v2118 = vlaneseq
  %v2119 = vshrl.u32 %v2118, 7
  %v2120 = vsub.s32 1, %v2119
  %v2121 = vrot.slane %v2112, %v2120
  %v2122 = vlaneseq
  %v2123 = vshrl.u32 %v2122, 7
  %v2124 = vsub.s32 2, %v2123
  %v2125 = vrot.slane %v2112, %v2124
  %v2126 = vlaneseq
  %v2127 = vshrl.u32 %v2126, 7
  %v2128 = vsub.s32 3, %v2127
  %v2129 = vrot.slane %v2112, %v2128
  %v2134 = vmul.f32 %v2108, %v2117
  %v2135 = vmul.f32 %v2106, %v2121
  %v2136 = vmul.f32 %v2104, %v2125
  %v2137 = vmul.f32 %v2110, %v2129
  %v2138 = vmul.f32 %v2109, %v2117
  %v2139 = vmul.f32 %v2107, %v2121
  %v2140 = vmul.f32 %v2105, %v2125
  %v2141 = vmul.f32 %v2111, %v2129
  %s2142 = scalar_lea.vmem %s5, 240
  %v2143 = vld [vmem:[%s2142] sm:$0xff]
  %v2144 = vld [vmem:[%s2142 + $0x8] sm:$0xff]
  %2146 = vset.pattern.permute.xlu0 0
  %2147 = vperm.xlu0 %2146, %v2143
  %v2148 = vpop.permute.xlu0 %2147
  %2151 = vset.pattern.permute.xlu0 0
  %2152 = vperm.xlu0 %2151, %v2144
  %v2153 = vpop.permute.xlu0 %2152
  %v2155 = vmul.f32 %v2134, %v2148
  %v2156 = vmul.f32 %v2135, %v2148
  %v2157 = vmul.f32 %v2136, %v2148
  %v2158 = vmul.f32 %v2137, %v2148
  %v2159 = vmul.f32 %v2138, %v2153
  %v2160 = vmul.f32 %v2139, %v2153
  %v2161 = vmul.f32 %v2140, %v2153
  %v2162 = vmul.f32 %v2141, %v2153
  %v2163 = vadd.f32 %v2080, %v2155
  %v2164 = vadd.f32 %v2081, %v2156
  %v2165 = vadd.f32 %v2082, %v2157
  %v2166 = vadd.f32 %v2083, %v2158
  %v2167 = vadd.f32 %v2084, %v2159
  %v2168 = vadd.f32 %v2085, %v2160
  %v2169 = vadd.f32 %v2086, %v2161
  %v2170 = vadd.f32 %v2087, %v2162
  %2171 = vrot.lane.b32.xlu0 %v1593, 112
  %v2172 = vpop.permute.xlu0 %2171
  %2173 = vrot.lane.b32.xlu0 %v1597, 112
  %v2174 = vpop.permute.xlu0 %2173
  %2175 = vrot.lane.b32.xlu0 %v1595, 112
  %v2176 = vpop.permute.xlu0 %2175
  %2177 = vrot.lane.b32.xlu0 %v1599, 112
  %v2178 = vpop.permute.xlu0 %2177
  %2179 = vrot.lane.b32.xlu0 %v1636, 112
  %v2180 = vpop.permute.xlu0 %2179
  %2181 = vrot.lane.b32.xlu0 %v1640, 112
  %v2182 = vpop.permute.xlu0 %2181
  %2183 = vrot.lane.b32.xlu0 %v1638, 112
  %v2184 = vpop.permute.xlu0 %2183
  %2185 = vrot.lane.b32.xlu0 %v1642, 112
  %v2186 = vpop.permute.xlu0 %2185
  %v2187 = vsel %vm311, %v2180, %v2184
  %v2188 = vsel %vm311, %v2182, %v2186
  %v2189 = vsel %vm311, %v2176, %v2180
  %v2190 = vsel %vm311, %v2178, %v2182
  %v2191 = vsel %vm311, %v2172, %v2176
  %v2192 = vsel %vm311, %v2174, %v2178
  %v2193 = vsel %vm311, %v2184, %v2172
  %v2194 = vsel %vm311, %v2186, %v2174
  %v2195 = vld [vmem:[%s316] ss:$8 sm:$0xf]
  %v2197 = vlaneseq
  %v2198 = vshrl.u32 %v2197, 7
  %v2199 = vsub.s32 0, %v2198
  %v2200 = vrot.slane %v2195, %v2199
  %v2201 = vlaneseq
  %v2202 = vshrl.u32 %v2201, 7
  %v2203 = vsub.s32 1, %v2202
  %v2204 = vrot.slane %v2195, %v2203
  %v2205 = vlaneseq
  %v2206 = vshrl.u32 %v2205, 7
  %v2207 = vsub.s32 2, %v2206
  %v2208 = vrot.slane %v2195, %v2207
  %v2209 = vlaneseq
  %v2210 = vshrl.u32 %v2209, 7
  %v2211 = vsub.s32 3, %v2210
  %v2212 = vrot.slane %v2195, %v2211
  %v2217 = vmul.f32 %v2191, %v2200
  %v2218 = vmul.f32 %v2189, %v2204
  %v2219 = vmul.f32 %v2187, %v2208
  %v2220 = vmul.f32 %v2193, %v2212
  %v2221 = vmul.f32 %v2192, %v2200
  %v2222 = vmul.f32 %v2190, %v2204
  %v2223 = vmul.f32 %v2188, %v2208
  %v2224 = vmul.f32 %v2194, %v2212
  %s2225 = scalar_lea.vmem %s5, 256
  %v2226 = vld [vmem:[%s2225] sm:$0xff]
  %v2227 = vld [vmem:[%s2225 + $0x8] sm:$0xff]
  %2229 = vset.pattern.permute.xlu0 0
  %2230 = vperm.xlu0 %2229, %v2226
  %v2231 = vpop.permute.xlu0 %2230
  %2234 = vset.pattern.permute.xlu0 0
  %2235 = vperm.xlu0 %2234, %v2227
  %v2236 = vpop.permute.xlu0 %2235
  %v2238 = vmul.f32 %v2217, %v2231
  %v2239 = vmul.f32 %v2218, %v2231
  %v2240 = vmul.f32 %v2219, %v2231
  %v2241 = vmul.f32 %v2220, %v2231
  %v2242 = vmul.f32 %v2221, %v2236
  %v2243 = vmul.f32 %v2222, %v2236
  %v2244 = vmul.f32 %v2223, %v2236
  %v2245 = vmul.f32 %v2224, %v2236
  %v2246 = vadd.f32 %v2163, %v2238
  %v2247 = vadd.f32 %v2164, %v2239
  %v2248 = vadd.f32 %v2165, %v2240
  %v2249 = vadd.f32 %v2166, %v2241
  %v2250 = vadd.f32 %v2167, %v2242
  %v2251 = vadd.f32 %v2168, %v2243
  %v2252 = vadd.f32 %v2169, %v2244
  %v2253 = vadd.f32 %v2170, %v2245
  %2254 = vrot.lane.b32.xlu0 %v1593, 111
  %v2255 = vpop.permute.xlu0 %2254
  %2256 = vrot.lane.b32.xlu0 %v1597, 111
  %v2257 = vpop.permute.xlu0 %2256
  %2258 = vrot.lane.b32.xlu0 %v1595, 111
  %v2259 = vpop.permute.xlu0 %2258
  %2260 = vrot.lane.b32.xlu0 %v1599, 111
  %v2261 = vpop.permute.xlu0 %2260
  %2262 = vrot.lane.b32.xlu0 %v1636, 111
  %v2263 = vpop.permute.xlu0 %2262
  %2264 = vrot.lane.b32.xlu0 %v1640, 111
  %v2265 = vpop.permute.xlu0 %2264
  %2266 = vrot.lane.b32.xlu0 %v1638, 111
  %v2267 = vpop.permute.xlu0 %2266
  %2268 = vrot.lane.b32.xlu0 %v1642, 111
  %v2269 = vpop.permute.xlu0 %2268
  %v2270 = vsel %vm355, %v2263, %v2267
  %v2271 = vsel %vm355, %v2265, %v2269
  %v2272 = vsel %vm355, %v2259, %v2263
  %v2273 = vsel %vm355, %v2261, %v2265
  %v2274 = vsel %vm355, %v2255, %v2259
  %v2275 = vsel %vm355, %v2257, %v2261
  %v2276 = vsel %vm355, %v2267, %v2255
  %v2277 = vsel %vm355, %v2269, %v2257
  %v2278 = vld [vmem:[%s360] ss:$8 sm:$0xf]
  %v2280 = vlaneseq
  %v2281 = vshrl.u32 %v2280, 7
  %v2282 = vsub.s32 0, %v2281
  %v2283 = vrot.slane %v2278, %v2282
  %v2284 = vlaneseq
  %v2285 = vshrl.u32 %v2284, 7
  %v2286 = vsub.s32 1, %v2285
  %v2287 = vrot.slane %v2278, %v2286
  %v2288 = vlaneseq
  %v2289 = vshrl.u32 %v2288, 7
  %v2290 = vsub.s32 2, %v2289
  %v2291 = vrot.slane %v2278, %v2290
  %v2292 = vlaneseq
  %v2293 = vshrl.u32 %v2292, 7
  %v2294 = vsub.s32 3, %v2293
  %v2295 = vrot.slane %v2278, %v2294
  %v2300 = vmul.f32 %v2274, %v2283
  %v2301 = vmul.f32 %v2272, %v2287
  %v2302 = vmul.f32 %v2270, %v2291
  %v2303 = vmul.f32 %v2276, %v2295
  %v2304 = vmul.f32 %v2275, %v2283
  %v2305 = vmul.f32 %v2273, %v2287
  %v2306 = vmul.f32 %v2271, %v2291
  %v2307 = vmul.f32 %v2277, %v2295
  %s2308 = scalar_lea.vmem %s5, 272
  %v2309 = vld [vmem:[%s2308] sm:$0xff]
  %v2310 = vld [vmem:[%s2308 + $0x8] sm:$0xff]
  %2312 = vset.pattern.permute.xlu0 0
  %2313 = vperm.xlu0 %2312, %v2309
  %v2314 = vpop.permute.xlu0 %2313
  %2317 = vset.pattern.permute.xlu0 0
  %2318 = vperm.xlu0 %2317, %v2310
  %v2319 = vpop.permute.xlu0 %2318
  %v2321 = vmul.f32 %v2300, %v2314
  %v2322 = vmul.f32 %v2301, %v2314
  %v2323 = vmul.f32 %v2302, %v2314
  %v2324 = vmul.f32 %v2303, %v2314
  %v2325 = vmul.f32 %v2304, %v2319
  %v2326 = vmul.f32 %v2305, %v2319
  %v2327 = vmul.f32 %v2306, %v2319
  %v2328 = vmul.f32 %v2307, %v2319
  %v2329 = vadd.f32 %v2246, %v2321
  %v2330 = vadd.f32 %v2247, %v2322
  %v2331 = vadd.f32 %v2248, %v2323
  %v2332 = vadd.f32 %v2249, %v2324
  %v2333 = vadd.f32 %v2250, %v2325
  %v2334 = vadd.f32 %v2251, %v2326
  %v2335 = vadd.f32 %v2252, %v2327
  %v2336 = vadd.f32 %v2253, %v2328
  %v2337 = vmax.f32 %v1593, 0.0
  %v2338 = vmax.f32 %v1595, 0.0
  %v2339 = vmax.f32 %v1636, 0.0
  %v2340 = vmax.f32 %v1638, 0.0
  %v2341 = vmax.f32 %v1597, 0.0
  %v2342 = vmax.f32 %v1599, 0.0
  %v2343 = vmax.f32 %v1640, 0.0
  %v2344 = vmax.f32 %v1642, 0.0
  %2345 = vst [vmem:[#allocation4] sm:$0xff] %v2337
  %2346 = vst [vmem:[#allocation4 + $0x8] sm:$0xff] %v2338
  %2347 = vst [vmem:[#allocation4 + $0x10] sm:$0xff] %v2339
  %2348 = vst [vmem:[#allocation4 + $0x18] sm:$0xff] %v2340
  %2349 = vst [vmem:[#allocation4 + $0x20] sm:$0xff] %v2341
  %2350 = vst [vmem:[#allocation4 + $0x28] sm:$0xff] %v2342
  %2351 = vst [vmem:[#allocation4 + $0x30] sm:$0xff] %v2343
  %2352 = vst [vmem:[#allocation4 + $0x38] sm:$0xff] %v2344
  %v2353 = vmax.f32 %v2329, 0.0
  %v2354 = vmax.f32 %v2330, 0.0
  %v2355 = vmax.f32 %v2331, 0.0
  %v2356 = vmax.f32 %v2332, 0.0
  %v2357 = vmax.f32 %v2333, 0.0
  %v2358 = vmax.f32 %v2334, 0.0
  %v2359 = vmax.f32 %v2335, 0.0
  %v2360 = vmax.f32 %v2336, 0.0
  %2361 = vst [vmem:[#allocation4 + $0x40] sm:$0xff] %v2353
  %2362 = vst [vmem:[#allocation4 + $0x48] sm:$0xff] %v2354
  %2363 = vst [vmem:[#allocation4 + $0x50] sm:$0xff] %v2355
  %2364 = vst [vmem:[#allocation4 + $0x58] sm:$0xff] %v2356
  %2365 = vst [vmem:[#allocation4 + $0x60] sm:$0xff] %v2357
  %2366 = vst [vmem:[#allocation4 + $0x68] sm:$0xff] %v2358
  %2367 = vst [vmem:[#allocation4 + $0x70] sm:$0xff] %v2359
  %2368 = vst [vmem:[#allocation4 + $0x78] sm:$0xff] %v2360
  %v2369 = vld [vmem:[#allocation4] sm:$0xff]
  %v2370 = vld [vmem:[#allocation4 + $0x8] sm:$0xff]
  %v2371 = vld [vmem:[#allocation4 + $0x10] sm:$0xff]
  %v2372 = vld [vmem:[#allocation4 + $0x18] sm:$0xff]
  %v2373 = vld [vmem:[#allocation4 + $0x20] sm:$0xff]
  %v2374 = vld [vmem:[#allocation4 + $0x28] sm:$0xff]
  %v2375 = vld [vmem:[#allocation4 + $0x30] sm:$0xff]
  %v2376 = vld [vmem:[#allocation4 + $0x38] sm:$0xff]
  %v2377 = vld [vmem:[#allocation4 + $0x40] sm:$0xff]
  %v2378 = vld [vmem:[#allocation4 + $0x48] sm:$0xff]
  %v2379 = vld [vmem:[#allocation4 + $0x50] sm:$0xff]
  %v2380 = vld [vmem:[#allocation4 + $0x58] sm:$0xff]
  %v2381 = vld [vmem:[#allocation4 + $0x60] sm:$0xff]
  %v2382 = vld [vmem:[#allocation4 + $0x68] sm:$0xff]
  %v2383 = vld [vmem:[#allocation4 + $0x70] sm:$0xff]
  %v2384 = vld [vmem:[#allocation4 + $0x78] sm:$0xff]
  %s2385 = scalar_lea.vmem %s4, 16
  %v2386 = vld [vmem:[%s2385] sm:$0xf]
  %v2387 = vld [vmem:[%s2385 + $0x4] sm:$0xf]
  %v2388 = vpack.c.bf16 %v2373, %v2369
  %v2389 = vpack.c.bf16 %v2374, %v2370
  %v2390 = vpack.c.bf16 %v2375, %v2371
  %v2391 = vpack.c.bf16 %v2376, %v2372
  %v2392 = vpack.c.bf16 %v2381, %v2377
  %v2393 = vpack.c.bf16 %v2382, %v2378
  %v2394 = vpack.c.bf16 %v2383, %v2379
  %v2395 = vpack.c.bf16 %v2384, %v2380
  %v2398 = vunpack.c.l.b16 %v2386
  %v2399 = vunpack.c.l.b16 %v2387
  %v2400 = vpack.c.b16 %v2399, %v2398
  %v2402 = vsel %vm709, %v2400, 0
  %2404 = vmatprep.subr.bf16.mxu0 %v2389
  %2405 = vmatpush1.bf16.msra.mxu0 %v2388
  %2406 = vmatprep.subr.bf16.mxu0 %v2393
  %2407 = vmatpush1.bf16.msra.mxu0 %v2392
  %2408 = vmatprep.subr.bf16.mxu0 0
  %2409 = vmatpush1.bf16.msra.mxu0 0
  %2410 = vmatprep.subr.bf16.mxu0 0
  %2411 = vmatpush1.bf16.msra.mxu0 0
  %2412 = vmatprep.subr.bf16.mxu0 0
  %2413 = vmatpush1.bf16.msra.mxu0 0
  %2414 = vmatprep.subr.bf16.mxu0 0
  %2415 = vmatpush1.bf16.msra.mxu0 0
  %2416 = vmatprep.subr.bf16.mxu0 0
  %2417 = vmatpush1.bf16.msra.mxu0 0
  %2418 = vmatprep.subr.bf16.mxu0 0
  %2419 = vmatpush1.bf16.msra.mxu0 0
  %2420 = vmatprep.subr.bf16.mxu0 0
  %2421 = vmatpush1.bf16.msra.mxu0 0
  %2422 = vmatprep.subr.bf16.mxu0 0
  %2423 = vmatpush1.bf16.msra.mxu0 0
  %2424 = vmatprep.subr.bf16.mxu0 0
  %2425 = vmatpush1.bf16.msra.mxu0 0
  %2426 = vmatprep.subr.bf16.mxu0 0
  %2427 = vmatpush1.bf16.msra.mxu0 0
  %2428 = vmatprep.subr.bf16.mxu0 0
  %2429 = vmatpush1.bf16.msra.mxu0 0
  %2430 = vmatprep.subr.bf16.mxu0 0
  %2431 = vmatpush1.bf16.msra.mxu0 0
  %2432 = vmatprep.subr.bf16.mxu0 0
  %2433 = vmatpush1.bf16.msra.mxu0 0
  %2434 = vmatprep.subr.bf16.mxu0 0
  %2435 = vmatpush1.bf16.msra.mxu0 0
  %2436 = vmatprep.mubr.bf16.mxu0 0
  %2437 = vmatmul.mubr.bf16.gmra.mrb[0].mxu0 %v2402
  %v2438 = vpop.f32.mrb[0].mxu0
  %v2439 = vadd.f32 0.0, %v2438
  %v2440 = vpop.f32.mrb[0].mxu0
  %v2441 = vadd.f32 0.0, %v2440
  %v2442 = vpop.f32.mrb[0].mxu0
  %v2443 = vadd.f32 0.0, %v2442
  %v2444 = vpop.f32.mrb[0].mxu0
  %v2445 = vadd.f32 0.0, %v2444
  %2446 = vdwg.mxu0
  %2447 = vmatprep.subr.bf16.mxu0 %v2391
  %2448 = vmatpush1.bf16.msra.mxu0 %v2390
  %2449 = vmatprep.subr.bf16.mxu0 %v2395
  %2450 = vmatpush1.bf16.msra.mxu0 %v2394
  %2451 = vmatprep.subr.bf16.mxu0 0
  %2452 = vmatpush1.bf16.msra.mxu0 0
  %2453 = vmatprep.subr.bf16.mxu0 0
  %2454 = vmatpush1.bf16.msra.mxu0 0
  %2455 = vmatprep.subr.bf16.mxu0 0
  %2456 = vmatpush1.bf16.msra.mxu0 0
  %2457 = vmatprep.subr.bf16.mxu0 0
  %2458 = vmatpush1.bf16.msra.mxu0 0
  %2459 = vmatprep.subr.bf16.mxu0 0
  %2460 = vmatpush1.bf16.msra.mxu0 0
  %2461 = vmatprep.subr.bf16.mxu0 0
  %2462 = vmatpush1.bf16.msra.mxu0 0
  %2463 = vmatprep.subr.bf16.mxu0 0
  %2464 = vmatpush1.bf16.msra.mxu0 0
  %2465 = vmatprep.subr.bf16.mxu0 0
  %2466 = vmatpush1.bf16.msra.mxu0 0
  %2467 = vmatprep.subr.bf16.mxu0 0
  %2468 = vmatpush1.bf16.msra.mxu0 0
  %2469 = vmatprep.subr.bf16.mxu0 0
  %2470 = vmatpush1.bf16.msra.mxu0 0
  %2471 = vmatprep.subr.bf16.mxu0 0
  %2472 = vmatpush1.bf16.msra.mxu0 0
  %2473 = vmatprep.subr.bf16.mxu0 0
  %2474 = vmatpush1.bf16.msra.mxu0 0
  %2475 = vmatprep.subr.bf16.mxu0 0
  %2476 = vmatpush1.bf16.msra.mxu0 0
  %2477 = vmatprep.subr.bf16.mxu0 0
  %2478 = vmatpush1.bf16.msra.mxu0 0
  %2479 = vmatprep.mubr.bf16.mxu0 0
  %2480 = vmatmul.mubr.bf16.gmra.mrb[0].mxu0 %v2402
  %v2481 = vpop.f32.mrb[0].mxu0
  %v2482 = vadd.f32 0.0, %v2481
  %v2483 = vpop.f32.mrb[0].mxu0
  %v2484 = vadd.f32 0.0, %v2483
  %v2485 = vpop.f32.mrb[0].mxu0
  %v2486 = vadd.f32 0.0, %v2485
  %v2487 = vpop.f32.mrb[0].mxu0
  %v2488 = vadd.f32 0.0, %v2487
  %2489 = vdwg.mxu0
  %2490 = vrot.lane.b32.xlu0 %v2439, 17
  %v2491 = vpop.permute.xlu0 %2490
  %2492 = vrot.lane.b32.xlu0 %v2443, 17
  %v2493 = vpop.permute.xlu0 %2492
  %2494 = vrot.lane.b32.xlu0 %v2441, 17
  %v2495 = vpop.permute.xlu0 %2494
  %2496 = vrot.lane.b32.xlu0 %v2445, 17
  %v2497 = vpop.permute.xlu0 %2496
  %2498 = vrot.lane.b32.xlu0 %v2482, 17
  %v2499 = vpop.permute.xlu0 %2498
  %2500 = vrot.lane.b32.xlu0 %v2486, 17
  %v2501 = vpop.permute.xlu0 %2500
  %2502 = vrot.lane.b32.xlu0 %v2484, 17
  %v2503 = vpop.permute.xlu0 %2502
  %2504 = vrot.lane.b32.xlu0 %v2488, 17
  %v2505 = vpop.permute.xlu0 %2504
  %v2506 = vsel %vm44, %v2499, %v2503
  %v2507 = vsel %vm44, %v2501, %v2505
  %v2508 = vsel %vm44, %v2495, %v2499
  %v2509 = vsel %vm44, %v2497, %v2501
  %v2510 = vsel %vm44, %v2491, %v2495
  %v2511 = vsel %vm44, %v2493, %v2497
  %v2512 = vsel %vm44, %v2503, %v2491
  %v2513 = vsel %vm44, %v2505, %v2493
  %v2514 = vld [vmem:[%s1] ss:$8 sm:$0xf]
  %v2516 = vlaneseq
  %v2517 = vshrl.u32 %v2516, 7
  %v2518 = vsub.s32 0, %v2517
  %v2519 = vrot.slane %v2514, %v2518
  %v2520 = vlaneseq
  %v2521 = vshrl.u32 %v2520, 7
  %v2522 = vsub.s32 1, %v2521
  %v2523 = vrot.slane %v2514, %v2522
  %v2524 = vlaneseq
  %v2525 = vshrl.u32 %v2524, 7
  %v2526 = vsub.s32 2, %v2525
  %v2527 = vrot.slane %v2514, %v2526
  %v2528 = vlaneseq
  %v2529 = vshrl.u32 %v2528, 7
  %v2530 = vsub.s32 3, %v2529
  %v2531 = vrot.slane %v2514, %v2530
  %v2536 = vmul.f32 %v2512, %v2519
  %v2537 = vmul.f32 %v2510, %v2523
  %v2538 = vmul.f32 %v2508, %v2527
  %v2539 = vmul.f32 %v2506, %v2531
  %v2540 = vmul.f32 %v2513, %v2519
  %v2541 = vmul.f32 %v2511, %v2523
  %v2542 = vmul.f32 %v2509, %v2527
  %v2543 = vmul.f32 %v2507, %v2531
  %s2544 = scalar_lea.vmem %s5, 288
  %v2545 = vld [vmem:[%s2544] sm:$0xff]
  %v2546 = vld [vmem:[%s2544 + $0x8] sm:$0xff]
  %2548 = vset.pattern.permute.xlu0 0
  %2549 = vperm.xlu0 %2548, %v2545
  %v2550 = vpop.permute.xlu0 %2549
  %2553 = vset.pattern.permute.xlu0 0
  %2554 = vperm.xlu0 %2553, %v2546
  %v2555 = vpop.permute.xlu0 %2554
  %v2557 = vmul.f32 %v2536, %v2550
  %v2558 = vmul.f32 %v2537, %v2550
  %v2559 = vmul.f32 %v2538, %v2550
  %v2560 = vmul.f32 %v2539, %v2550
  %v2561 = vmul.f32 %v2540, %v2555
  %v2562 = vmul.f32 %v2541, %v2555
  %v2563 = vmul.f32 %v2542, %v2555
  %v2564 = vmul.f32 %v2543, %v2555
  %v2565 = vadd.f32 %v2557, 0.0
  %v2566 = vadd.f32 %v2558, 0.0
  %v2567 = vadd.f32 %v2559, 0.0
  %v2568 = vadd.f32 %v2560, 0.0
  %v2569 = vadd.f32 %v2561, 0.0
  %v2570 = vadd.f32 %v2562, 0.0
  %v2571 = vadd.f32 %v2563, 0.0
  %v2572 = vadd.f32 %v2564, 0.0
  %2573 = vrot.lane.b32.xlu0 %v2439, 16
  %v2574 = vpop.permute.xlu0 %2573
  %2575 = vrot.lane.b32.xlu0 %v2443, 16
  %v2576 = vpop.permute.xlu0 %2575
  %2577 = vrot.lane.b32.xlu0 %v2441, 16
  %v2578 = vpop.permute.xlu0 %2577
  %2579 = vrot.lane.b32.xlu0 %v2445, 16
  %v2580 = vpop.permute.xlu0 %2579
  %2581 = vrot.lane.b32.xlu0 %v2482, 16
  %v2582 = vpop.permute.xlu0 %2581
  %2583 = vrot.lane.b32.xlu0 %v2486, 16
  %v2584 = vpop.permute.xlu0 %2583
  %2585 = vrot.lane.b32.xlu0 %v2484, 16
  %v2586 = vpop.permute.xlu0 %2585
  %2587 = vrot.lane.b32.xlu0 %v2488, 16
  %v2588 = vpop.permute.xlu0 %2587
  %v2589 = vsel %vm87, %v2582, %v2586
  %v2590 = vsel %vm87, %v2584, %v2588
  %v2591 = vsel %vm87, %v2578, %v2582
  %v2592 = vsel %vm87, %v2580, %v2584
  %v2593 = vsel %vm87, %v2574, %v2578
  %v2594 = vsel %vm87, %v2576, %v2580
  %v2595 = vsel %vm87, %v2586, %v2574
  %v2596 = vsel %vm87, %v2588, %v2576
  %v2597 = vld [vmem:[%s92] ss:$8 sm:$0xf]
  %v2599 = vlaneseq
  %v2600 = vshrl.u32 %v2599, 7
  %v2601 = vsub.s32 0, %v2600
  %v2602 = vrot.slane %v2597, %v2601
  %v2603 = vlaneseq
  %v2604 = vshrl.u32 %v2603, 7
  %v2605 = vsub.s32 1, %v2604
  %v2606 = vrot.slane %v2597, %v2605
  %v2607 = vlaneseq
  %v2608 = vshrl.u32 %v2607, 7
  %v2609 = vsub.s32 2, %v2608
  %v2610 = vrot.slane %v2597, %v2609
  %v2611 = vlaneseq
  %v2612 = vshrl.u32 %v2611, 7
  %v2613 = vsub.s32 3, %v2612
  %v2614 = vrot.slane %v2597, %v2613
  %v2619 = vmul.f32 %v2595, %v2602
  %v2620 = vmul.f32 %v2593, %v2606
  %v2621 = vmul.f32 %v2591, %v2610
  %v2622 = vmul.f32 %v2589, %v2614
  %v2623 = vmul.f32 %v2596, %v2602
  %v2624 = vmul.f32 %v2594, %v2606
  %v2625 = vmul.f32 %v2592, %v2610
  %v2626 = vmul.f32 %v2590, %v2614
  %s2627 = scalar_lea.vmem %s5, 304
  %v2628 = vld [vmem:[%s2627] sm:$0xff]
  %v2629 = vld [vmem:[%s2627 + $0x8] sm:$0xff]
  %2631 = vset.pattern.permute.xlu0 0
  %2632 = vperm.xlu0 %2631, %v2628
  %v2633 = vpop.permute.xlu0 %2632
  %2636 = vset.pattern.permute.xlu0 0
  %2637 = vperm.xlu0 %2636, %v2629
  %v2638 = vpop.permute.xlu0 %2637
  %v2640 = vmul.f32 %v2619, %v2633
  %v2641 = vmul.f32 %v2620, %v2633
  %v2642 = vmul.f32 %v2621, %v2633
  %v2643 = vmul.f32 %v2622, %v2633
  %v2644 = vmul.f32 %v2623, %v2638
  %v2645 = vmul.f32 %v2624, %v2638
  %v2646 = vmul.f32 %v2625, %v2638
  %v2647 = vmul.f32 %v2626, %v2638
  %v2648 = vadd.f32 %v2565, %v2640
  %v2649 = vadd.f32 %v2566, %v2641
  %v2650 = vadd.f32 %v2567, %v2642
  %v2651 = vadd.f32 %v2568, %v2643
  %v2652 = vadd.f32 %v2569, %v2644
  %v2653 = vadd.f32 %v2570, %v2645
  %v2654 = vadd.f32 %v2571, %v2646
  %v2655 = vadd.f32 %v2572, %v2647
  %2656 = vrot.lane.b32.xlu0 %v2439, 15
  %v2657 = vpop.permute.xlu0 %2656
  %2658 = vrot.lane.b32.xlu0 %v2443, 15
  %v2659 = vpop.permute.xlu0 %2658
  %2660 = vrot.lane.b32.xlu0 %v2441, 15
  %v2661 = vpop.permute.xlu0 %2660
  %2662 = vrot.lane.b32.xlu0 %v2445, 15
  %v2663 = vpop.permute.xlu0 %2662
  %2664 = vrot.lane.b32.xlu0 %v2482, 15
  %v2665 = vpop.permute.xlu0 %2664
  %2666 = vrot.lane.b32.xlu0 %v2486, 15
  %v2667 = vpop.permute.xlu0 %2666
  %2668 = vrot.lane.b32.xlu0 %v2484, 15
  %v2669 = vpop.permute.xlu0 %2668
  %2670 = vrot.lane.b32.xlu0 %v2488, 15
  %v2671 = vpop.permute.xlu0 %2670
  %v2672 = vsel %vm131, %v2665, %v2669
  %v2673 = vsel %vm131, %v2667, %v2671
  %v2674 = vsel %vm131, %v2661, %v2665
  %v2675 = vsel %vm131, %v2663, %v2667
  %v2676 = vsel %vm131, %v2657, %v2661
  %v2677 = vsel %vm131, %v2659, %v2663
  %v2678 = vsel %vm131, %v2669, %v2657
  %v2679 = vsel %vm131, %v2671, %v2659
  %v2680 = vld [vmem:[%s136] ss:$8 sm:$0xf]
  %v2682 = vlaneseq
  %v2683 = vshrl.u32 %v2682, 7
  %v2684 = vsub.s32 0, %v2683
  %v2685 = vrot.slane %v2680, %v2684
  %v2686 = vlaneseq
  %v2687 = vshrl.u32 %v2686, 7
  %v2688 = vsub.s32 1, %v2687
  %v2689 = vrot.slane %v2680, %v2688
  %v2690 = vlaneseq
  %v2691 = vshrl.u32 %v2690, 7
  %v2692 = vsub.s32 2, %v2691
  %v2693 = vrot.slane %v2680, %v2692
  %v2694 = vlaneseq
  %v2695 = vshrl.u32 %v2694, 7
  %v2696 = vsub.s32 3, %v2695
  %v2697 = vrot.slane %v2680, %v2696
  %v2702 = vmul.f32 %v2678, %v2685
  %v2703 = vmul.f32 %v2676, %v2689
  %v2704 = vmul.f32 %v2674, %v2693
  %v2705 = vmul.f32 %v2672, %v2697
  %v2706 = vmul.f32 %v2679, %v2685
  %v2707 = vmul.f32 %v2677, %v2689
  %v2708 = vmul.f32 %v2675, %v2693
  %v2709 = vmul.f32 %v2673, %v2697
  %s2710 = scalar_lea.vmem %s5, 320
  %v2711 = vld [vmem:[%s2710] sm:$0xff]
  %v2712 = vld [vmem:[%s2710 + $0x8] sm:$0xff]
  %2714 = vset.pattern.permute.xlu0 0
  %2715 = vperm.xlu0 %2714, %v2711
  %v2716 = vpop.permute.xlu0 %2715
  %2719 = vset.pattern.permute.xlu0 0
  %2720 = vperm.xlu0 %2719, %v2712
  %v2721 = vpop.permute.xlu0 %2720
  %v2723 = vmul.f32 %v2702, %v2716
  %v2724 = vmul.f32 %v2703, %v2716
  %v2725 = vmul.f32 %v2704, %v2716
  %v2726 = vmul.f32 %v2705, %v2716
  %v2727 = vmul.f32 %v2706, %v2721
  %v2728 = vmul.f32 %v2707, %v2721
  %v2729 = vmul.f32 %v2708, %v2721
  %v2730 = vmul.f32 %v2709, %v2721
  %v2731 = vadd.f32 %v2648, %v2723
  %v2732 = vadd.f32 %v2649, %v2724
  %v2733 = vadd.f32 %v2650, %v2725
  %v2734 = vadd.f32 %v2651, %v2726
  %v2735 = vadd.f32 %v2652, %v2727
  %v2736 = vadd.f32 %v2653, %v2728
  %v2737 = vadd.f32 %v2654, %v2729
  %v2738 = vadd.f32 %v2655, %v2730
  %2739 = vrot.lane.b32.xlu0 %v2439, 1
  %v2740 = vpop.permute.xlu0 %2739
  %2741 = vrot.lane.b32.xlu0 %v2443, 1
  %v2742 = vpop.permute.xlu0 %2741
  %2743 = vrot.lane.b32.xlu0 %v2441, 1
  %v2744 = vpop.permute.xlu0 %2743
  %2745 = vrot.lane.b32.xlu0 %v2445, 1
  %v2746 = vpop.permute.xlu0 %2745
  %2747 = vrot.lane.b32.xlu0 %v2482, 1
  %v2748 = vpop.permute.xlu0 %2747
  %2749 = vrot.lane.b32.xlu0 %v2486, 1
  %v2750 = vpop.permute.xlu0 %2749
  %2751 = vrot.lane.b32.xlu0 %v2484, 1
  %v2752 = vpop.permute.xlu0 %2751
  %2753 = vrot.lane.b32.xlu0 %v2488, 1
  %v2754 = vpop.permute.xlu0 %2753
  %v2755 = vsel %vm175, %v2748, %v2752
  %v2756 = vsel %vm175, %v2750, %v2754
  %v2757 = vsel %vm175, %v2744, %v2748
  %v2758 = vsel %vm175, %v2746, %v2750
  %v2759 = vsel %vm175, %v2740, %v2744
  %v2760 = vsel %vm175, %v2742, %v2746
  %v2761 = vsel %vm175, %v2752, %v2740
  %v2762 = vsel %vm175, %v2754, %v2742
  %v2763 = vld [vmem:[%s180] ss:$8 sm:$0xf]
  %v2765 = vlaneseq
  %v2766 = vshrl.u32 %v2765, 7
  %v2767 = vsub.s32 0, %v2766
  %v2768 = vrot.slane %v2763, %v2767
  %v2769 = vlaneseq
  %v2770 = vshrl.u32 %v2769, 7
  %v2771 = vsub.s32 1, %v2770
  %v2772 = vrot.slane %v2763, %v2771
  %v2773 = vlaneseq
  %v2774 = vshrl.u32 %v2773, 7
  %v2775 = vsub.s32 2, %v2774
  %v2776 = vrot.slane %v2763, %v2775
  %v2777 = vlaneseq
  %v2778 = vshrl.u32 %v2777, 7
  %v2779 = vsub.s32 3, %v2778
  %v2780 = vrot.slane %v2763, %v2779
  %v2785 = vmul.f32 %v2761, %v2768
  %v2786 = vmul.f32 %v2759, %v2772
  %v2787 = vmul.f32 %v2757, %v2776
  %v2788 = vmul.f32 %v2755, %v2780
  %v2789 = vmul.f32 %v2762, %v2768
  %v2790 = vmul.f32 %v2760, %v2772
  %v2791 = vmul.f32 %v2758, %v2776
  %v2792 = vmul.f32 %v2756, %v2780
  %s2793 = scalar_lea.vmem %s5, 336
  %v2794 = vld [vmem:[%s2793] sm:$0xff]
  %v2795 = vld [vmem:[%s2793 + $0x8] sm:$0xff]
  %2797 = vset.pattern.permute.xlu0 0
  %2798 = vperm.xlu0 %2797, %v2794
  %v2799 = vpop.permute.xlu0 %2798
  %2802 = vset.pattern.permute.xlu0 0
  %2803 = vperm.xlu0 %2802, %v2795
  %v2804 = vpop.permute.xlu0 %2803
  %v2806 = vmul.f32 %v2785, %v2799
  %v2807 = vmul.f32 %v2786, %v2799
  %v2808 = vmul.f32 %v2787, %v2799
  %v2809 = vmul.f32 %v2788, %v2799
  %v2810 = vmul.f32 %v2789, %v2804
  %v2811 = vmul.f32 %v2790, %v2804
  %v2812 = vmul.f32 %v2791, %v2804
  %v2813 = vmul.f32 %v2792, %v2804
  %v2814 = vadd.f32 %v2731, %v2806
  %v2815 = vadd.f32 %v2732, %v2807
  %v2816 = vadd.f32 %v2733, %v2808
  %v2817 = vadd.f32 %v2734, %v2809
  %v2818 = vadd.f32 %v2735, %v2810
  %v2819 = vadd.f32 %v2736, %v2811
  %v2820 = vadd.f32 %v2737, %v2812
  %v2821 = vadd.f32 %v2738, %v2813
  %s2822 = scalar_lea.vmem %s5, 352
  %v2823 = vld [vmem:[%s2822] sm:$0xff]
  %v2824 = vld [vmem:[%s2822 + $0x8] sm:$0xff]
  %2826 = vset.pattern.permute.xlu0 0
  %2827 = vperm.xlu0 %2826, %v2823
  %v2828 = vpop.permute.xlu0 %2827
  %2831 = vset.pattern.permute.xlu0 0
  %2832 = vperm.xlu0 %2831, %v2824
  %v2833 = vpop.permute.xlu0 %2832
  %v2835 = vmul.f32 %v2439, %v2828
  %v2836 = vmul.f32 %v2441, %v2828
  %v2837 = vmul.f32 %v2482, %v2828
  %v2838 = vmul.f32 %v2484, %v2828
  %v2839 = vmul.f32 %v2443, %v2833
  %v2840 = vmul.f32 %v2445, %v2833
  %v2841 = vmul.f32 %v2486, %v2833
  %v2842 = vmul.f32 %v2488, %v2833
  %v2843 = vadd.f32 %v2814, %v2835
  %v2844 = vadd.f32 %v2815, %v2836
  %v2845 = vadd.f32 %v2816, %v2837
  %v2846 = vadd.f32 %v2817, %v2838
  %v2847 = vadd.f32 %v2818, %v2839
  %v2848 = vadd.f32 %v2819, %v2840
  %v2849 = vadd.f32 %v2820, %v2841
  %v2850 = vadd.f32 %v2821, %v2842
  %2851 = vrot.lane.b32.xlu0 %v2439, 127
  %v2852 = vpop.permute.xlu0 %2851
  %2853 = vrot.lane.b32.xlu0 %v2443, 127
  %v2854 = vpop.permute.xlu0 %2853
  %2855 = vrot.lane.b32.xlu0 %v2441, 127
  %v2856 = vpop.permute.xlu0 %2855
  %2857 = vrot.lane.b32.xlu0 %v2445, 127
  %v2858 = vpop.permute.xlu0 %2857
  %2859 = vrot.lane.b32.xlu0 %v2482, 127
  %v2860 = vpop.permute.xlu0 %2859
  %2861 = vrot.lane.b32.xlu0 %v2486, 127
  %v2862 = vpop.permute.xlu0 %2861
  %2863 = vrot.lane.b32.xlu0 %v2484, 127
  %v2864 = vpop.permute.xlu0 %2863
  %2865 = vrot.lane.b32.xlu0 %v2488, 127
  %v2866 = vpop.permute.xlu0 %2865
  %v2867 = vsel %vm223, %v2860, %v2864
  %v2868 = vsel %vm223, %v2862, %v2866
  %v2869 = vsel %vm223, %v2856, %v2860
  %v2870 = vsel %vm223, %v2858, %v2862
  %v2871 = vsel %vm223, %v2852, %v2856
  %v2872 = vsel %vm223, %v2854, %v2858
  %v2873 = vsel %vm223, %v2864, %v2852
  %v2874 = vsel %vm223, %v2866, %v2854
  %v2875 = vld [vmem:[%s228] ss:$8 sm:$0xf]
  %v2877 = vlaneseq
  %v2878 = vshrl.u32 %v2877, 7
  %v2879 = vsub.s32 0, %v2878
  %v2880 = vrot.slane %v2875, %v2879
  %v2881 = vlaneseq
  %v2882 = vshrl.u32 %v2881, 7
  %v2883 = vsub.s32 1, %v2882
  %v2884 = vrot.slane %v2875, %v2883
  %v2885 = vlaneseq
  %v2886 = vshrl.u32 %v2885, 7
  %v2887 = vsub.s32 2, %v2886
  %v2888 = vrot.slane %v2875, %v2887
  %v2889 = vlaneseq
  %v2890 = vshrl.u32 %v2889, 7
  %v2891 = vsub.s32 3, %v2890
  %v2892 = vrot.slane %v2875, %v2891
  %v2897 = vmul.f32 %v2871, %v2880
  %v2898 = vmul.f32 %v2869, %v2884
  %v2899 = vmul.f32 %v2867, %v2888
  %v2900 = vmul.f32 %v2873, %v2892
  %v2901 = vmul.f32 %v2872, %v2880
  %v2902 = vmul.f32 %v2870, %v2884
  %v2903 = vmul.f32 %v2868, %v2888
  %v2904 = vmul.f32 %v2874, %v2892
  %s2905 = scalar_lea.vmem %s5, 368
  %v2906 = vld [vmem:[%s2905] sm:$0xff]
  %v2907 = vld [vmem:[%s2905 + $0x8] sm:$0xff]
  %2909 = vset.pattern.permute.xlu0 0
  %2910 = vperm.xlu0 %2909, %v2906
  %v2911 = vpop.permute.xlu0 %2910
  %2914 = vset.pattern.permute.xlu0 0
  %2915 = vperm.xlu0 %2914, %v2907
  %v2916 = vpop.permute.xlu0 %2915
  %v2918 = vmul.f32 %v2897, %v2911
  %v2919 = vmul.f32 %v2898, %v2911
  %v2920 = vmul.f32 %v2899, %v2911
  %v2921 = vmul.f32 %v2900, %v2911
  %v2922 = vmul.f32 %v2901, %v2916
  %v2923 = vmul.f32 %v2902, %v2916
  %v2924 = vmul.f32 %v2903, %v2916
  %v2925 = vmul.f32 %v2904, %v2916
  %v2926 = vadd.f32 %v2843, %v2918
  %v2927 = vadd.f32 %v2844, %v2919
  %v2928 = vadd.f32 %v2845, %v2920
  %v2929 = vadd.f32 %v2846, %v2921
  %v2930 = vadd.f32 %v2847, %v2922
  %v2931 = vadd.f32 %v2848, %v2923
  %v2932 = vadd.f32 %v2849, %v2924
  %v2933 = vadd.f32 %v2850, %v2925
  %2934 = vrot.lane.b32.xlu0 %v2439, 113
  %v2935 = vpop.permute.xlu0 %2934
  %2936 = vrot.lane.b32.xlu0 %v2443, 113
  %v2937 = vpop.permute.xlu0 %2936
  %2938 = vrot.lane.b32.xlu0 %v2441, 113
  %v2939 = vpop.permute.xlu0 %2938
  %2940 = vrot.lane.b32.xlu0 %v2445, 113
  %v2941 = vpop.permute.xlu0 %2940
  %2942 = vrot.lane.b32.xlu0 %v2482, 113
  %v2943 = vpop.permute.xlu0 %2942
  %2944 = vrot.lane.b32.xlu0 %v2486, 113
  %v2945 = vpop.permute.xlu0 %2944
  %2946 = vrot.lane.b32.xlu0 %v2484, 113
  %v2947 = vpop.permute.xlu0 %2946
  %2948 = vrot.lane.b32.xlu0 %v2488, 113
  %v2949 = vpop.permute.xlu0 %2948
  %v2950 = vsel %vm267, %v2943, %v2947
  %v2951 = vsel %vm267, %v2945, %v2949
  %v2952 = vsel %vm267, %v2939, %v2943
  %v2953 = vsel %vm267, %v2941, %v2945
  %v2954 = vsel %vm267, %v2935, %v2939
  %v2955 = vsel %vm267, %v2937, %v2941
  %v2956 = vsel %vm267, %v2947, %v2935
  %v2957 = vsel %vm267, %v2949, %v2937
  %v2958 = vld [vmem:[%s272] ss:$8 sm:$0xf]
  %v2960 = vlaneseq
  %v2961 = vshrl.u32 %v2960, 7
  %v2962 = vsub.s32 0, %v2961
  %v2963 = vrot.slane %v2958, %v2962
  %v2964 = vlaneseq
  %v2965 = vshrl.u32 %v2964, 7
  %v2966 = vsub.s32 1, %v2965
  %v2967 = vrot.slane %v2958, %v2966
  %v2968 = vlaneseq
  %v2969 = vshrl.u32 %v2968, 7
  %v2970 = vsub.s32 2, %v2969
  %v2971 = vrot.slane %v2958, %v2970
  %v2972 = vlaneseq
  %v2973 = vshrl.u32 %v2972, 7
  %v2974 = vsub.s32 3, %v2973
  %v2975 = vrot.slane %v2958, %v2974
  %v2980 = vmul.f32 %v2954, %v2963
  %v2981 = vmul.f32 %v2952, %v2967
  %v2982 = vmul.f32 %v2950, %v2971
  %v2983 = vmul.f32 %v2956, %v2975
  %v2984 = vmul.f32 %v2955, %v2963
  %v2985 = vmul.f32 %v2953, %v2967
  %v2986 = vmul.f32 %v2951, %v2971
  %v2987 = vmul.f32 %v2957, %v2975
  %s2988 = scalar_lea.vmem %s5, 384
  %v2989 = vld [vmem:[%s2988] sm:$0xff]
  %v2990 = vld [vmem:[%s2988 + $0x8] sm:$0xff]
  %2992 = vset.pattern.permute.xlu0 0
  %2993 = vperm.xlu0 %2992, %v2989
  %v2994 = vpop.permute.xlu0 %2993
  %2997 = vset.pattern.permute.xlu0 0
  %2998 = vperm.xlu0 %2997, %v2990
  %v2999 = vpop.permute.xlu0 %2998
  %v3001 = vmul.f32 %v2980, %v2994
  %v3002 = vmul.f32 %v2981, %v2994
  %v3003 = vmul.f32 %v2982, %v2994
  %v3004 = vmul.f32 %v2983, %v2994
  %v3005 = vmul.f32 %v2984, %v2999
  %v3006 = vmul.f32 %v2985, %v2999
  %v3007 = vmul.f32 %v2986, %v2999
  %v3008 = vmul.f32 %v2987, %v2999
  %v3009 = vadd.f32 %v2926, %v3001
  %v3010 = vadd.f32 %v2927, %v3002
  %v3011 = vadd.f32 %v2928, %v3003
  %v3012 = vadd.f32 %v2929, %v3004
  %v3013 = vadd.f32 %v2930, %v3005
  %v3014 = vadd.f32 %v2931, %v3006
  %v3015 = vadd.f32 %v2932, %v3007
  %v3016 = vadd.f32 %v2933, %v3008
  %3017 = vrot.lane.b32.xlu0 %v2439, 112
  %v3018 = vpop.permute.xlu0 %3017
  %3019 = vrot.lane.b32.xlu0 %v2443, 112
  %v3020 = vpop.permute.xlu0 %3019
  %3021 = vrot.lane.b32.xlu0 %v2441, 112
  %v3022 = vpop.permute.xlu0 %3021
  %3023 = vrot.lane.b32.xlu0 %v2445, 112
  %v3024 = vpop.permute.xlu0 %3023
  %3025 = vrot.lane.b32.xlu0 %v2482, 112
  %v3026 = vpop.permute.xlu0 %3025
  %3027 = vrot.lane.b32.xlu0 %v2486, 112
  %v3028 = vpop.permute.xlu0 %3027
  %3029 = vrot.lane.b32.xlu0 %v2484, 112
  %v3030 = vpop.permute.xlu0 %3029
  %3031 = vrot.lane.b32.xlu0 %v2488, 112
  %v3032 = vpop.permute.xlu0 %3031
  %v3033 = vsel %vm311, %v3026, %v3030
  %v3034 = vsel %vm311, %v3028, %v3032
  %v3035 = vsel %vm311, %v3022, %v3026
  %v3036 = vsel %vm311, %v3024, %v3028
  %v3037 = vsel %vm311, %v3018, %v3022
  %v3038 = vsel %vm311, %v3020, %v3024
  %v3039 = vsel %vm311, %v3030, %v3018
  %v3040 = vsel %vm311, %v3032, %v3020
  %v3041 = vld [vmem:[%s316] ss:$8 sm:$0xf]
  %v3043 = vlaneseq
  %v3044 = vshrl.u32 %v3043, 7
  %v3045 = vsub.s32 0, %v3044
  %v3046 = vrot.slane %v3041, %v3045
  %v3047 = vlaneseq
  %v3048 = vshrl.u32 %v3047, 7
  %v3049 = vsub.s32 1, %v3048
  %v3050 = vrot.slane %v3041, %v3049
  %v3051 = vlaneseq
  %v3052 = vshrl.u32 %v3051, 7
  %v3053 = vsub.s32 2, %v3052
  %v3054 = vrot.slane %v3041, %v3053
  %v3055 = vlaneseq
  %v3056 = vshrl.u32 %v3055, 7
  %v3057 = vsub.s32 3, %v3056
  %v3058 = vrot.slane %v3041, %v3057
  %v3063 = vmul.f32 %v3037, %v3046
  %v3064 = vmul.f32 %v3035, %v3050
  %v3065 = vmul.f32 %v3033, %v3054
  %v3066 = vmul.f32 %v3039, %v3058
  %v3067 = vmul.f32 %v3038, %v3046
  %v3068 = vmul.f32 %v3036, %v3050
  %v3069 = vmul.f32 %v3034, %v3054
  %v3070 = vmul.f32 %v3040, %v3058
  %s3071 = scalar_lea.vmem %s5, 400
  %v3072 = vld [vmem:[%s3071] sm:$0xff]
  %v3073 = vld [vmem:[%s3071 + $0x8] sm:$0xff]
  %3075 = vset.pattern.permute.xlu0 0
  %3076 = vperm.xlu0 %3075, %v3072
  %v3077 = vpop.permute.xlu0 %3076
  %3080 = vset.pattern.permute.xlu0 0
  %3081 = vperm.xlu0 %3080, %v3073
  %v3082 = vpop.permute.xlu0 %3081
  %v3084 = vmul.f32 %v3063, %v3077
  %v3085 = vmul.f32 %v3064, %v3077
  %v3086 = vmul.f32 %v3065, %v3077
  %v3087 = vmul.f32 %v3066, %v3077
  %v3088 = vmul.f32 %v3067, %v3082
  %v3089 = vmul.f32 %v3068, %v3082
  %v3090 = vmul.f32 %v3069, %v3082
  %v3091 = vmul.f32 %v3070, %v3082
  %v3092 = vadd.f32 %v3009, %v3084
  %v3093 = vadd.f32 %v3010, %v3085
  %v3094 = vadd.f32 %v3011, %v3086
  %v3095 = vadd.f32 %v3012, %v3087
  %v3096 = vadd.f32 %v3013, %v3088
  %v3097 = vadd.f32 %v3014, %v3089
  %v3098 = vadd.f32 %v3015, %v3090
  %v3099 = vadd.f32 %v3016, %v3091
  %3100 = vrot.lane.b32.xlu0 %v2439, 111
  %v3101 = vpop.permute.xlu0 %3100
  %3102 = vrot.lane.b32.xlu0 %v2443, 111
  %v3103 = vpop.permute.xlu0 %3102
  %3104 = vrot.lane.b32.xlu0 %v2441, 111
  %v3105 = vpop.permute.xlu0 %3104
  %3106 = vrot.lane.b32.xlu0 %v2445, 111
  %v3107 = vpop.permute.xlu0 %3106
  %3108 = vrot.lane.b32.xlu0 %v2482, 111
  %v3109 = vpop.permute.xlu0 %3108
  %3110 = vrot.lane.b32.xlu0 %v2486, 111
  %v3111 = vpop.permute.xlu0 %3110
  %3112 = vrot.lane.b32.xlu0 %v2484, 111
  %v3113 = vpop.permute.xlu0 %3112
  %3114 = vrot.lane.b32.xlu0 %v2488, 111
  %v3115 = vpop.permute.xlu0 %3114
  %v3116 = vsel %vm355, %v3109, %v3113
  %v3117 = vsel %vm355, %v3111, %v3115
  %v3118 = vsel %vm355, %v3105, %v3109
  %v3119 = vsel %vm355, %v3107, %v3111
  %v3120 = vsel %vm355, %v3101, %v3105
  %v3121 = vsel %vm355, %v3103, %v3107
  %v3122 = vsel %vm355, %v3113, %v3101
  %v3123 = vsel %vm355, %v3115, %v3103
  %v3124 = vld [vmem:[%s360] ss:$8 sm:$0xf]
  %v3126 = vlaneseq
  %v3127 = vshrl.u32 %v3126, 7
  %v3128 = vsub.s32 0, %v3127
  %v3129 = vrot.slane %v3124, %v3128
  %v3130 = vlaneseq
  %v3131 = vshrl.u32 %v3130, 7
  %v3132 = vsub.s32 1, %v3131
  %v3133 = vrot.slane %v3124, %v3132
  %v3134 = vlaneseq
  %v3135 = vshrl.u32 %v3134, 7
  %v3136 = vsub.s32 2, %v3135
  %v3137 = vrot.slane %v3124, %v3136
  %v3138 = vlaneseq
  %v3139 = vshrl.u32 %v3138, 7
  %v3140 = vsub.s32 3, %v3139
  %v3141 = vrot.slane %v3124, %v3140
  %v3146 = vmul.f32 %v3120, %v3129
  %v3147 = vmul.f32 %v3118, %v3133
  %v3148 = vmul.f32 %v3116, %v3137
  %v3149 = vmul.f32 %v3122, %v3141
  %v3150 = vmul.f32 %v3121, %v3129
  %v3151 = vmul.f32 %v3119, %v3133
  %v3152 = vmul.f32 %v3117, %v3137
  %v3153 = vmul.f32 %v3123, %v3141
  %s3154 = scalar_lea.vmem %s5, 416
  %v3155 = vld [vmem:[%s3154] sm:$0xff]
  %v3156 = vld [vmem:[%s3154 + $0x8] sm:$0xff]
  %3158 = vset.pattern.permute.xlu0 0
  %3159 = vperm.xlu0 %3158, %v3155
  %v3160 = vpop.permute.xlu0 %3159
  %3163 = vset.pattern.permute.xlu0 0
  %3164 = vperm.xlu0 %3163, %v3156
  %v3165 = vpop.permute.xlu0 %3164
  %v3167 = vmul.f32 %v3146, %v3160
  %v3168 = vmul.f32 %v3147, %v3160
  %v3169 = vmul.f32 %v3148, %v3160
  %v3170 = vmul.f32 %v3149, %v3160
  %v3171 = vmul.f32 %v3150, %v3165
  %v3172 = vmul.f32 %v3151, %v3165
  %v3173 = vmul.f32 %v3152, %v3165
  %v3174 = vmul.f32 %v3153, %v3165
  %v3175 = vadd.f32 %v3092, %v3167
  %v3176 = vadd.f32 %v3093, %v3168
  %v3177 = vadd.f32 %v3094, %v3169
  %v3178 = vadd.f32 %v3095, %v3170
  %v3179 = vadd.f32 %v3096, %v3171
  %v3180 = vadd.f32 %v3097, %v3172
  %v3181 = vadd.f32 %v3098, %v3173
  %v3182 = vadd.f32 %v3099, %v3174
  %v3183 = vmax.f32 %v2439, 0.0
  %v3184 = vmax.f32 %v2441, 0.0
  %v3185 = vmax.f32 %v2482, 0.0
  %v3186 = vmax.f32 %v2484, 0.0
  %v3187 = vmax.f32 %v2443, 0.0
  %v3188 = vmax.f32 %v2445, 0.0
  %v3189 = vmax.f32 %v2486, 0.0
  %v3190 = vmax.f32 %v2488, 0.0
  %3191 = vst [vmem:[#allocation4] sm:$0xff] %v3183
  %3192 = vst [vmem:[#allocation4 + $0x8] sm:$0xff] %v3184
  %3193 = vst [vmem:[#allocation4 + $0x10] sm:$0xff] %v3185
  %3194 = vst [vmem:[#allocation4 + $0x18] sm:$0xff] %v3186
  %3195 = vst [vmem:[#allocation4 + $0x20] sm:$0xff] %v3187
  %3196 = vst [vmem:[#allocation4 + $0x28] sm:$0xff] %v3188
  %3197 = vst [vmem:[#allocation4 + $0x30] sm:$0xff] %v3189
  %3198 = vst [vmem:[#allocation4 + $0x38] sm:$0xff] %v3190
  %v3199 = vmax.f32 %v3175, 0.0
  %v3200 = vmax.f32 %v3176, 0.0
  %v3201 = vmax.f32 %v3177, 0.0
  %v3202 = vmax.f32 %v3178, 0.0
  %v3203 = vmax.f32 %v3179, 0.0
  %v3204 = vmax.f32 %v3180, 0.0
  %v3205 = vmax.f32 %v3181, 0.0
  %v3206 = vmax.f32 %v3182, 0.0
  %3207 = vst [vmem:[#allocation4 + $0x40] sm:$0xff] %v3199
  %3208 = vst [vmem:[#allocation4 + $0x48] sm:$0xff] %v3200
  %3209 = vst [vmem:[#allocation4 + $0x50] sm:$0xff] %v3201
  %3210 = vst [vmem:[#allocation4 + $0x58] sm:$0xff] %v3202
  %3211 = vst [vmem:[#allocation4 + $0x60] sm:$0xff] %v3203
  %3212 = vst [vmem:[#allocation4 + $0x68] sm:$0xff] %v3204
  %3213 = vst [vmem:[#allocation4 + $0x70] sm:$0xff] %v3205
  %3214 = vst [vmem:[#allocation4 + $0x78] sm:$0xff] %v3206
  %v3215 = vld [vmem:[#allocation4] sm:$0xff]
  %v3216 = vld [vmem:[#allocation4 + $0x8] sm:$0xff]
  %v3217 = vld [vmem:[#allocation4 + $0x10] sm:$0xff]
  %v3218 = vld [vmem:[#allocation4 + $0x18] sm:$0xff]
  %v3219 = vld [vmem:[#allocation4 + $0x20] sm:$0xff]
  %v3220 = vld [vmem:[#allocation4 + $0x28] sm:$0xff]
  %v3221 = vld [vmem:[#allocation4 + $0x30] sm:$0xff]
  %v3222 = vld [vmem:[#allocation4 + $0x38] sm:$0xff]
  %v3223 = vld [vmem:[#allocation4 + $0x40] sm:$0xff]
  %v3224 = vld [vmem:[#allocation4 + $0x48] sm:$0xff]
  %v3225 = vld [vmem:[#allocation4 + $0x50] sm:$0xff]
  %v3226 = vld [vmem:[#allocation4 + $0x58] sm:$0xff]
  %v3227 = vld [vmem:[#allocation4 + $0x60] sm:$0xff]
  %v3228 = vld [vmem:[#allocation4 + $0x68] sm:$0xff]
  %v3229 = vld [vmem:[#allocation4 + $0x70] sm:$0xff]
  %v3230 = vld [vmem:[#allocation4 + $0x78] sm:$0xff]
  %v3231 = vld [vmem:[#allocation5] sm:$0xff]
  %v3232 = vld [vmem:[#allocation5 + $0x8] sm:$0xff]
  %v3233 = vld [vmem:[#allocation5 + $0x10] sm:$0xff]
  %v3234 = vld [vmem:[#allocation5 + $0x18] sm:$0xff]
  %v3235 = vld [vmem:[#allocation5 + $0x20] sm:$0xff]
  %v3236 = vld [vmem:[#allocation5 + $0x28] sm:$0xff]
  %v3237 = vld [vmem:[#allocation5 + $0x30] sm:$0xff]
  %v3238 = vld [vmem:[#allocation5 + $0x38] sm:$0xff]
  %v3239 = vld [vmem:[#allocation5 + $0x40] sm:$0xff]
  %v3240 = vld [vmem:[#allocation5 + $0x48] sm:$0xff]
  %v3241 = vld [vmem:[#allocation5 + $0x50] sm:$0xff]
  %v3242 = vld [vmem:[#allocation5 + $0x58] sm:$0xff]
  %v3243 = vld [vmem:[#allocation5 + $0x60] sm:$0xff]
  %v3244 = vld [vmem:[#allocation5 + $0x68] sm:$0xff]
  %v3245 = vld [vmem:[#allocation5 + $0x70] sm:$0xff]
  %v3246 = vld [vmem:[#allocation5 + $0x78] sm:$0xff]
  %v3247 = vadd.f32 %v3215, %v3231
  %v3248 = vadd.f32 %v3216, %v3232
  %v3249 = vadd.f32 %v3217, %v3233
  %v3250 = vadd.f32 %v3218, %v3234
  %v3251 = vadd.f32 %v3219, %v3235
  %v3252 = vadd.f32 %v3220, %v3236
  %v3253 = vadd.f32 %v3221, %v3237
  %v3254 = vadd.f32 %v3222, %v3238
  %v3255 = vadd.f32 %v3223, %v3239
  %v3256 = vadd.f32 %v3224, %v3240
  %v3257 = vadd.f32 %v3225, %v3241
  %v3258 = vadd.f32 %v3226, %v3242
  %v3259 = vadd.f32 %v3227, %v3243
  %v3260 = vadd.f32 %v3228, %v3244
  %v3261 = vadd.f32 %v3229, %v3245
  %v3262 = vadd.f32 %v3230, %v3246
  %3263 = vrot.lane.b32.xlu0 %v3247, 17
  %v3264 = vpop.permute.xlu0 %3263
  %3265 = vrot.lane.b32.xlu0 %v3251, 17
  %v3266 = vpop.permute.xlu0 %3265
  %3267 = vrot.lane.b32.xlu0 %v3255, 17
  %v3268 = vpop.permute.xlu0 %3267
  %3269 = vrot.lane.b32.xlu0 %v3259, 17
  %v3270 = vpop.permute.xlu0 %3269
  %3271 = vrot.lane.b32.xlu0 %v3248, 17
  %v3272 = vpop.permute.xlu0 %3271
  %3273 = vrot.lane.b32.xlu0 %v3252, 17
  %v3274 = vpop.permute.xlu0 %3273
  %3275 = vrot.lane.b32.xlu0 %v3256, 17
  %v3276 = vpop.permute.xlu0 %3275
  %3277 = vrot.lane.b32.xlu0 %v3260, 17
  %v3278 = vpop.permute.xlu0 %3277
  %3279 = vrot.lane.b32.xlu0 %v3249, 17
  %v3280 = vpop.permute.xlu0 %3279
  %3281 = vrot.lane.b32.xlu0 %v3253, 17
  %v3282 = vpop.permute.xlu0 %3281
  %3283 = vrot.lane.b32.xlu0 %v3257, 17
  %v3284 = vpop.permute.xlu0 %3283
  %3285 = vrot.lane.b32.xlu0 %v3261, 17
  %v3286 = vpop.permute.xlu0 %3285
  %3287 = vrot.lane.b32.xlu0 %v3250, 17
  %v3288 = vpop.permute.xlu0 %3287
  %3289 = vrot.lane.b32.xlu0 %v3254, 17
  %v3290 = vpop.permute.xlu0 %3289
  %3291 = vrot.lane.b32.xlu0 %v3258, 17
  %v3292 = vpop.permute.xlu0 %3291
  %3293 = vrot.lane.b32.xlu0 %v3262, 17
  %v3294 = vpop.permute.xlu0 %3293
  %v3295 = vsel %vm44, %v3280, %v3288
  %v3296 = vsel %vm44, %v3282, %v3290
  %v3297 = vsel %vm44, %v3284, %v3292
  %v3298 = vsel %vm44, %v3286, %v3294
  %v3299 = vsel %vm44, %v3272, %v3280
  %v3300 = vsel %vm44, %v3274, %v3282
  %v3301 = vsel %vm44, %v3276, %v3284
  %v3302 = vsel %vm44, %v3278, %v3286
  %v3303 = vsel %vm44, %v3264, %v3272
  %v3304 = vsel %vm44, %v3266, %v3274
  %v3305 = vsel %vm44, %v3268, %v3276
  %v3306 = vsel %vm44, %v3270, %v3278
  %v3307 = vsel %vm44, %v3288, %v3264
  %v3308 = vsel %vm44, %v3290, %v3266
  %v3309 = vsel %vm44, %v3292, %v3268
  %v3310 = vsel %vm44, %v3294, %v3270
  %v3311 = vld [vmem:[%s1] ss:$8 sm:$0xf]
  %v3313 = vlaneseq
  %v3314 = vshrl.u32 %v3313, 7
  %v3315 = vsub.s32 0, %v3314
  %v3316 = vrot.slane %v3311, %v3315
  %v3317 = vlaneseq
  %v3318 = vshrl.u32 %v3317, 7
  %v3319 = vsub.s32 1, %v3318
  %v3320 = vrot.slane %v3311, %v3319
  %v3321 = vlaneseq
  %v3322 = vshrl.u32 %v3321, 7
  %v3323 = vsub.s32 2, %v3322
  %v3324 = vrot.slane %v3311, %v3323
  %v3325 = vlaneseq
  %v3326 = vshrl.u32 %v3325, 7
  %v3327 = vsub.s32 3, %v3326
  %v3328 = vrot.slane %v3311, %v3327
  %v3333 = vmul.f32 %v3307, %v3316
  %v3334 = vmul.f32 %v3303, %v3320
  %v3335 = vmul.f32 %v3299, %v3324
  %v3336 = vmul.f32 %v3295, %v3328
  %v3337 = vmul.f32 %v3308, %v3316
  %v3338 = vmul.f32 %v3304, %v3320
  %v3339 = vmul.f32 %v3300, %v3324
  %v3340 = vmul.f32 %v3296, %v3328
  %v3341 = vmul.f32 %v3309, %v3316
  %v3342 = vmul.f32 %v3305, %v3320
  %v3343 = vmul.f32 %v3301, %v3324
  %v3344 = vmul.f32 %v3297, %v3328
  %v3345 = vmul.f32 %v3310, %v3316
  %v3346 = vmul.f32 %v3306, %v3320
  %v3347 = vmul.f32 %v3302, %v3324
  %v3348 = vmul.f32 %v3298, %v3328
  %v3349 = vpack.c.bf16 %v3337, %v3333
  %v3350 = vpack.c.bf16 %v3338, %v3334
  %v3351 = vpack.c.bf16 %v3339, %v3335
  %v3352 = vpack.c.bf16 %v3340, %v3336
  %v3353 = vpack.c.bf16 %v3345, %v3341
  %v3354 = vpack.c.bf16 %v3346, %v3342
  %v3355 = vpack.c.bf16 %v3347, %v3343
  %v3356 = vpack.c.bf16 %v3348, %v3344
  %3357 = vst [vmem:[#allocation3] sm:$0xff] %v3349
  %3358 = vst [vmem:[#allocation3 + $0x8] sm:$0xff] %v3350
  %3359 = vst [vmem:[#allocation3 + $0x10] sm:$0xff] %v3351
  %3360 = vst [vmem:[#allocation3 + $0x18] sm:$0xff] %v3352
  %3361 = vst [vmem:[#allocation3 + $0x20] sm:$0xff] %v3353
  %3362 = vst [vmem:[#allocation3 + $0x28] sm:$0xff] %v3354
  %3363 = vst [vmem:[#allocation3 + $0x30] sm:$0xff] %v3355
  %3364 = vst [vmem:[#allocation3 + $0x38] sm:$0xff] %v3356
  %3365 = vrot.lane.b32.xlu0 %v3247, 16
  %v3366 = vpop.permute.xlu0 %3365
  %3367 = vrot.lane.b32.xlu0 %v3251, 16
  %v3368 = vpop.permute.xlu0 %3367
  %3369 = vrot.lane.b32.xlu0 %v3255, 16
  %v3370 = vpop.permute.xlu0 %3369
  %3371 = vrot.lane.b32.xlu0 %v3259, 16
  %v3372 = vpop.permute.xlu0 %3371
  %3373 = vrot.lane.b32.xlu0 %v3248, 16
  %v3374 = vpop.permute.xlu0 %3373
  %3375 = vrot.lane.b32.xlu0 %v3252, 16
  %v3376 = vpop.permute.xlu0 %3375
  %3377 = vrot.lane.b32.xlu0 %v3256, 16
  %v3378 = vpop.permute.xlu0 %3377
  %3379 = vrot.lane.b32.xlu0 %v3260, 16
  %v3380 = vpop.permute.xlu0 %3379
  %3381 = vrot.lane.b32.xlu0 %v3249, 16
  %v3382 = vpop.permute.xlu0 %3381
  %3383 = vrot.lane.b32.xlu0 %v3253, 16
  %v3384 = vpop.permute.xlu0 %3383
  %3385 = vrot.lane.b32.xlu0 %v3257, 16
  %v3386 = vpop.permute.xlu0 %3385
  %3387 = vrot.lane.b32.xlu0 %v3261, 16
  %v3388 = vpop.permute.xlu0 %3387
  %3389 = vrot.lane.b32.xlu0 %v3250, 16
  %v3390 = vpop.permute.xlu0 %3389
  %3391 = vrot.lane.b32.xlu0 %v3254, 16
  %v3392 = vpop.permute.xlu0 %3391
  %3393 = vrot.lane.b32.xlu0 %v3258, 16
  %v3394 = vpop.permute.xlu0 %3393
  %3395 = vrot.lane.b32.xlu0 %v3262, 16
  %v3396 = vpop.permute.xlu0 %3395
  %v3397 = vsel %vm87, %v3382, %v3390
  %v3398 = vsel %vm87, %v3384, %v3392
  %v3399 = vsel %vm87, %v3386, %v3394
  %v3400 = vsel %vm87, %v3388, %v3396
  %v3401 = vsel %vm87, %v3374, %v3382
  %v3402 = vsel %vm87, %v3376, %v3384
  %v3403 = vsel %vm87, %v3378, %v3386
  %v3404 = vsel %vm87, %v3380, %v3388
  %v3405 = vsel %vm87, %v3366, %v3374
  %v3406 = vsel %vm87, %v3368, %v3376
  %v3407 = vsel %vm87, %v3370, %v3378
  %v3408 = vsel %vm87, %v3372, %v3380
  %v3409 = vsel %vm87, %v3390, %v3366
  %v3410 = vsel %vm87, %v3392, %v3368
  %v3411 = vsel %vm87, %v3394, %v3370
  %v3412 = vsel %vm87, %v3396, %v3372
  %v3413 = vld [vmem:[%s92] ss:$8 sm:$0xf]
  %v3415 = vlaneseq
  %v3416 = vshrl.u32 %v3415, 7
  %v3417 = vsub.s32 0, %v3416
  %v3418 = vrot.slane %v3413, %v3417
  %v3419 = vlaneseq
  %v3420 = vshrl.u32 %v3419, 7
  %v3421 = vsub.s32 1, %v3420
  %v3422 = vrot.slane %v3413, %v3421
  %v3423 = vlaneseq
  %v3424 = vshrl.u32 %v3423, 7
  %v3425 = vsub.s32 2, %v3424
  %v3426 = vrot.slane %v3413, %v3425
  %v3427 = vlaneseq
  %v3428 = vshrl.u32 %v3427, 7
  %v3429 = vsub.s32 3, %v3428
  %v3430 = vrot.slane %v3413, %v3429
  %v3435 = vmul.f32 %v3409, %v3418
  %v3436 = vmul.f32 %v3405, %v3422
  %v3437 = vmul.f32 %v3401, %v3426
  %v3438 = vmul.f32 %v3397, %v3430
  %v3439 = vmul.f32 %v3410, %v3418
  %v3440 = vmul.f32 %v3406, %v3422
  %v3441 = vmul.f32 %v3402, %v3426
  %v3442 = vmul.f32 %v3398, %v3430
  %v3443 = vmul.f32 %v3411, %v3418
  %v3444 = vmul.f32 %v3407, %v3422
  %v3445 = vmul.f32 %v3403, %v3426
  %v3446 = vmul.f32 %v3399, %v3430
  %v3447 = vmul.f32 %v3412, %v3418
  %v3448 = vmul.f32 %v3408, %v3422
  %v3449 = vmul.f32 %v3404, %v3426
  %v3450 = vmul.f32 %v3400, %v3430
  %v3451 = vpack.c.bf16 %v3439, %v3435
  %v3452 = vpack.c.bf16 %v3440, %v3436
  %v3453 = vpack.c.bf16 %v3441, %v3437
  %v3454 = vpack.c.bf16 %v3442, %v3438
  %v3455 = vpack.c.bf16 %v3447, %v3443
  %v3456 = vpack.c.bf16 %v3448, %v3444
  %v3457 = vpack.c.bf16 %v3449, %v3445
  %v3458 = vpack.c.bf16 %v3450, %v3446
  %3459 = vst [vmem:[#allocation3 + $0x40] sm:$0xff] %v3451
  %3460 = vst [vmem:[#allocation3 + $0x48] sm:$0xff] %v3452
  %3461 = vst [vmem:[#allocation3 + $0x50] sm:$0xff] %v3453
  %3462 = vst [vmem:[#allocation3 + $0x58] sm:$0xff] %v3454
  %3463 = vst [vmem:[#allocation3 + $0x60] sm:$0xff] %v3455
  %3464 = vst [vmem:[#allocation3 + $0x68] sm:$0xff] %v3456
  %3465 = vst [vmem:[#allocation3 + $0x70] sm:$0xff] %v3457
  %3466 = vst [vmem:[#allocation3 + $0x78] sm:$0xff] %v3458
  %3467 = vrot.lane.b32.xlu0 %v3247, 15
  %v3468 = vpop.permute.xlu0 %3467
  %3469 = vrot.lane.b32.xlu0 %v3251, 15
  %v3470 = vpop.permute.xlu0 %3469
  %3471 = vrot.lane.b32.xlu0 %v3255, 15
  %v3472 = vpop.permute.xlu0 %3471
  %3473 = vrot.lane.b32.xlu0 %v3259, 15
  %v3474 = vpop.permute.xlu0 %3473
  %3475 = vrot.lane.b32.xlu0 %v3248, 15
  %v3476 = vpop.permute.xlu0 %3475
  %3477 = vrot.lane.b32.xlu0 %v3252, 15
  %v3478 = vpop.permute.xlu0 %3477
  %3479 = vrot.lane.b32.xlu0 %v3256, 15
  %v3480 = vpop.permute.xlu0 %3479
  %3481 = vrot.lane.b32.xlu0 %v3260, 15
  %v3482 = vpop.permute.xlu0 %3481
  %3483 = vrot.lane.b32.xlu0 %v3249, 15
  %v3484 = vpop.permute.xlu0 %3483
  %3485 = vrot.lane.b32.xlu0 %v3253, 15
  %v3486 = vpop.permute.xlu0 %3485
  %3487 = vrot.lane.b32.xlu0 %v3257, 15
  %v3488 = vpop.permute.xlu0 %3487
  %3489 = vrot.lane.b32.xlu0 %v3261, 15
  %v3490 = vpop.permute.xlu0 %3489
  %3491 = vrot.lane.b32.xlu0 %v3250, 15
  %v3492 = vpop.permute.xlu0 %3491
  %3493 = vrot.lane.b32.xlu0 %v3254, 15
  %v3494 = vpop.permute.xlu0 %3493
  %3495 = vrot.lane.b32.xlu0 %v3258, 15
  %v3496 = vpop.permute.xlu0 %3495
  %3497 = vrot.lane.b32.xlu0 %v3262, 15
  %v3498 = vpop.permute.xlu0 %3497
  %v3499 = vsel %vm131, %v3484, %v3492
  %v3500 = vsel %vm131, %v3486, %v3494
  %v3501 = vsel %vm131, %v3488, %v3496
  %v3502 = vsel %vm131, %v3490, %v3498
  %v3503 = vsel %vm131, %v3476, %v3484
  %v3504 = vsel %vm131, %v3478, %v3486
  %v3505 = vsel %vm131, %v3480, %v3488
  %v3506 = vsel %vm131, %v3482, %v3490
  %v3507 = vsel %vm131, %v3468, %v3476
  %v3508 = vsel %vm131, %v3470, %v3478
  %v3509 = vsel %vm131, %v3472, %v3480
  %v3510 = vsel %vm131, %v3474, %v3482
  %v3511 = vsel %vm131, %v3492, %v3468
  %v3512 = vsel %vm131, %v3494, %v3470
  %v3513 = vsel %vm131, %v3496, %v3472
  %v3514 = vsel %vm131, %v3498, %v3474
  %v3515 = vld [vmem:[%s136] ss:$8 sm:$0xf]
  %v3517 = vlaneseq
  %v3518 = vshrl.u32 %v3517, 7
  %v3519 = vsub.s32 0, %v3518
  %v3520 = vrot.slane %v3515, %v3519
  %v3521 = vlaneseq
  %v3522 = vshrl.u32 %v3521, 7
  %v3523 = vsub.s32 1, %v3522
  %v3524 = vrot.slane %v3515, %v3523
  %v3525 = vlaneseq
  %v3526 = vshrl.u32 %v3525, 7
  %v3527 = vsub.s32 2, %v3526
  %v3528 = vrot.slane %v3515, %v3527
  %v3529 = vlaneseq
  %v3530 = vshrl.u32 %v3529, 7
  %v3531 = vsub.s32 3, %v3530
  %v3532 = vrot.slane %v3515, %v3531
  %v3537 = vmul.f32 %v3511, %v3520
  %v3538 = vmul.f32 %v3507, %v3524
  %v3539 = vmul.f32 %v3503, %v3528
  %v3540 = vmul.f32 %v3499, %v3532
  %v3541 = vmul.f32 %v3512, %v3520
  %v3542 = vmul.f32 %v3508, %v3524
  %v3543 = vmul.f32 %v3504, %v3528
  %v3544 = vmul.f32 %v3500, %v3532
  %v3545 = vmul.f32 %v3513, %v3520
  %v3546 = vmul.f32 %v3509, %v3524
  %v3547 = vmul.f32 %v3505, %v3528
  %v3548 = vmul.f32 %v3501, %v3532
  %v3549 = vmul.f32 %v3514, %v3520
  %v3550 = vmul.f32 %v3510, %v3524
  %v3551 = vmul.f32 %v3506, %v3528
  %v3552 = vmul.f32 %v3502, %v3532
  %v3553 = vpack.c.bf16 %v3541, %v3537
  %v3554 = vpack.c.bf16 %v3542, %v3538
  %v3555 = vpack.c.bf16 %v3543, %v3539
  %v3556 = vpack.c.bf16 %v3544, %v3540
  %v3557 = vpack.c.bf16 %v3549, %v3545
  %v3558 = vpack.c.bf16 %v3550, %v3546
  %v3559 = vpack.c.bf16 %v3551, %v3547
  %v3560 = vpack.c.bf16 %v3552, %v3548
  %3561 = vst [vmem:[#allocation3 + $0x80] sm:$0xff] %v3553
  %3562 = vst [vmem:[#allocation3 + $0x88] sm:$0xff] %v3554
  %3563 = vst [vmem:[#allocation3 + $0x90] sm:$0xff] %v3555
  %3564 = vst [vmem:[#allocation3 + $0x98] sm:$0xff] %v3556
  %3565 = vst [vmem:[#allocation3 + $0xa0] sm:$0xff] %v3557
  %3566 = vst [vmem:[#allocation3 + $0xa8] sm:$0xff] %v3558
  %3567 = vst [vmem:[#allocation3 + $0xb0] sm:$0xff] %v3559
  %3568 = vst [vmem:[#allocation3 + $0xb8] sm:$0xff] %v3560
  %3569 = vrot.lane.b32.xlu0 %v3247, 1
  %v3570 = vpop.permute.xlu0 %3569
  %3571 = vrot.lane.b32.xlu0 %v3251, 1
  %v3572 = vpop.permute.xlu0 %3571
  %3573 = vrot.lane.b32.xlu0 %v3255, 1
  %v3574 = vpop.permute.xlu0 %3573
  %3575 = vrot.lane.b32.xlu0 %v3259, 1
  %v3576 = vpop.permute.xlu0 %3575
  %3577 = vrot.lane.b32.xlu0 %v3248, 1
  %v3578 = vpop.permute.xlu0 %3577
  %3579 = vrot.lane.b32.xlu0 %v3252, 1
  %v3580 = vpop.permute.xlu0 %3579
  %3581 = vrot.lane.b32.xlu0 %v3256, 1
  %v3582 = vpop.permute.xlu0 %3581
  %3583 = vrot.lane.b32.xlu0 %v3260, 1
  %v3584 = vpop.permute.xlu0 %3583
  %3585 = vrot.lane.b32.xlu0 %v3249, 1
  %v3586 = vpop.permute.xlu0 %3585
  %3587 = vrot.lane.b32.xlu0 %v3253, 1
  %v3588 = vpop.permute.xlu0 %3587
  %3589 = vrot.lane.b32.xlu0 %v3257, 1
  %v3590 = vpop.permute.xlu0 %3589
  %3591 = vrot.lane.b32.xlu0 %v3261, 1
  %v3592 = vpop.permute.xlu0 %3591
  %3593 = vrot.lane.b32.xlu0 %v3250, 1
  %v3594 = vpop.permute.xlu0 %3593
  %3595 = vrot.lane.b32.xlu0 %v3254, 1
  %v3596 = vpop.permute.xlu0 %3595
  %3597 = vrot.lane.b32.xlu0 %v3258, 1
  %v3598 = vpop.permute.xlu0 %3597
  %3599 = vrot.lane.b32.xlu0 %v3262, 1
  %v3600 = vpop.permute.xlu0 %3599
  %v3601 = vsel %vm175, %v3586, %v3594
  %v3602 = vsel %vm175, %v3588, %v3596
  %v3603 = vsel %vm175, %v3590, %v3598
  %v3604 = vsel %vm175, %v3592, %v3600
  %v3605 = vsel %vm175, %v3578, %v3586
  %v3606 = vsel %vm175, %v3580, %v3588
  %v3607 = vsel %vm175, %v3582, %v3590
  %v3608 = vsel %vm175, %v3584, %v3592
  %v3609 = vsel %vm175, %v3570, %v3578
  %v3610 = vsel %vm175, %v3572, %v3580
  %v3611 = vsel %vm175, %v3574, %v3582
  %v3612 = vsel %vm175, %v3576, %v3584
  %v3613 = vsel %vm175, %v3594, %v3570
  %v3614 = vsel %vm175, %v3596, %v3572
  %v3615 = vsel %vm175, %v3598, %v3574
  %v3616 = vsel %vm175, %v3600, %v3576
  %v3617 = vld [vmem:[%s180] ss:$8 sm:$0xf]
  %v3619 = vlaneseq
  %v3620 = vshrl.u32 %v3619, 7
  %v3621 = vsub.s32 0, %v3620
  %v3622 = vrot.slane %v3617, %v3621
  %v3623 = vlaneseq
  %v3624 = vshrl.u32 %v3623, 7
  %v3625 = vsub.s32 1, %v3624
  %v3626 = vrot.slane %v3617, %v3625
  %v3627 = vlaneseq
  %v3628 = vshrl.u32 %v3627, 7
  %v3629 = vsub.s32 2, %v3628
  %v3630 = vrot.slane %v3617, %v3629
  %v3631 = vlaneseq
  %v3632 = vshrl.u32 %v3631, 7
  %v3633 = vsub.s32 3, %v3632
  %v3634 = vrot.slane %v3617, %v3633
  %v3639 = vmul.f32 %v3613, %v3622
  %v3640 = vmul.f32 %v3609, %v3626
  %v3641 = vmul.f32 %v3605, %v3630
  %v3642 = vmul.f32 %v3601, %v3634
  %v3643 = vmul.f32 %v3614, %v3622
  %v3644 = vmul.f32 %v3610, %v3626
  %v3645 = vmul.f32 %v3606, %v3630
  %v3646 = vmul.f32 %v3602, %v3634
  %v3647 = vmul.f32 %v3615, %v3622
  %v3648 = vmul.f32 %v3611, %v3626
  %v3649 = vmul.f32 %v3607, %v3630
  %v3650 = vmul.f32 %v3603, %v3634
  %v3651 = vmul.f32 %v3616, %v3622
  %v3652 = vmul.f32 %v3612, %v3626
  %v3653 = vmul.f32 %v3608, %v3630
  %v3654 = vmul.f32 %v3604, %v3634
  %v3655 = vpack.c.bf16 %v3643, %v3639
  %v3656 = vpack.c.bf16 %v3644, %v3640
  %v3657 = vpack.c.bf16 %v3645, %v3641
  %v3658 = vpack.c.bf16 %v3646, %v3642
  %v3659 = vpack.c.bf16 %v3651, %v3647
  %v3660 = vpack.c.bf16 %v3652, %v3648
  %v3661 = vpack.c.bf16 %v3653, %v3649
  %v3662 = vpack.c.bf16 %v3654, %v3650
  %3663 = vst [vmem:[#allocation3 + $0xc0] sm:$0xff] %v3655
  %3664 = vst [vmem:[#allocation3 + $0xc8] sm:$0xff] %v3656
  %3665 = vst [vmem:[#allocation3 + $0xd0] sm:$0xff] %v3657
  %3666 = vst [vmem:[#allocation3 + $0xd8] sm:$0xff] %v3658
  %3667 = vst [vmem:[#allocation3 + $0xe0] sm:$0xff] %v3659
  %3668 = vst [vmem:[#allocation3 + $0xe8] sm:$0xff] %v3660
  %3669 = vst [vmem:[#allocation3 + $0xf0] sm:$0xff] %v3661
  %3670 = vst [vmem:[#allocation3 + $0xf8] sm:$0xff] %v3662
  %v3671 = vpack.c.bf16 %v3251, %v3247
  %v3672 = vpack.c.bf16 %v3252, %v3248
  %v3673 = vpack.c.bf16 %v3253, %v3249
  %v3674 = vpack.c.bf16 %v3254, %v3250
  %v3675 = vpack.c.bf16 %v3259, %v3255
  %v3676 = vpack.c.bf16 %v3260, %v3256
  %v3677 = vpack.c.bf16 %v3261, %v3257
  %v3678 = vpack.c.bf16 %v3262, %v3258
  %3679 = vst [vmem:[#allocation3 + $0x100] sm:$0xff] %v3671
  %3680 = vst [vmem:[#allocation3 + $0x108] sm:$0xff] %v3672
  %3681 = vst [vmem:[#allocation3 + $0x110] sm:$0xff] %v3673
  %3682 = vst [vmem:[#allocation3 + $0x118] sm:$0xff] %v3674
  %3683 = vst [vmem:[#allocation3 + $0x120] sm:$0xff] %v3675
  %3684 = vst [vmem:[#allocation3 + $0x128] sm:$0xff] %v3676
  %3685 = vst [vmem:[#allocation3 + $0x130] sm:$0xff] %v3677
  %3686 = vst [vmem:[#allocation3 + $0x138] sm:$0xff] %v3678
  %3687 = vrot.lane.b32.xlu0 %v3247, 127
  %v3688 = vpop.permute.xlu0 %3687
  %3689 = vrot.lane.b32.xlu0 %v3251, 127
  %v3690 = vpop.permute.xlu0 %3689
  %3691 = vrot.lane.b32.xlu0 %v3255, 127
  %v3692 = vpop.permute.xlu0 %3691
  %3693 = vrot.lane.b32.xlu0 %v3259, 127
  %v3694 = vpop.permute.xlu0 %3693
  %3695 = vrot.lane.b32.xlu0 %v3248, 127
  %v3696 = vpop.permute.xlu0 %3695
  %3697 = vrot.lane.b32.xlu0 %v3252, 127
  %v3698 = vpop.permute.xlu0 %3697
  %3699 = vrot.lane.b32.xlu0 %v3256, 127
  %v3700 = vpop.permute.xlu0 %3699
  %3701 = vrot.lane.b32.xlu0 %v3260, 127
  %v3702 = vpop.permute.xlu0 %3701
  %3703 = vrot.lane.b32.xlu0 %v3249, 127
  %v3704 = vpop.permute.xlu0 %3703
  %3705 = vrot.lane.b32.xlu0 %v3253, 127
  %v3706 = vpop.permute.xlu0 %3705
  %3707 = vrot.lane.b32.xlu0 %v3257, 127
  %v3708 = vpop.permute.xlu0 %3707
  %3709 = vrot.lane.b32.xlu0 %v3261, 127
  %v3710 = vpop.permute.xlu0 %3709
  %3711 = vrot.lane.b32.xlu0 %v3250, 127
  %v3712 = vpop.permute.xlu0 %3711
  %3713 = vrot.lane.b32.xlu0 %v3254, 127
  %v3714 = vpop.permute.xlu0 %3713
  %3715 = vrot.lane.b32.xlu0 %v3258, 127
  %v3716 = vpop.permute.xlu0 %3715
  %3717 = vrot.lane.b32.xlu0 %v3262, 127
  %v3718 = vpop.permute.xlu0 %3717
  %v3719 = vsel %vm223, %v3704, %v3712
  %v3720 = vsel %vm223, %v3706, %v3714
  %v3721 = vsel %vm223, %v3708, %v3716
  %v3722 = vsel %vm223, %v3710, %v3718
  %v3723 = vsel %vm223, %v3696, %v3704
  %v3724 = vsel %vm223, %v3698, %v3706
  %v3725 = vsel %vm223, %v3700, %v3708
  %v3726 = vsel %vm223, %v3702, %v3710
  %v3727 = vsel %vm223, %v3688, %v3696
  %v3728 = vsel %vm223, %v3690, %v3698
  %v3729 = vsel %vm223, %v3692, %v3700
  %v3730 = vsel %vm223, %v3694, %v3702
  %v3731 = vsel %vm223, %v3712, %v3688
  %v3732 = vsel %vm223, %v3714, %v3690
  %v3733 = vsel %vm223, %v3716, %v3692
  %v3734 = vsel %vm223, %v3718, %v3694
  %v3735 = vld [vmem:[%s228] ss:$8 sm:$0xf]
  %v3737 = vlaneseq
  %v3738 = vshrl.u32 %v3737, 7
  %v3739 = vsub.s32 0, %v3738
  %v3740 = vrot.slane %v3735, %v3739
  %v3741 = vlaneseq
  %v3742 = vshrl.u32 %v3741, 7
  %v3743 = vsub.s32 1, %v3742
  %v3744 = vrot.slane %v3735, %v3743
  %v3745 = vlaneseq
  %v3746 = vshrl.u32 %v3745, 7
  %v3747 = vsub.s32 2, %v3746
  %v3748 = vrot.slane %v3735, %v3747
  %v3749 = vlaneseq
  %v3750 = vshrl.u32 %v3749, 7
  %v3751 = vsub.s32 3, %v3750
  %v3752 = vrot.slane %v3735, %v3751
  %v3757 = vmul.f32 %v3727, %v3740
  %v3758 = vmul.f32 %v3723, %v3744
  %v3759 = vmul.f32 %v3719, %v3748
  %v3760 = vmul.f32 %v3731, %v3752
  %v3761 = vmul.f32 %v3728, %v3740
  %v3762 = vmul.f32 %v3724, %v3744
  %v3763 = vmul.f32 %v3720, %v3748
  %v3764 = vmul.f32 %v3732, %v3752
  %v3765 = vmul.f32 %v3729, %v3740
  %v3766 = vmul.f32 %v3725, %v3744
  %v3767 = vmul.f32 %v3721, %v3748
  %v3768 = vmul.f32 %v3733, %v3752
  %v3769 = vmul.f32 %v3730, %v3740
  %v3770 = vmul.f32 %v3726, %v3744
  %v3771 = vmul.f32 %v3722, %v3748
  %v3772 = vmul.f32 %v3734, %v3752
  %v3773 = vpack.c.bf16 %v3761, %v3757
  %v3774 = vpack.c.bf16 %v3762, %v3758
  %v3775 = vpack.c.bf16 %v3763, %v3759
  %v3776 = vpack.c.bf16 %v3764, %v3760
  %v3777 = vpack.c.bf16 %v3769, %v3765
  %v3778 = vpack.c.bf16 %v3770, %v3766
  %v3779 = vpack.c.bf16 %v3771, %v3767
  %v3780 = vpack.c.bf16 %v3772, %v3768
  %3781 = vst [vmem:[#allocation3 + $0x140] sm:$0xff] %v3773
  %3782 = vst [vmem:[#allocation3 + $0x148] sm:$0xff] %v3774
  %3783 = vst [vmem:[#allocation3 + $0x150] sm:$0xff] %v3775
  %3784 = vst [vmem:[#allocation3 + $0x158] sm:$0xff] %v3776
  %3785 = vst [vmem:[#allocation3 + $0x160] sm:$0xff] %v3777
  %3786 = vst [vmem:[#allocation3 + $0x168] sm:$0xff] %v3778
  %3787 = vst [vmem:[#allocation3 + $0x170] sm:$0xff] %v3779
  %3788 = vst [vmem:[#allocation3 + $0x178] sm:$0xff] %v3780
  %3789 = vrot.lane.b32.xlu0 %v3247, 113
  %v3790 = vpop.permute.xlu0 %3789
  %3791 = vrot.lane.b32.xlu0 %v3251, 113
  %v3792 = vpop.permute.xlu0 %3791
  %3793 = vrot.lane.b32.xlu0 %v3255, 113
  %v3794 = vpop.permute.xlu0 %3793
  %3795 = vrot.lane.b32.xlu0 %v3259, 113
  %v3796 = vpop.permute.xlu0 %3795
  %3797 = vrot.lane.b32.xlu0 %v3248, 113
  %v3798 = vpop.permute.xlu0 %3797
  %3799 = vrot.lane.b32.xlu0 %v3252, 113
  %v3800 = vpop.permute.xlu0 %3799
  %3801 = vrot.lane.b32.xlu0 %v3256, 113
  %v3802 = vpop.permute.xlu0 %3801
  %3803 = vrot.lane.b32.xlu0 %v3260, 113
  %v3804 = vpop.permute.xlu0 %3803
  %3805 = vrot.lane.b32.xlu0 %v3249, 113
  %v3806 = vpop.permute.xlu0 %3805
  %3807 = vrot.lane.b32.xlu0 %v3253, 113
  %v3808 = vpop.permute.xlu0 %3807
  %3809 = vrot.lane.b32.xlu0 %v3257, 113
  %v3810 = vpop.permute.xlu0 %3809
  %3811 = vrot.lane.b32.xlu0 %v3261, 113
  %v3812 = vpop.permute.xlu0 %3811
  %3813 = vrot.lane.b32.xlu0 %v3250, 113
  %v3814 = vpop.permute.xlu0 %3813
  %3815 = vrot.lane.b32.xlu0 %v3254, 113
  %v3816 = vpop.permute.xlu0 %3815
  %3817 = vrot.lane.b32.xlu0 %v3258, 113
  %v3818 = vpop.permute.xlu0 %3817
  %3819 = vrot.lane.b32.xlu0 %v3262, 113
  %v3820 = vpop.permute.xlu0 %3819
  %v3821 = vsel %vm267, %v3806, %v3814
  %v3822 = vsel %vm267, %v3808, %v3816
  %v3823 = vsel %vm267, %v3810, %v3818
  %v3824 = vsel %vm267, %v3812, %v3820
  %v3825 = vsel %vm267, %v3798, %v3806
  %v3826 = vsel %vm267, %v3800, %v3808
  %v3827 = vsel %vm267, %v3802, %v3810
  %v3828 = vsel %vm267, %v3804, %v3812
  %v3829 = vsel %vm267, %v3790, %v3798
  %v3830 = vsel %vm267, %v3792, %v3800
  %v3831 = vsel %vm267, %v3794, %v3802
  %v3832 = vsel %vm267, %v3796, %v3804
  %v3833 = vsel %vm267, %v3814, %v3790
  %v3834 = vsel %vm267, %v3816, %v3792
  %v3835 = vsel %vm267, %v3818, %v3794
  %v3836 = vsel %vm267, %v3820, %v3796
  %v3837 = vld [vmem:[%s272] ss:$8 sm:$0xf]
  %v3839 = vlaneseq
  %v3840 = vshrl.u32 %v3839, 7
  %v3841 = vsub.s32 0, %v3840
  %v3842 = vrot.slane %v3837, %v3841
  %v3843 = vlaneseq
  %v3844 = vshrl.u32 %v3843, 7
  %v3845 = vsub.s32 1, %v3844
  %v3846 = vrot.slane %v3837, %v3845
  %v3847 = vlaneseq
  %v3848 = vshrl.u32 %v3847, 7
  %v3849 = vsub.s32 2, %v3848
  %v3850 = vrot.slane %v3837, %v3849
  %v3851 = vlaneseq
  %v3852 = vshrl.u32 %v3851, 7
  %v3853 = vsub.s32 3, %v3852
  %v3854 = vrot.slane %v3837, %v3853
  %v3859 = vmul.f32 %v3829, %v3842
  %v3860 = vmul.f32 %v3825, %v3846
  %v3861 = vmul.f32 %v3821, %v3850
  %v3862 = vmul.f32 %v3833, %v3854
  %v3863 = vmul.f32 %v3830, %v3842
  %v3864 = vmul.f32 %v3826, %v3846
  %v3865 = vmul.f32 %v3822, %v3850
  %v3866 = vmul.f32 %v3834, %v3854
  %v3867 = vmul.f32 %v3831, %v3842
  %v3868 = vmul.f32 %v3827, %v3846
  %v3869 = vmul.f32 %v3823, %v3850
  %v3870 = vmul.f32 %v3835, %v3854
  %v3871 = vmul.f32 %v3832, %v3842
  %v3872 = vmul.f32 %v3828, %v3846
  %v3873 = vmul.f32 %v3824, %v3850
  %v3874 = vmul.f32 %v3836, %v3854
  %v3875 = vpack.c.bf16 %v3863, %v3859
  %v3876 = vpack.c.bf16 %v3864, %v3860
  %v3877 = vpack.c.bf16 %v3865, %v3861
  %v3878 = vpack.c.bf16 %v3866, %v3862
  %v3879 = vpack.c.bf16 %v3871, %v3867
  %v3880 = vpack.c.bf16 %v3872, %v3868
  %v3881 = vpack.c.bf16 %v3873, %v3869
  %v3882 = vpack.c.bf16 %v3874, %v3870
  %3883 = vst [vmem:[#allocation3 + $0x180] sm:$0xff] %v3875
  %3884 = vst [vmem:[#allocation3 + $0x188] sm:$0xff] %v3876
  %3885 = vst [vmem:[#allocation3 + $0x190] sm:$0xff] %v3877
  %3886 = vst [vmem:[#allocation3 + $0x198] sm:$0xff] %v3878
  %3887 = vst [vmem:[#allocation3 + $0x1a0] sm:$0xff] %v3879
  %3888 = vst [vmem:[#allocation3 + $0x1a8] sm:$0xff] %v3880
  %3889 = vst [vmem:[#allocation3 + $0x1b0] sm:$0xff] %v3881
  %3890 = vst [vmem:[#allocation3 + $0x1b8] sm:$0xff] %v3882
  %3891 = vrot.lane.b32.xlu0 %v3247, 112
  %v3892 = vpop.permute.xlu0 %3891
  %3893 = vrot.lane.b32.xlu0 %v3251, 112
  %v3894 = vpop.permute.xlu0 %3893
  %3895 = vrot.lane.b32.xlu0 %v3255, 112
  %v3896 = vpop.permute.xlu0 %3895
  %3897 = vrot.lane.b32.xlu0 %v3259, 112
  %v3898 = vpop.permute.xlu0 %3897
  %3899 = vrot.lane.b32.xlu0 %v3248, 112
  %v3900 = vpop.permute.xlu0 %3899
  %3901 = vrot.lane.b32.xlu0 %v3252, 112
  %v3902 = vpop.permute.xlu0 %3901
  %3903 = vrot.lane.b32.xlu0 %v3256, 112
  %v3904 = vpop.permute.xlu0 %3903
  %3905 = vrot.lane.b32.xlu0 %v3260, 112
  %v3906 = vpop.permute.xlu0 %3905
  %3907 = vrot.lane.b32.xlu0 %v3249, 112
  %v3908 = vpop.permute.xlu0 %3907
  %3909 = vrot.lane.b32.xlu0 %v3253, 112
  %v3910 = vpop.permute.xlu0 %3909
  %3911 = vrot.lane.b32.xlu0 %v3257, 112
  %v3912 = vpop.permute.xlu0 %3911
  %3913 = vrot.lane.b32.xlu0 %v3261, 112
  %v3914 = vpop.permute.xlu0 %3913
  %3915 = vrot.lane.b32.xlu0 %v3250, 112
  %v3916 = vpop.permute.xlu0 %3915
  %3917 = vrot.lane.b32.xlu0 %v3254, 112
  %v3918 = vpop.permute.xlu0 %3917
  %3919 = vrot.lane.b32.xlu0 %v3258, 112
  %v3920 = vpop.permute.xlu0 %3919
  %3921 = vrot.lane.b32.xlu0 %v3262, 112
  %v3922 = vpop.permute.xlu0 %3921
  %v3923 = vsel %vm311, %v3908, %v3916
  %v3924 = vsel %vm311, %v3910, %v3918
  %v3925 = vsel %vm311, %v3912, %v3920
  %v3926 = vsel %vm311, %v3914, %v3922
  %v3927 = vsel %vm311, %v3900, %v3908
  %v3928 = vsel %vm311, %v3902, %v3910
  %v3929 = vsel %vm311, %v3904, %v3912
  %v3930 = vsel %vm311, %v3906, %v3914
  %v3931 = vsel %vm311, %v3892, %v3900
  %v3932 = vsel %vm311, %v3894, %v3902
  %v3933 = vsel %vm311, %v3896, %v3904
  %v3934 = vsel %vm311, %v3898, %v3906
  %v3935 = vsel %vm311, %v3916, %v3892
  %v3936 = vsel %vm311, %v3918, %v3894
  %v3937 = vsel %vm311, %v3920, %v3896
  %v3938 = vsel %vm311, %v3922, %v3898
  %v3939 = vld [vmem:[%s316] ss:$8 sm:$0xf]
  %v3941 = vlaneseq
  %v3942 = vshrl.u32 %v3941, 7
  %v3943 = vsub.s32 0, %v3942
  %v3944 = vrot.slane %v3939, %v3943
  %v3945 = vlaneseq
  %v3946 = vshrl.u32 %v3945, 7
  %v3947 = vsub.s32 1, %v3946
  %v3948 = vrot.slane %v3939, %v3947
  %v3949 = vlaneseq
  %v3950 = vshrl.u32 %v3949, 7
  %v3951 = vsub.s32 2, %v3950
  %v3952 = vrot.slane %v3939, %v3951
  %v3953 = vlaneseq
  %v3954 = vshrl.u32 %v3953, 7
  %v3955 = vsub.s32 3, %v3954
  %v3956 = vrot.slane %v3939, %v3955
  %v3961 = vmul.f32 %v3931, %v3944
  %v3962 = vmul.f32 %v3927, %v3948
  %v3963 = vmul.f32 %v3923, %v3952
  %v3964 = vmul.f32 %v3935, %v3956
  %v3965 = vmul.f32 %v3932, %v3944
  %v3966 = vmul.f32 %v3928, %v3948
  %v3967 = vmul.f32 %v3924, %v3952
  %v3968 = vmul.f32 %v3936, %v3956
  %v3969 = vmul.f32 %v3933, %v3944
  %v3970 = vmul.f32 %v3929, %v3948
  %v3971 = vmul.f32 %v3925, %v3952
  %v3972 = vmul.f32 %v3937, %v3956
  %v3973 = vmul.f32 %v3934, %v3944
  %v3974 = vmul.f32 %v3930, %v3948
  %v3975 = vmul.f32 %v3926, %v3952
  %v3976 = vmul.f32 %v3938, %v3956
  %v3977 = vpack.c.bf16 %v3965, %v3961
  %v3978 = vpack.c.bf16 %v3966, %v3962
  %v3979 = vpack.c.bf16 %v3967, %v3963
  %v3980 = vpack.c.bf16 %v3968, %v3964
  %v3981 = vpack.c.bf16 %v3973, %v3969
  %v3982 = vpack.c.bf16 %v3974, %v3970
  %v3983 = vpack.c.bf16 %v3975, %v3971
  %v3984 = vpack.c.bf16 %v3976, %v3972
  %3985 = vst [vmem:[#allocation3 + $0x1c0] sm:$0xff] %v3977
  %3986 = vst [vmem:[#allocation3 + $0x1c8] sm:$0xff] %v3978
  %3987 = vst [vmem:[#allocation3 + $0x1d0] sm:$0xff] %v3979
  %3988 = vst [vmem:[#allocation3 + $0x1d8] sm:$0xff] %v3980
  %3989 = vst [vmem:[#allocation3 + $0x1e0] sm:$0xff] %v3981
  %3990 = vst [vmem:[#allocation3 + $0x1e8] sm:$0xff] %v3982
  %3991 = vst [vmem:[#allocation3 + $0x1f0] sm:$0xff] %v3983
  %3992 = vst [vmem:[#allocation3 + $0x1f8] sm:$0xff] %v3984
  %3993 = vrot.lane.b32.xlu0 %v3247, 111
  %v3994 = vpop.permute.xlu0 %3993
  %3995 = vrot.lane.b32.xlu0 %v3251, 111
  %v3996 = vpop.permute.xlu0 %3995
  %3997 = vrot.lane.b32.xlu0 %v3255, 111
  %v3998 = vpop.permute.xlu0 %3997
  %3999 = vrot.lane.b32.xlu0 %v3259, 111
  %v4000 = vpop.permute.xlu0 %3999
  %4001 = vrot.lane.b32.xlu0 %v3248, 111
  %v4002 = vpop.permute.xlu0 %4001
  %4003 = vrot.lane.b32.xlu0 %v3252, 111
  %v4004 = vpop.permute.xlu0 %4003
  %4005 = vrot.lane.b32.xlu0 %v3256, 111
  %v4006 = vpop.permute.xlu0 %4005
  %4007 = vrot.lane.b32.xlu0 %v3260, 111
  %v4008 = vpop.permute.xlu0 %4007
  %4009 = vrot.lane.b32.xlu0 %v3249, 111
  %v4010 = vpop.permute.xlu0 %4009
  %4011 = vrot.lane.b32.xlu0 %v3253, 111
  %v4012 = vpop.permute.xlu0 %4011
  %4013 = vrot.lane.b32.xlu0 %v3257, 111
  %v4014 = vpop.permute.xlu0 %4013
  %4015 = vrot.lane.b32.xlu0 %v3261, 111
  %v4016 = vpop.permute.xlu0 %4015
  %4017 = vrot.lane.b32.xlu0 %v3250, 111
  %v4018 = vpop.permute.xlu0 %4017
  %4019 = vrot.lane.b32.xlu0 %v3254, 111
  %v4020 = vpop.permute.xlu0 %4019
  %4021 = vrot.lane.b32.xlu0 %v3258, 111
  %v4022 = vpop.permute.xlu0 %4021
  %4023 = vrot.lane.b32.xlu0 %v3262, 111
  %v4024 = vpop.permute.xlu0 %4023
  %v4025 = vsel %vm355, %v4010, %v4018
  %v4026 = vsel %vm355, %v4012, %v4020
  %v4027 = vsel %vm355, %v4014, %v4022
  %v4028 = vsel %vm355, %v4016, %v4024
  %v4029 = vsel %vm355, %v4002, %v4010
  %v4030 = vsel %vm355, %v4004, %v4012
  %v4031 = vsel %vm355, %v4006, %v4014
  %v4032 = vsel %vm355, %v4008, %v4016
  %v4033 = vsel %vm355, %v3994, %v4002
  %v4034 = vsel %vm355, %v3996, %v4004
  %v4035 = vsel %vm355, %v3998, %v4006
  %v4036 = vsel %vm355, %v4000, %v4008
  %v4037 = vsel %vm355, %v4018, %v3994
  %v4038 = vsel %vm355, %v4020, %v3996
  %v4039 = vsel %vm355, %v4022, %v3998
  %v4040 = vsel %vm355, %v4024, %v4000
  %v4041 = vld [vmem:[%s360] ss:$8 sm:$0xf]
  %v4043 = vlaneseq
  %v4044 = vshrl.u32 %v4043, 7
  %v4045 = vsub.s32 0, %v4044
  %v4046 = vrot.slane %v4041, %v4045
  %v4047 = vlaneseq
  %v4048 = vshrl.u32 %v4047, 7
  %v4049 = vsub.s32 1, %v4048
  %v4050 = vrot.slane %v4041, %v4049
  %v4051 = vlaneseq
  %v4052 = vshrl.u32 %v4051, 7
  %v4053 = vsub.s32 2, %v4052
  %v4054 = vrot.slane %v4041, %v4053
  %v4055 = vlaneseq
  %v4056 = vshrl.u32 %v4055, 7
  %v4057 = vsub.s32 3, %v4056
  %v4058 = vrot.slane %v4041, %v4057
  %v4063 = vmul.f32 %v4033, %v4046
  %v4064 = vmul.f32 %v4029, %v4050
  %v4065 = vmul.f32 %v4025, %v4054
  %v4066 = vmul.f32 %v4037, %v4058
  %v4067 = vmul.f32 %v4034, %v4046
  %v4068 = vmul.f32 %v4030, %v4050
  %v4069 = vmul.f32 %v4026, %v4054
  %v4070 = vmul.f32 %v4038, %v4058
  %v4071 = vmul.f32 %v4035, %v4046
  %v4072 = vmul.f32 %v4031, %v4050
  %v4073 = vmul.f32 %v4027, %v4054
  %v4074 = vmul.f32 %v4039, %v4058
  %v4075 = vmul.f32 %v4036, %v4046
  %v4076 = vmul.f32 %v4032, %v4050
  %v4077 = vmul.f32 %v4028, %v4054
  %v4078 = vmul.f32 %v4040, %v4058
  %v4079 = vpack.c.bf16 %v4067, %v4063
  %v4080 = vpack.c.bf16 %v4068, %v4064
  %v4081 = vpack.c.bf16 %v4069, %v4065
  %v4082 = vpack.c.bf16 %v4070, %v4066
  %v4083 = vpack.c.bf16 %v4075, %v4071
  %v4084 = vpack.c.bf16 %v4076, %v4072
  %v4085 = vpack.c.bf16 %v4077, %v4073
  %v4086 = vpack.c.bf16 %v4078, %v4074
  %4087 = vst [vmem:[#allocation3 + $0x200] sm:$0xff] %v4079
  %4088 = vst [vmem:[#allocation3 + $0x208] sm:$0xff] %v4080
  %4089 = vst [vmem:[#allocation3 + $0x210] sm:$0xff] %v4081
  %4090 = vst [vmem:[#allocation3 + $0x218] sm:$0xff] %v4082
  %4091 = vst [vmem:[#allocation3 + $0x220] sm:$0xff] %v4083
  %4092 = vst [vmem:[#allocation3 + $0x228] sm:$0xff] %v4084
  %4093 = vst [vmem:[#allocation3 + $0x230] sm:$0xff] %v4085
  %4094 = vst [vmem:[#allocation3 + $0x238] sm:$0xff] %v4086
  %v4095 = vld [vmem:[%s6] sm:$0x3f]
  %v4096 = vld [vmem:[#allocation3] sm:$0xff]
  %v4097 = vld [vmem:[#allocation3 + $0x8] sm:$0xff]
  %v4098 = vld [vmem:[#allocation3 + $0x10] sm:$0xff]
  %v4099 = vld [vmem:[#allocation3 + $0x18] sm:$0xff]
  %v4100 = vld [vmem:[#allocation3 + $0x20] sm:$0xff]
  %v4101 = vld [vmem:[#allocation3 + $0x28] sm:$0xff]
  %v4102 = vld [vmem:[#allocation3 + $0x30] sm:$0xff]
  %v4103 = vld [vmem:[#allocation3 + $0x38] sm:$0xff]
  %v4104 = vld [vmem:[#allocation3 + $0x40] sm:$0xff]
  %v4105 = vld [vmem:[#allocation3 + $0x48] sm:$0xff]
  %v4106 = vld [vmem:[#allocation3 + $0x50] sm:$0xff]
  %v4107 = vld [vmem:[#allocation3 + $0x58] sm:$0xff]
  %v4108 = vld [vmem:[#allocation3 + $0x60] sm:$0xff]
  %v4109 = vld [vmem:[#allocation3 + $0x68] sm:$0xff]
  %v4110 = vld [vmem:[#allocation3 + $0x70] sm:$0xff]
  %v4111 = vld [vmem:[#allocation3 + $0x78] sm:$0xff]
  %v4112 = vld [vmem:[#allocation3 + $0x80] sm:$0xff]
  %v4113 = vld [vmem:[#allocation3 + $0x88] sm:$0xff]
  %v4114 = vld [vmem:[#allocation3 + $0x90] sm:$0xff]
  %v4115 = vld [vmem:[#allocation3 + $0x98] sm:$0xff]
  %v4116 = vld [vmem:[#allocation3 + $0xa0] sm:$0xff]
  %v4117 = vld [vmem:[#allocation3 + $0xa8] sm:$0xff]
  %v4118 = vld [vmem:[#allocation3 + $0xb0] sm:$0xff]
  %v4119 = vld [vmem:[#allocation3 + $0xb8] sm:$0xff]
  %v4120 = vld [vmem:[#allocation3 + $0xc0] sm:$0xff]
  %v4121 = vld [vmem:[#allocation3 + $0xc8] sm:$0xff]
  %v4122 = vld [vmem:[#allocation3 + $0xd0] sm:$0xff]
  %v4123 = vld [vmem:[#allocation3 + $0xd8] sm:$0xff]
  %v4124 = vld [vmem:[#allocation3 + $0xe0] sm:$0xff]
  %v4125 = vld [vmem:[#allocation3 + $0xe8] sm:$0xff]
  %v4126 = vld [vmem:[#allocation3 + $0xf0] sm:$0xff]
  %v4127 = vld [vmem:[#allocation3 + $0xf8] sm:$0xff]
  %v4128 = vld [vmem:[#allocation3 + $0x100] sm:$0xff]
  %v4129 = vld [vmem:[#allocation3 + $0x108] sm:$0xff]
  %v4130 = vld [vmem:[#allocation3 + $0x110] sm:$0xff]
  %v4131 = vld [vmem:[#allocation3 + $0x118] sm:$0xff]
  %v4132 = vld [vmem:[#allocation3 + $0x120] sm:$0xff]
  %v4133 = vld [vmem:[#allocation3 + $0x128] sm:$0xff]
  %v4134 = vld [vmem:[#allocation3 + $0x130] sm:$0xff]
  %v4135 = vld [vmem:[#allocation3 + $0x138] sm:$0xff]
  %v4136 = vld [vmem:[#allocation3 + $0x140] sm:$0xff]
  %v4137 = vld [vmem:[#allocation3 + $0x148] sm:$0xff]
  %v4138 = vld [vmem:[#allocation3 + $0x150] sm:$0xff]
  %v4139 = vld [vmem:[#allocation3 + $0x158] sm:$0xff]
  %v4140 = vld [vmem:[#allocation3 + $0x160] sm:$0xff]
  %v4141 = vld [vmem:[#allocation3 + $0x168] sm:$0xff]
  %v4142 = vld [vmem:[#allocation3 + $0x170] sm:$0xff]
  %v4143 = vld [vmem:[#allocation3 + $0x178] sm:$0xff]
  %v4144 = vld [vmem:[#allocation3 + $0x180] sm:$0xff]
  %v4145 = vld [vmem:[#allocation3 + $0x188] sm:$0xff]
  %v4146 = vld [vmem:[#allocation3 + $0x190] sm:$0xff]
  %v4147 = vld [vmem:[#allocation3 + $0x198] sm:$0xff]
  %v4148 = vld [vmem:[#allocation3 + $0x1a0] sm:$0xff]
  %v4149 = vld [vmem:[#allocation3 + $0x1a8] sm:$0xff]
  %v4150 = vld [vmem:[#allocation3 + $0x1b0] sm:$0xff]
  %v4151 = vld [vmem:[#allocation3 + $0x1b8] sm:$0xff]
  %v4152 = vld [vmem:[#allocation3 + $0x1c0] sm:$0xff]
  %v4153 = vld [vmem:[#allocation3 + $0x1c8] sm:$0xff]
  %v4154 = vld [vmem:[#allocation3 + $0x1d0] sm:$0xff]
  %v4155 = vld [vmem:[#allocation3 + $0x1d8] sm:$0xff]
  %v4156 = vld [vmem:[#allocation3 + $0x1e0] sm:$0xff]
  %v4157 = vld [vmem:[#allocation3 + $0x1e8] sm:$0xff]
  %v4158 = vld [vmem:[#allocation3 + $0x1f0] sm:$0xff]
  %v4159 = vld [vmem:[#allocation3 + $0x1f8] sm:$0xff]
  %v4160 = vld [vmem:[#allocation3 + $0x200] sm:$0xff]
  %v4161 = vld [vmem:[#allocation3 + $0x208] sm:$0xff]
  %v4162 = vld [vmem:[#allocation3 + $0x210] sm:$0xff]
  %v4163 = vld [vmem:[#allocation3 + $0x218] sm:$0xff]
  %v4164 = vld [vmem:[#allocation3 + $0x220] sm:$0xff]
  %v4165 = vld [vmem:[#allocation3 + $0x228] sm:$0xff]
  %v4166 = vld [vmem:[#allocation3 + $0x230] sm:$0xff]
  %v4167 = vld [vmem:[#allocation3 + $0x238] sm:$0xff]
  %v4168 = vld [vmem:[%s7] sm:$0xf]
  %4170 = vset.pattern.permute.xlu0 0
  %4171 = vperm.xlu0 %4170, %v4168
  %v4172 = vpop.permute.xlu0 %4171
  %v4175 = vcombine.high %v4095, %v4095
  %v4177 = vunpack.c.l.s4 1983009808
  %v4178 = vunpack.c.0.s8 %v4177
  %v4179 = vlaneseq
  %v4180 = vshrl.u32 %v4179, 7
  %v4181 = vsub.s32 %v4178, %v4180
  %v4182 = vrot.slane %v4095, %v4181
  %v4184 = vunpack.c.l.s4 1983009808
  %v4185 = vunpack.c.0.s8 %v4184
  %v4186 = vlaneseq
  %v4187 = vshrl.u32 %v4186, 7
  %v4188 = vsub.s32 %v4185, %v4187
  %v4189 = vrot.slane %v4175, %v4188
  %v4190 = vcombine.high %v4182, %v4182
  %v4194 = vsel %vm709, %v4189, 0
  %4196 = vmatprep.subr.bf16.mxu0 %v4097
  %4197 = vmatpush1.bf16.msra.mxu0 %v4096
  %4198 = vmatprep.subr.bf16.mxu0 %v4101
  %4199 = vmatpush1.bf16.msra.mxu0 %v4100
  %4200 = vmatprep.subr.bf16.mxu0 %v4105
  %4201 = vmatpush1.bf16.msra.mxu0 %v4104
  %4202 = vmatprep.subr.bf16.mxu0 %v4109
  %4203 = vmatpush1.bf16.msra.mxu0 %v4108
  %4204 = vmatprep.subr.bf16.mxu0 %v4113
  %4205 = vmatpush1.bf16.msra.mxu0 %v4112
  %4206 = vmatprep.subr.bf16.mxu0 %v4117
  %4207 = vmatpush1.bf16.msra.mxu0 %v4116
  %4208 = vmatprep.subr.bf16.mxu0 %v4121
  %4209 = vmatpush1.bf16.msra.mxu0 %v4120
  %4210 = vmatprep.subr.bf16.mxu0 %v4125
  %4211 = vmatpush1.bf16.msra.mxu0 %v4124
  %4212 = vmatprep.subr.bf16.mxu0 %v4129
  %4213 = vmatpush1.bf16.msra.mxu0 %v4128
  %4214 = vmatprep.subr.bf16.mxu0 %v4133
  %4215 = vmatpush1.bf16.msra.mxu0 %v4132
  %4216 = vmatprep.subr.bf16.mxu0 %v4137
  %4217 = vmatpush1.bf16.msra.mxu0 %v4136
  %4218 = vmatprep.subr.bf16.mxu0 %v4141
  %4219 = vmatpush1.bf16.msra.mxu0 %v4140
  %4220 = vmatprep.subr.bf16.mxu0 %v4145
  %4221 = vmatpush1.bf16.msra.mxu0 %v4144
  %4222 = vmatprep.subr.bf16.mxu0 %v4149
  %4223 = vmatpush1.bf16.msra.mxu0 %v4148
  %4224 = vmatprep.subr.bf16.mxu0 %v4153
  %4225 = vmatpush1.bf16.msra.mxu0 %v4152
  %4226 = vmatprep.subr.bf16.mxu0 %v4157
  %4227 = vmatpush1.bf16.msra.mxu0 %v4156
  %4228 = vmatprep.mubr.bf16.mxu0 %v4190
  %4229 = vmatmul.mubr.bf16.gmra.mrb[0].mxu0 %v4182
  %v4230 = vpop.f32.mrb[0].mxu0
  %v4231 = vadd.f32 %v4172, %v4230
  %v4232 = vpop.f32.mrb[0].mxu0
  %v4233 = vadd.f32 %v4172, %v4232
  %v4234 = vpop.f32.mrb[0].mxu0
  %v4235 = vpop.f32.mrb[0].mxu0
  %4236 = vdwg.mxu0
  %4237 = vmatprep.subr.bf16.mxu0 %v4161
  %4238 = vmatpush1.bf16.msra.mxu0 %v4160
  %4239 = vmatprep.subr.bf16.mxu0 %v4165
  %4240 = vmatpush1.bf16.msra.mxu0 %v4164
  %4241 = vmatprep.subr.bf16.mxu0 0
  %4242 = vmatpush1.bf16.msra.mxu0 0
  %4243 = vmatprep.subr.bf16.mxu0 0
  %4244 = vmatpush1.bf16.msra.mxu0 0
  %4245 = vmatprep.subr.bf16.mxu0 0
  %4246 = vmatpush1.bf16.msra.mxu0 0
  %4247 = vmatprep.subr.bf16.mxu0 0
  %4248 = vmatpush1.bf16.msra.mxu0 0
  %4249 = vmatprep.subr.bf16.mxu0 0
  %4250 = vmatpush1.bf16.msra.mxu0 0
  %4251 = vmatprep.subr.bf16.mxu0 0
  %4252 = vmatpush1.bf16.msra.mxu0 0
  %4253 = vmatprep.subr.bf16.mxu0 0
  %4254 = vmatpush1.bf16.msra.mxu0 0
  %4255 = vmatprep.subr.bf16.mxu0 0
  %4256 = vmatpush1.bf16.msra.mxu0 0
  %4257 = vmatprep.subr.bf16.mxu0 0
  %4258 = vmatpush1.bf16.msra.mxu0 0
  %4259 = vmatprep.subr.bf16.mxu0 0
  %4260 = vmatpush1.bf16.msra.mxu0 0
  %4261 = vmatprep.subr.bf16.mxu0 0
  %4262 = vmatpush1.bf16.msra.mxu0 0
  %4263 = vmatprep.subr.bf16.mxu0 0
  %4264 = vmatpush1.bf16.msra.mxu0 0
  %4265 = vmatprep.subr.bf16.mxu0 0
  %4266 = vmatpush1.bf16.msra.mxu0 0
  %4267 = vmatprep.subr.bf16.mxu0 0
  %4268 = vmatpush1.bf16.msra.mxu0 0
  %4269 = vmatprep.mubr.bf16.mxu0 0
  %4270 = vmatmul.mubr.bf16.gmra.mrb[0].mxu0 %v4194
  %v4271 = vpop.f32.mrb[0].mxu0
  %v4272 = vadd.f32 %v4231, %v4271
  %v4273 = vpop.f32.mrb[0].mxu0
  %v4274 = vadd.f32 %v4233, %v4273
  %v4275 = vpop.f32.mrb[0].mxu0
  %v4276 = vpop.f32.mrb[0].mxu0
  %4277 = vdwg.mxu0
  %4278 = vmatprep.subr.bf16.mxu0 %v4099
  %4279 = vmatpush1.bf16.msra.mxu0 %v4098
  %4280 = vmatprep.subr.bf16.mxu0 %v4103
  %4281 = vmatpush1.bf16.msra.mxu0 %v4102
  %4282 = vmatprep.subr.bf16.mxu0 %v4107
  %4283 = vmatpush1.bf16.msra.mxu0 %v4106
  %4284 = vmatprep.subr.bf16.mxu0 %v4111
  %4285 = vmatpush1.bf16.msra.mxu0 %v4110
  %4286 = vmatprep.subr.bf16.mxu0 %v4115
  %4287 = vmatpush1.bf16.msra.mxu0 %v4114
  %4288 = vmatprep.subr.bf16.mxu0 %v4119
  %4289 = vmatpush1.bf16.msra.mxu0 %v4118
  %4290 = vmatprep.subr.bf16.mxu0 %v4123
  %4291 = vmatpush1.bf16.msra.mxu0 %v4122
  %4292 = vmatprep.subr.bf16.mxu0 %v4127
  %4293 = vmatpush1.bf16.msra.mxu0 %v4126
  %4294 = vmatprep.subr.bf16.mxu0 %v4131
  %4295 = vmatpush1.bf16.msra.mxu0 %v4130
  %4296 = vmatprep.subr.bf16.mxu0 %v4135
  %4297 = vmatpush1.bf16.msra.mxu0 %v4134
  %4298 = vmatprep.subr.bf16.mxu0 %v4139
  %4299 = vmatpush1.bf16.msra.mxu0 %v4138
  %4300 = vmatprep.subr.bf16.mxu0 %v4143
  %4301 = vmatpush1.bf16.msra.mxu0 %v4142
  %4302 = vmatprep.subr.bf16.mxu0 %v4147
  %4303 = vmatpush1.bf16.msra.mxu0 %v4146
  %4304 = vmatprep.subr.bf16.mxu0 %v4151
  %4305 = vmatpush1.bf16.msra.mxu0 %v4150
  %4306 = vmatprep.subr.bf16.mxu0 %v4155
  %4307 = vmatpush1.bf16.msra.mxu0 %v4154
  %4308 = vmatprep.subr.bf16.mxu0 %v4159
  %4309 = vmatpush1.bf16.msra.mxu0 %v4158
  %4310 = vmatprep.mubr.bf16.mxu0 %v4190
  %4311 = vmatmul.mubr.bf16.gmra.mrb[0].mxu0 %v4182
  %v4312 = vpop.f32.mrb[0].mxu0
  %v4313 = vadd.f32 %v4172, %v4312
  %v4314 = vpop.f32.mrb[0].mxu0
  %v4315 = vadd.f32 %v4172, %v4314
  %v4316 = vpop.f32.mrb[0].mxu0
  %v4317 = vpop.f32.mrb[0].mxu0
  %4318 = vdwg.mxu0
  %4319 = vmatprep.subr.bf16.mxu0 %v4163
  %4320 = vmatpush1.bf16.msra.mxu0 %v4162
  %4321 = vmatprep.subr.bf16.mxu0 %v4167
  %4322 = vmatpush1.bf16.msra.mxu0 %v4166
  %4323 = vmatprep.subr.bf16.mxu0 0
  %4324 = vmatpush1.bf16.msra.mxu0 0
  %4325 = vmatprep.subr.bf16.mxu0 0
  %4326 = vmatpush1.bf16.msra.mxu0 0
  %4327 = vmatprep.subr.bf16.mxu0 0
  %4328 = vmatpush1.bf16.msra.mxu0 0
  %4329 = vmatprep.subr.bf16.mxu0 0
  %4330 = vmatpush1.bf16.msra.mxu0 0
  %4331 = vmatprep.subr.bf16.mxu0 0
  %4332 = vmatpush1.bf16.msra.mxu0 0
  %4333 = vmatprep.subr.bf16.mxu0 0
  %4334 = vmatpush1.bf16.msra.mxu0 0
  %4335 = vmatprep.subr.bf16.mxu0 0
  %4336 = vmatpush1.bf16.msra.mxu0 0
  %4337 = vmatprep.subr.bf16.mxu0 0
  %4338 = vmatpush1.bf16.msra.mxu0 0
  %4339 = vmatprep.subr.bf16.mxu0 0
  %4340 = vmatpush1.bf16.msra.mxu0 0
  %4341 = vmatprep.subr.bf16.mxu0 0
  %4342 = vmatpush1.bf16.msra.mxu0 0
  %4343 = vmatprep.subr.bf16.mxu0 0
  %4344 = vmatpush1.bf16.msra.mxu0 0
  %4345 = vmatprep.subr.bf16.mxu0 0
  %4346 = vmatpush1.bf16.msra.mxu0 0
  %4347 = vmatprep.subr.bf16.mxu0 0
  %4348 = vmatpush1.bf16.msra.mxu0 0
  %4349 = vmatprep.subr.bf16.mxu0 0
  %4350 = vmatpush1.bf16.msra.mxu0 0
  %4351 = vmatprep.mubr.bf16.mxu0 0
  %4352 = vmatmul.mubr.bf16.gmra.mrb[0].mxu0 %v4194
  %v4353 = vpop.f32.mrb[0].mxu0
  %v4354 = vadd.f32 %v4313, %v4353
  %v4355 = vpop.f32.mrb[0].mxu0
  %v4356 = vadd.f32 %v4315, %v4355
  %v4357 = vpop.f32.mrb[0].mxu0
  %v4358 = vpop.f32.mrb[0].mxu0
  %4359 = vdwg.mxu0
  %v4364 = vcombine.low %v4272, %v4274
  %v4365 = vcombine.low %v4354, %v4356
  %4368 = vst [vmem:[%s8] sm:$0xff] %v4364
  %4369 = vst [vmem:[%s8 + $0x8] sm:$0xff] %v4365
  // Predicated region
  $region34: #{_lambda_.1} parent=0 // pred_check
    _
  $region35: #{_lambda_.1} parent=0 // pred_check_branch
    %4371 = sbr.rel (0) target = $region37
  $region36: #{_lambda_.1} parent=0 // pred_region
    _
  $region37: #{_lambda_.1} parent=0 // pred_fallthru
    _
  // Predicated region
  $region38: #{_lambda_.1} parent=0 // pred_check
    _
  $region39: #{_lambda_.1} parent=0 // pred_check_branch
    %4373 = sbr.rel (0) target = $region41
  $region40: #{_lambda_.1} parent=0 // pred_region
    _
  $region41: #{_lambda_.1} parent=0 // pred_fallthru
    _

</llo_original>
